<compile_context>
chip_gen: v7x
topology: tpu7x:2x2x1
jax: 0.10.0
libtpu: 0.0.40
codegen_flags: <defaults>
</compile_context>

<pallas_src>
import functools

import numpy as np

import jax
import jax.numpy as jnp
from jax import lax
from jax.experimental import pallas as pl
from jax.experimental.pallas import tpu as pltpu

# ----------------------------- configuration -------------------------------
CFG = dict(
    batch=2,
    seq=8,                # number of caption tokens T
    vocab=128,            # synthetic GPT-2 vocab
    embed=64,             # gpt_embedding_size
    prefix_size=64,       # CLIP feature dim (dim_clip)
    prefix_length=4,
    clip_length=4,
    mapper_layers=2,      # small stand-in for num_layers=8
    mapper_heads=8,       # fixed to 8 in Transformer(dim_embedding, 8, ...)
    mapper_mlp_ratio=2.0, # Transformer default mlp_ratio
    gpt_layers=2,
    gpt_heads=4,
    n_positions=64,
)

LN_EPS = 1e-5
NEG_INF = -1e30           # finite large-negative mask value (no -inf NaN risk)


# --------------------------- host-side helpers ------------------------------

def _bias_mask(n_pos, nbatch, heads, causal):
    """Additive mask (heads*M, M) for the position-major (pos*B + b) slab."""
    M = n_pos * nbatch
    r = np.arange(M)
    pos, bat = r // nbatch, r % nbatch
    allowed = bat[:, None] == bat[None, :]          # same batch only
    if causal:
        allowed &= pos[None, :] <= pos[:, None]
    m = np.where(allowed, 0.0, NEG_INF).astype(np.float32)
    return jnp.asarray(np.tile(m, (heads, 1)))


# --------------------------- in-kernel helpers ------------------------------

def _layernorm(x, g, b, eps):
    mu = jnp.mean(x, axis=-1, keepdims=True)
    var = jnp.mean(jnp.square(x - mu), axis=-1, keepdims=True)
    return (x - mu) * lax.rsqrt(var + eps) * g + b


def _apply_act(y, act):
    if act == "relu":
        return jnp.maximum(y, 0.0)
    if act == "gelu":
        return jax.nn.gelu(y)     # tanh approximation == GPT-2 gelu_new
    return y


def _block_math(x, bias_mask, wqkv, bqkv, wo, vecs, fc1w, fc1b, fc2w, *,
                heads, act):
    """One pre-LN transformer block on a flattened (M, E) slab (f32 in/out).

    vecs rows: [ln1_g, ln1_b, ln2_g, ln2_b, attn_out_bias, fc2_bias].
    Attention uses the stacked-head formulation: lane-masked copies of Q are
    stacked along rows so QK^T, softmax and PV each run ONCE on (H*M, ...)
    operands instead of H tiny matmuls / softmaxes.
    """
    M, E = x.shape
    d = E // heads
    scale = d ** -0.5

    ln1_g, ln1_b = vecs[0:1, :], vecs[1:2, :]
    ln2_g, ln2_b = vecs[2:3, :], vecs[3:4, :]
    bo, fc2_b = vecs[4:5, :], vecs[5:6, :]

    # ---- attention ----
    xn = _layernorm(x, ln1_g, ln1_b, LN_EPS)
    qkv = jnp.dot(xn.astype(jnp.bfloat16), wqkv,
                  preferred_element_type=jnp.float32)        # (M, 3E)
    if bqkv is not None:
        qkv = qkv + bqkv
    q = qkv[:, :E] * scale
    k = qkv[:, E:2 * E]
    v = qkv[:, 2 * E:]

    col = lax.broadcasted_iota(jnp.int32, (1, E), 1)
    head_masks = [((col >= h * d) & (col < (h + 1) * d)).astype(jnp.float32)
                  for h in range(heads)]

    q_stack = jnp.concatenate([q * head_masks[h] for h in range(heads)],
                              axis=0).astype(jnp.bfloat16)   # (H*M, E)
    s = lax.dot_general(q_stack, k.astype(jnp.bfloat16),
                        (((1,), (1,)), ((), ())),
                        preferred_element_type=jnp.float32)  # (H*M, M)
    s = s + bias_mask
    s = s - jnp.max(s, axis=-1, keepdims=True)
    p = jnp.exp(s)
    p = p * pl.reciprocal(jnp.sum(p, axis=-1, keepdims=True), approx=True)
    pv = jnp.dot(p.astype(jnp.bfloat16), v.astype(jnp.bfloat16),
                 preferred_element_type=jnp.float32)         # (H*M, E)

    attn = pv[0:M, :] * head_masks[0]
    for h in range(1, heads):
        attn = attn + pv[h * M:(h + 1) * M, :] * head_masks[h]

    x = x + jnp.dot(attn.astype(jnp.bfloat16), wo,
                    preferred_element_type=jnp.float32) + bo

    # ---- MLP ----
    xn2 = _layernorm(x, ln2_g, ln2_b, LN_EPS)
    h1 = jnp.dot(xn2.astype(jnp.bfloat16), fc1w,
                 preferred_element_type=jnp.float32) + fc1b
    h1 = _apply_act(h1, act)
    x = x + jnp.dot(h1.astype(jnp.bfloat16), fc2w,
                    preferred_element_type=jnp.float32) + fc2_b
    return x


# ----------------- clip_project (TransformerMapper), one call ----------------

def _mapper_kernel(prefix_ref, mlw_ref, mlb_ref, pc_ref, mask_ref,
                   wqkv_ref, wo_ref, vec_ref, fc1w_ref, fc1b_ref, fc2w_ref,
                   o_ref, x_sc, *, nbatch, cl, plen, heads):
    E = x_sc.shape[-1]
    l = pl.program_id(0)

    @pl.when(l == 0)
    def _init():
        # linear(prefix) -> (B, cl*E) in one matmul, scattered to position-major
        # rows, followed by prefix_const broadcast over batch.  Single store.
        y = jnp.dot(prefix_ref[...].astype(jnp.bfloat16), mlw_ref[...],
                    preferred_element_type=jnp.float32) + mlb_ref[...]
        pc = pc_ref[...]
        parts = [y[:, i * E:(i + 1) * E] for i in range(cl)]
        parts += [jnp.broadcast_to(pc[j:j + 1, :], (nbatch, E))
                  for j in range(plen)]
        x_sc[...] = jnp.concatenate(parts, axis=0)

    x = _block_math(x_sc[...], mask_ref[...], wqkv_ref[...], None,
                    wo_ref[...], vec_ref[...], fc1w_ref[...], fc1b_ref[...],
                    fc2w_ref[...], heads=heads, act="relu")
    x_sc[...] = x

    @pl.when(l == pl.num_programs(0) - 1)
    def _finish():
        # TransformerMapper output slice [:, clip_length:]
        o_ref[...] = x[cl * nbatch:, :]


def clip_project(prefix, params):
    B = prefix.shape[0]
    E, P = CFG["embed"], CFG["prefix_size"]
    cl, plen = CFG["clip_length"], CFG["prefix_length"]
    sm = cl + plen
    H, L = CFG["mapper_heads"], CFG["mapper_layers"]
    hidden = int(E * CFG["mapper_mlp_ratio"])

    mask = _bias_mask(sm, B, H, causal=False)
    kernel = functools.partial(_mapper_kernel, nbatch=B, cl=cl, plen=plen,
                               heads=H)
    grid_spec = pltpu.PrefetchScalarGridSpec(
        num_scalar_prefetch=0,
        grid=(L,),
        in_specs=[
            pl.BlockSpec((B, P), lambda l: (0, 0)),
            pl.BlockSpec((P, cl * E), lambda l: (0, 0)),
            pl.BlockSpec((1, cl * E), lambda l: (0, 0)),
            pl.BlockSpec((plen, E), lambda l: (0, 0)),
            pl.BlockSpec((H * sm * B, sm * B), lambda l: (0, 0)),
            pl.BlockSpec((None, E, 3 * E), lambda l: (l, 0, 0)),
            pl.BlockSpec((None, E, E), lambda l: (l, 0, 0)),
            pl.BlockSpec((None, 6, E), lambda l: (l, 0, 0)),
            pl.BlockSpec((None, E, hidden), lambda l: (l, 0, 0)),
            pl.BlockSpec((None, 1, hidden), lambda l: (l, 0, 0)),
            pl.BlockSpec((None, hidden, E), lambda l: (l, 0, 0)),
        ],
        out_specs=pl.BlockSpec((plen * B, E), lambda l: (0, 0)),
        scratch_shapes=[pltpu.VMEM((sm * B, E), jnp.float32)],
    )
    return pl.pallas_call(
        kernel,
        out_shape=jax.ShapeDtypeStruct((plen * B, E), jnp.float32),
        grid_spec=grid_spec,
        compiler_params=pltpu.CompilerParams(
            dimension_semantics=("arbitrary",)),
    )(prefix, params["map_lin_w"], params["map_lin_b"],
      params["prefix_const"], mask,
      params["m_wqkv"], params["m_wo"], params["m_vec"],
      params["m_fc1w"], params["m_fc1b"], params["m_fc2w"])


# ------------------- GPT stack (assemble + blocks + head), one call ----------

def _gpt_kernel(tok_ref, pp_ref, wte_ref, wpe_ref, mask_ref,
                wqkv_ref, bqkv_ref, wo_ref, vec_ref, fc1w_ref, fc1b_ref,
                fc2w_ref, lnf_ref, wteT_ref, o_ref, x_sc, *,
                nbatch, ntok, heads):
    l = pl.program_id(0)

    @pl.when(l == 0)
    def _init():
        # concat(prefix_projections, wte(tokens)) + wpe, position-major rows.
        rows = [pp_ref[...]]
        for i in range(ntok * nbatch):
            rows.append(wte_ref[pl.ds(tok_ref[i], 1), :])
        x_sc[...] = jnp.concatenate(rows, axis=0) + wpe_ref[...]

    x = _block_math(x_sc[...], mask_ref[...], wqkv_ref[...], bqkv_ref[...],
                    wo_ref[...], vec_ref[...], fc1w_ref[...], fc1b_ref[...],
                    fc2w_ref[...], heads=heads, act="gelu")
    x_sc[...] = x

    @pl.when(l == pl.num_programs(0) - 1)
    def _finish():
        lnf = lnf_ref[...]
        xn = _layernorm(x, lnf[0:1, :], lnf[1:2, :], LN_EPS)
        o_ref[...] = jnp.dot(xn.astype(jnp.bfloat16), wteT_ref[...],
                             preferred_element_type=jnp.float32)


def gpt_forward(tokens, prefix_proj, params):
    B, T = tokens.shape
    E, V = CFG["embed"], CFG["vocab"]
    plen = CFG["prefix_length"]
    stot = plen + T
    H, L = CFG["gpt_heads"], CFG["gpt_layers"]

    mask = _bias_mask(stot, B, H, causal=True)
    wpe_rep = jnp.repeat(params["wpe"][:stot], B, axis=0)        # position-major
    tokens_flat = jnp.transpose(tokens).reshape(-1).astype(jnp.int32)

    kernel = functools.partial(_gpt_kernel, nbatch=B, ntok=T, heads=H)
    grid_spec = pltpu.PrefetchScalarGridSpec(
        num_scalar_prefetch=1,
        grid=(L,),
        in_specs=[
            pl.BlockSpec((plen * B, E), lambda l, tok: (0, 0)),
            pl.BlockSpec((V, E), lambda l, tok: (0, 0)),
            pl.BlockSpec((stot * B, E), lambda l, tok: (0, 0)),
            pl.BlockSpec((H * stot * B, stot * B), lambda l, tok: (0, 0)),
            pl.BlockSpec((None, E, 3 * E), lambda l, tok: (l, 0, 0)),
            pl.BlockSpec((None, 1, 3 * E), lambda l, tok: (l, 0, 0)),
            pl.BlockSpec((None, E, E), lambda l, tok: (l, 0, 0)),
            pl.BlockSpec((None, 6, E), lambda l, tok: (l, 0, 0)),
            pl.BlockSpec((None, E, 4 * E), lambda l, tok: (l, 0, 0)),
            pl.BlockSpec((None, 1, 4 * E), lambda l, tok: (l, 0, 0)),
            pl.BlockSpec((None, 4 * E, E), lambda l, tok: (l, 0, 0)),
            pl.BlockSpec((2, E), lambda l, tok: (0, 0)),
            pl.BlockSpec((E, V), lambda l, tok: (0, 0)),
        ],
        out_specs=pl.BlockSpec((stot * B, V), lambda l, tok: (0, 0)),
        scratch_shapes=[pltpu.VMEM((stot * B, E), jnp.float32)],
    )
    logits = pl.pallas_call(
        kernel,
        out_shape=jax.ShapeDtypeStruct((stot * B, V), jnp.float32),
        grid_spec=grid_spec,
        compiler_params=pltpu.CompilerParams(
            dimension_semantics=("arbitrary",)),
    )(tokens_flat, prefix_proj, params["wte"], wpe_rep, mask,
      params["g_wqkv"], params["g_bqkv"], params["g_wo"], params["g_vec"],
      params["g_fc1w"], params["g_fc1b"], params["g_fc2w"],
      params["lnf"], params["wte_t"])
    # position-major (stot*B, V) -> (B, stot, V)
    return logits.reshape(stot, B, V).transpose(1, 0, 2)


# ------------------------------- forward --------------------------------------

def clip_caption_forward(tokens, prefix, params):
    """ClipCaptionModel.forward(tokens, prefix, mask=None, labels=None)."""
    pp = clip_project(prefix, params)            # (prefix_length*B, E)
    logits = gpt_forward(tokens, pp, params)     # (B, plen+T, V)
    # TODO(synk): labels/loss path and HF attention_mask handling not
    # implemented (labels=None, mask=None forward); returns LM logits only.
    return logits


# -------------------------------- init -----------------------------------------

def _dense(key, shape, scale=0.02, dtype=jnp.float32):
    return (scale * jax.random.normal(key, shape, dtype=jnp.float32)).astype(dtype)


def init_params(key):
    E, V, NP, P = CFG["embed"], CFG["vocab"], CFG["n_positions"], CFG["prefix_size"]
    cl, plen = CFG["clip_length"], CFG["prefix_length"]
    Lm, Lg = CFG["mapper_layers"], CFG["gpt_layers"]
    hid_m = int(E * CFG["mapper_mlp_ratio"])
    hid_g = 4 * E
    keys = iter(jax.random.split(key, 64))
    nk = lambda: next(keys)
    bf = jnp.bfloat16

    # packed per-block (1,E) vectors: [ln1_g, ln1_b, ln2_g, ln2_b, bo, fc2_b]
    def vec_stack(L):
        one = np.ones((E,), np.float32)
        zero = np.zeros((E,), np.float32)
        v = np.stack([one, zero, one, zero, zero, zero])
        return jnp.asarray(np.broadcast_to(v, (L, 6, E)).copy())

    params = dict(
        # ---- clip_project (TransformerMapper) ----
        map_lin_w=_dense(nk(), (P, cl * E), dtype=bf),       # Linear(P, cl*E)
        map_lin_b=jnp.zeros((1, cl * E), jnp.float32),
        prefix_const=jax.random.normal(nk(), (plen, E), jnp.float32),
        m_wqkv=_dense(nk(), (Lm, E, 3 * E), dtype=bf),       # fused q|k|v (bias=False)
        m_wo=_dense(nk(), (Lm, E, E), dtype=bf),             # project (bias in m_vec)
        m_vec=vec_stack(Lm),
        m_fc1w=_dense(nk(), (Lm, E, hid_m), dtype=bf),
        m_fc1b=jnp.zeros((Lm, 1, hid_m), jnp.float32),
        m_fc2w=_dense(nk(), (Lm, hid_m, E), dtype=bf),
    )

    # ---- synthetic GPT-2 (stand-in for GPT2LMHeadModel.from_pretrained) ----
    # TODO(synk): pretrained GPT-2 weights / tokenizer cannot be loaded here;
    # a deterministic randomly-initialized small GPT-2 is used instead.
    wte = _dense(nk(), (V, E))
    params.update(
        wte=wte,
        wte_t=jnp.transpose(wte).astype(bf),     # tied LM head, hoisted to init
        wpe=_dense(nk(), (NP, E)),
        g_wqkv=_dense(nk(), (Lg, E, 3 * E), dtype=bf),
        g_bqkv=jnp.zeros((Lg, 1, 3 * E), jnp.float32),
        g_wo=_dense(nk(), (Lg, E, E), dtype=bf),
        g_vec=vec_stack(Lg),
        g_fc1w=_dense(nk(), (Lg, E, hid_g), dtype=bf),
        g_fc1b=jnp.zeros((Lg, 1, hid_g), jnp.float32),
        g_fc2w=_dense(nk(), (Lg, hid_g, E), dtype=bf),
        lnf=jnp.asarray(np.stack([np.ones((E,), np.float32),
                                  np.zeros((E,), np.float32)])),
    )
    return params


# -------------------------------- main ------------------------------------------

if __name__ == "__main__":
    root = jax.random.PRNGKey(0)
    k_params, k_tok, k_pref = jax.random.split(root, 3)

    params = init_params(k_params)
    tokens = jax.random.randint(k_tok, (CFG["batch"], CFG["seq"]),
                                0, CFG["vocab"], dtype=jnp.int32)
    prefix = jax.random.normal(k_pref, (CFG["batch"], CFG["prefix_size"]),
                               dtype=jnp.float32)

    fwd = jax.jit(clip_caption_forward)
    logits = jax.block_until_ready(fwd(tokens, prefix, params))

    expected = (CFG["batch"], CFG["prefix_length"] + CFG["seq"], CFG["vocab"])
    assert logits.shape == expected, (logits.shape, expected)
    assert bool(jnp.all(jnp.isfinite(logits)))
    print("KERNEL_OK")
</pallas_src>

<mosaic_0001>
module attributes {stable_mosaic.version = 11 : i64} {
  func.func @_mapper_kernel(%arg0: i32, %arg1: memref<2x64xf32, #tpu.memory_space<vmem>>, %arg2: memref<64x256xbf16, #tpu.memory_space<vmem>>, %arg3: memref<1x256xf32, #tpu.memory_space<vmem>>, %arg4: memref<4x64xf32, #tpu.memory_space<vmem>>, %arg5: memref<128x16xf32, #tpu.memory_space<vmem>>, %arg6: memref<1x64x192xbf16, #tpu.memory_space<vmem>>, %arg7: memref<1x64x64xbf16, #tpu.memory_space<vmem>>, %arg8: memref<1x6x64xf32, #tpu.memory_space<vmem>>, %arg9: memref<1x64x128xbf16, #tpu.memory_space<vmem>>, %arg10: memref<1x1x128xf32, #tpu.memory_space<vmem>>, %arg11: memref<1x128x64xbf16, #tpu.memory_space<vmem>>, %arg12: memref<8x64xf32, #tpu.memory_space<vmem>>, %arg13: memref<16x64xf32, #tpu.memory_space<vmem>>) attributes {dimension_semantics = [#tpu.dimension_semantics<arbitrary>], iteration_bounds = array<i64: 2>, scalar_prefetch = 0 : i64, scratch_operands = 1 : i64, tpu.core_type = #tpu.core_type<tc>, window_params = [{pipeline_mode = #tpu.pipeline_mode<synchronous>, transform_indices = @transform_0, window_bounds = array<i64: 2, 64>}, {pipeline_mode = #tpu.pipeline_mode<synchronous>, transform_indices = @transform_1, window_bounds = array<i64: 64, 256>}, {pipeline_mode = #tpu.pipeline_mode<synchronous>, transform_indices = @transform_2, window_bounds = array<i64: 1, 256>}, {pipeline_mode = #tpu.pipeline_mode<synchronous>, transform_indices = @transform_3, window_bounds = array<i64: 4, 64>}, {pipeline_mode = #tpu.pipeline_mode<synchronous>, transform_indices = @transform_4, window_bounds = array<i64: 128, 16>}, {transform_indices = @transform_5, window_bounds = array<i64: 1, 64, 192>}, {transform_indices = @transform_6, window_bounds = array<i64: 1, 64, 64>}, {transform_indices = @transform_7, window_bounds = array<i64: 1, 6, 64>}, {transform_indices = @transform_8, window_bounds = array<i64: 1, 64, 128>}, {transform_indices = @transform_9, window_bounds = array<i64: 1, 1, 128>}, {transform_indices = @transform_10, window_bounds = array<i64: 1, 128, 64>}, {pipeline_mode = #tpu.pipeline_mode<synchronous>, transform_indices = @transform_11, window_bounds = array<i64: 8, 64>}]} {
    %c0_i32 = arith.constant 0 : i32
    %0 = arith.cmpi eq, %arg0, %c0_i32 : i32
    %1 = arith.extui %0 : i1 to i32
    %c0_i32_0 = arith.constant 0 : i32
    %2 = arith.cmpi ne, %1, %c0_i32_0 : i32
    scf.if %2 {
      %c0_52 = arith.constant 0 : index
      %c0_53 = arith.constant 0 : index
      %216 = vector.load %arg1[%c0_52, %c0_53] : memref<2x64xf32, #tpu.memory_space<vmem>>, vector<2x64xf32>
      %217 = arith.truncf %216 : vector<2x64xf32> to vector<2x64xbf16>
      %c0_54 = arith.constant 0 : index
      %c0_55 = arith.constant 0 : index
      %218 = vector.load %arg2[%c0_54, %c0_55] : memref<64x256xbf16, #tpu.memory_space<vmem>>, vector<64x256xbf16>
      %cst_56 = arith.constant dense<0.000000e+00> : vector<2x256xf32>
      %219 = tpu.matmul %217, %218, %cst_56 {dimension_numbers = #tpu.dot_dimension_numbers<[1], [0], [0], [1], [0, 0, 1, 1], [], []>} : vector<2x64xbf16>, vector<64x256xbf16>, vector<2x256xf32> -> vector<2x256xf32>
      %c0_57 = arith.constant 0 : index
      %c0_58 = arith.constant 0 : index
      %220 = vector.load %arg3[%c0_57, %c0_58] : memref<1x256xf32, #tpu.memory_space<vmem>>, vector<1x256xf32>
      %221 = vector.broadcast %220 : vector<1x256xf32> to vector<2x256xf32>
      %222 = arith.addf %219, %221 : vector<2x256xf32>
      %c0_59 = arith.constant 0 : index
      %c0_60 = arith.constant 0 : index
      %223 = vector.load %arg4[%c0_59, %c0_60] : memref<4x64xf32, #tpu.memory_space<vmem>>, vector<4x64xf32>
      %224 = vector.extract_strided_slice %222 {offsets = [0, 0], sizes = [2, 64], strides = [1, 1]} : vector<2x256xf32> to vector<2x64xf32>
      %225 = vector.extract_strided_slice %222 {offsets = [0, 64], sizes = [2, 64], strides = [1, 1]} : vector<2x256xf32> to vector<2x64xf32>
      %226 = vector.extract_strided_slice %222 {offsets = [0, 128], sizes = [2, 64], strides = [1, 1]} : vector<2x256xf32> to vector<2x64xf32>
      %227 = vector.extract_strided_slice %222 {offsets = [0, 192], sizes = [2, 64], strides = [1, 1]} : vector<2x256xf32> to vector<2x64xf32>
      %228 = vector.extract_strided_slice %223 {offsets = [0, 0], sizes = [1, 64], strides = [1, 1]} : vector<4x64xf32> to vector<1x64xf32>
      %229 = vector.shape_cast %228 : vector<1x64xf32> to vector<1x64xf32>
      %230 = vector.broadcast %229 : vector<1x64xf32> to vector<2x64xf32>
      %231 = vector.extract_strided_slice %223 {offsets = [1, 0], sizes = [1, 64], strides = [1, 1]} : vector<4x64xf32> to vector<1x64xf32>
      %232 = vector.shape_cast %231 : vector<1x64xf32> to vector<1x64xf32>
      %233 = vector.broadcast %232 : vector<1x64xf32> to vector<2x64xf32>
      %234 = vector.extract_strided_slice %223 {offsets = [2, 0], sizes = [1, 64], strides = [1, 1]} : vector<4x64xf32> to vector<1x64xf32>
      %235 = vector.shape_cast %234 : vector<1x64xf32> to vector<1x64xf32>
      %236 = vector.broadcast %235 : vector<1x64xf32> to vector<2x64xf32>
      %237 = vector.extract_strided_slice %223 {offsets = [3, 0], sizes = [1, 64], strides = [1, 1]} : vector<4x64xf32> to vector<1x64xf32>
      %238 = vector.shape_cast %237 : vector<1x64xf32> to vector<1x64xf32>
      %239 = vector.broadcast %238 : vector<1x64xf32> to vector<2x64xf32>
      %240 = tpu.concatenate %224, %225, %226, %227, %230, %233, %236, %239 in 0 : vector<2x64xf32>, vector<2x64xf32>, vector<2x64xf32>, vector<2x64xf32>, vector<2x64xf32>, vector<2x64xf32>, vector<2x64xf32>, vector<2x64xf32> -> vector<16x64xf32>
      %c0_61 = arith.constant 0 : index
      %c0_62 = arith.constant 0 : index
      %241 = vector.load %arg13[%c0_61, %c0_62] : memref<16x64xf32, #tpu.memory_space<vmem>>, vector<16x64xf32>
      tpu.vector_store %arg13[%c0_61, %c0_62], %240 {strides = array<i32>} : memref<16x64xf32, #tpu.memory_space<vmem>>, vector<16x64xf32>,
    } else {
    }
    %c0 = arith.constant 0 : index
    %c0_1 = arith.constant 0 : index
    %3 = vector.load %arg13[%c0, %c0_1] : memref<16x64xf32, #tpu.memory_space<vmem>>, vector<16x64xf32>
    %c0_2 = arith.constant 0 : index
    %c0_3 = arith.constant 0 : index
    %4 = vector.load %arg5[%c0_2, %c0_3] : memref<128x16xf32, #tpu.memory_space<vmem>>, vector<128x16xf32>
    %c0_4 = arith.constant 0 : index
    %c0_5 = arith.constant 0 : index
    %c0_6 = arith.constant 0 : index
    %5 = vector.load %arg6[%c0_4, %c0_5, %c0_6] : memref<1x64x192xbf16, #tpu.memory_space<vmem>>, vector<1x64x192xbf16>
    %6 = vector.shape_cast %5 : vector<1x64x192xbf16> to vector<64x192xbf16>
    %c0_7 = arith.constant 0 : index
    %c0_8 = arith.constant 0 : index
    %c0_9 = arith.constant 0 : index
    %7 = vector.load %arg7[%c0_7, %c0_8, %c0_9] : memref<1x64x64xbf16, #tpu.memory_space<vmem>>, vector<1x64x64xbf16>
    %8 = vector.shape_cast %7 : vector<1x64x64xbf16> to vector<64x64xbf16>
    %c0_10 = arith.constant 0 : index
    %c0_11 = arith.constant 0 : index
    %c0_12 = arith.constant 0 : index
    %9 = vector.load %arg8[%c0_10, %c0_11, %c0_12] : memref<1x6x64xf32, #tpu.memory_space<vmem>>, vector<1x6x64xf32>
    %10 = vector.shape_cast %9 : vector<1x6x64xf32> to vector<6x64xf32>
    %c0_13 = arith.constant 0 : index
    %c0_14 = arith.constant 0 : index
    %c0_15 = arith.constant 0 : index
    %11 = vector.load %arg9[%c0_13, %c0_14, %c0_15] : memref<1x64x128xbf16, #tpu.memory_space<vmem>>, vector<1x64x128xbf16>
    %12 = vector.shape_cast %11 : vector<1x64x128xbf16> to vector<64x128xbf16>
    %c0_16 = arith.constant 0 : index
    %c0_17 = arith.constant 0 : index
    %c0_18 = arith.constant 0 : index
    %13 = vector.load %arg10[%c0_16, %c0_17, %c0_18] : memref<1x1x128xf32, #tpu.memory_space<vmem>>, vector<1x1x128xf32>
    %14 = vector.shape_cast %13 : vector<1x1x128xf32> to vector<1x128xf32>
    %c0_19 = arith.constant 0 : index
    %c0_20 = arith.constant 0 : index
    %c0_21 = arith.constant 0 : index
    %15 = vector.load %arg11[%c0_19, %c0_20, %c0_21] : memref<1x128x64xbf16, #tpu.memory_space<vmem>>, vector<1x128x64xbf16>
    %16 = vector.shape_cast %15 : vector<1x128x64xbf16> to vector<128x64xbf16>
    %17 = vector.extract_strided_slice %10 {offsets = [0, 0], sizes = [1, 64], strides = [1, 1]} : vector<6x64xf32> to vector<1x64xf32>
    %18 = vector.extract_strided_slice %10 {offsets = [1, 0], sizes = [1, 64], strides = [1, 1]} : vector<6x64xf32> to vector<1x64xf32>
    %19 = vector.extract_strided_slice %10 {offsets = [2, 0], sizes = [1, 64], strides = [1, 1]} : vector<6x64xf32> to vector<1x64xf32>
    %20 = vector.extract_strided_slice %10 {offsets = [3, 0], sizes = [1, 64], strides = [1, 1]} : vector<6x64xf32> to vector<1x64xf32>
    %21 = vector.extract_strided_slice %10 {offsets = [4, 0], sizes = [1, 64], strides = [1, 1]} : vector<6x64xf32> to vector<1x64xf32>
    %22 = vector.extract_strided_slice %10 {offsets = [5, 0], sizes = [1, 64], strides = [1, 1]} : vector<6x64xf32> to vector<1x64xf32>
    %cst = arith.constant dense<0.000000e+00> : vector<16xf32>
    %23 = vector.multi_reduction <add>, %3, %cst [1] : vector<16x64xf32> to vector<16xf32>
    %24 = vector.shape_cast %23 : vector<16xf32> to vector<16x1xf32>
    %cst_22 = arith.constant 6.400000e+01 : f32
    %25 = vector.broadcast %cst_22 : f32 to vector<16x1xf32>
    %26 = arith.divf %24, %25 : vector<16x1xf32>
    %27 = vector.broadcast %26 : vector<16x1xf32> to vector<16x64xf32>
    %28 = arith.subf %3, %27 : vector<16x64xf32>
    %29 = arith.mulf %28, %28 : vector<16x64xf32>
    %cst_23 = arith.constant dense<0.000000e+00> : vector<16xf32>
    %30 = vector.multi_reduction <add>, %29, %cst_23 [1] : vector<16x64xf32> to vector<16xf32>
    %31 = vector.shape_cast %30 : vector<16xf32> to vector<16x1xf32>
    %cst_24 = arith.constant 6.400000e+01 : f32
    %32 = vector.broadcast %cst_24 : f32 to vector<16x1xf32>
    %33 = arith.divf %31, %32 : vector<16x1xf32>
    %34 = vector.broadcast %26 : vector<16x1xf32> to vector<16x64xf32>
    %35 = arith.subf %3, %34 : vector<16x64xf32>
    %cst_25 = arith.constant 9.99999974E-6 : f32
    %36 = vector.broadcast %cst_25 : f32 to vector<16x1xf32>
    %37 = arith.addf %33, %36 : vector<16x1xf32>
    %38 = math.rsqrt %37 : vector<16x1xf32>
    %39 = vector.broadcast %38 : vector<16x1xf32> to vector<16x64xf32>
    %40 = arith.mulf %35, %39 : vector<16x64xf32>
    %41 = vector.broadcast %17 : vector<1x64xf32> to vector<16x64xf32>
    %42 = arith.mulf %40, %41 : vector<16x64xf32>
    %43 = vector.broadcast %18 : vector<1x64xf32> to vector<16x64xf32>
    %44 = arith.addf %42, %43 : vector<16x64xf32>
    %45 = arith.truncf %44 : vector<16x64xf32> to vector<16x64xbf16>
    %cst_26 = arith.constant dense<0.000000e+00> : vector<16x192xf32>
    %46 = tpu.matmul %45, %6, %cst_26 {dimension_numbers = #tpu.dot_dimension_numbers<[1], [0], [0], [1], [0, 0, 1, 1], [], []>} : vector<16x64xbf16>, vector<64x192xbf16>, vector<16x192xf32> -> vector<16x192xf32>
    %47 = vector.extract_strided_slice %46 {offsets = [0, 0], sizes = [16, 64], strides = [1, 1]} : vector<16x192xf32> to vector<16x64xf32>
    %cst_27 = arith.constant 0.353553385 : f32
    %48 = vector.broadcast %cst_27 : f32 to vector<16x64xf32>
    %49 = arith.mulf %47, %48 : vector<16x64xf32>
    %50 = vector.extract_strided_slice %46 {offsets = [0, 64], sizes = [16, 64], strides = [1, 1]} : vector<16x192xf32> to vector<16x64xf32>
    %51 = vector.extract_strided_slice %46 {offsets = [0, 128], sizes = [16, 64], strides = [1, 1]} : vector<16x192xf32> to vector<16x64xf32>
    %52 = tpu.iota {dimensions = array<i32: 1>} : vector<1x64xi32>
    %c0_i32_28 = arith.constant 0 : i32
    %53 = vector.broadcast %c0_i32_28 : i32 to vector<1x64xi32>
    %54 = arith.cmpi sge, %52, %53 : vector<1x64xi32>
    %c8_i32 = arith.constant 8 : i32
    %55 = vector.broadcast %c8_i32 : i32 to vector<1x64xi32>
    %56 = arith.cmpi slt, %52, %55 : vector<1x64xi32>
    %57 = arith.andi %54, %56 : vector<1x64xi1>
    %58 = arith.extui %57 : vector<1x64xi1> to vector<1x64xi32>
    %59 = arith.sitofp %58 : vector<1x64xi32> to vector<1x64xf32>
    %c8_i32_29 = arith.constant 8 : i32
    %60 = vector.broadcast %c8_i32_29 : i32 to vector<1x64xi32>
    %61 = arith.cmpi sge, %52, %60 : vector<1x64xi32>
    %c16_i32 = arith.constant 16 : i32
    %62 = vector.broadcast %c16_i32 : i32 to vector<1x64xi32>
    %63 = arith.cmpi slt, %52, %62 : vector<1x64xi32>
    %64 = arith.andi %61, %63 : vector<1x64xi1>
    %65 = arith.extui %64 : vector<1x64xi1> to vector<1x64xi32>
    %66 = arith.sitofp %65 : vector<1x64xi32> to vector<1x64xf32>
    %c16_i32_30 = arith.constant 16 : i32
    %67 = vector.broadcast %c16_i32_30 : i32 to vector<1x64xi32>
    %68 = arith.cmpi sge, %52, %67 : vector<1x64xi32>
    %c24_i32 = arith.constant 24 : i32
    %69 = vector.broadcast %c24_i32 : i32 to vector<1x64xi32>
    %70 = arith.cmpi slt, %52, %69 : vector<1x64xi32>
    %71 = arith.andi %68, %70 : vector<1x64xi1>
    %72 = arith.extui %71 : vector<1x64xi1> to vector<1x64xi32>
    %73 = arith.sitofp %72 : vector<1x64xi32> to vector<1x64xf32>
    %c24_i32_31 = arith.constant 24 : i32
    %74 = vector.broadcast %c24_i32_31 : i32 to vector<1x64xi32>
    %75 = arith.cmpi sge, %52, %74 : vector<1x64xi32>
    %c32_i32 = arith.constant 32 : i32
    %76 = vector.broadcast %c32_i32 : i32 to vector<1x64xi32>
    %77 = arith.cmpi slt, %52, %76 : vector<1x64xi32>
    %78 = arith.andi %75, %77 : vector<1x64xi1>
    %79 = arith.extui %78 : vector<1x64xi1> to vector<1x64xi32>
    %80 = arith.sitofp %79 : vector<1x64xi32> to vector<1x64xf32>
    %c32_i32_32 = arith.constant 32 : i32
    %81 = vector.broadcast %c32_i32_32 : i32 to vector<1x64xi32>
    %82 = arith.cmpi sge, %52, %81 : vector<1x64xi32>
    %c40_i32 = arith.constant 40 : i32
    %83 = vector.broadcast %c40_i32 : i32 to vector<1x64xi32>
    %84 = arith.cmpi slt, %52, %83 : vector<1x64xi32>
    %85 = arith.andi %82, %84 : vector<1x64xi1>
    %86 = arith.extui %85 : vector<1x64xi1> to vector<1x64xi32>
    %87 = arith.sitofp %86 : vector<1x64xi32> to vector<1x64xf32>
    %c40_i32_33 = arith.constant 40 : i32
    %88 = vector.broadcast %c40_i32_33 : i32 to vector<1x64xi32>
    %89 = arith.cmpi sge, %52, %88 : vector<1x64xi32>
    %c48_i32 = arith.constant 48 : i32
    %90 = vector.broadcast %c48_i32 : i32 to vector<1x64xi32>
    %91 = arith.cmpi slt, %52, %90 : vector<1x64xi32>
    %92 = arith.andi %89, %91 : vector<1x64xi1>
    %93 = arith.extui %92 : vector<1x64xi1> to vector<1x64xi32>
    %94 = arith.sitofp %93 : vector<1x64xi32> to vector<1x64xf32>
    %c48_i32_34 = arith.constant 48 : i32
    %95 = vector.broadcast %c48_i32_34 : i32 to vector<1x64xi32>
    %96 = arith.cmpi sge, %52, %95 : vector<1x64xi32>
    %c56_i32 = arith.constant 56 : i32
    %97 = vector.broadcast %c56_i32 : i32 to vector<1x64xi32>
    %98 = arith.cmpi slt, %52, %97 : vector<1x64xi32>
    %99 = arith.andi %96, %98 : vector<1x64xi1>
    %100 = arith.extui %99 : vector<1x64xi1> to vector<1x64xi32>
    %101 = arith.sitofp %100 : vector<1x64xi32> to vector<1x64xf32>
    %c56_i32_35 = arith.constant 56 : i32
    %102 = vector.broadcast %c56_i32_35 : i32 to vector<1x64xi32>
    %103 = arith.cmpi sge, %52, %102 : vector<1x64xi32>
    %c64_i32 = arith.constant 64 : i32
    %104 = vector.broadcast %c64_i32 : i32 to vector<1x64xi32>
    %105 = arith.cmpi slt, %52, %104 : vector<1x64xi32>
    %106 = arith.andi %103, %105 : vector<1x64xi1>
    %107 = arith.extui %106 : vector<1x64xi1> to vector<1x64xi32>
    %108 = arith.sitofp %107 : vector<1x64xi32> to vector<1x64xf32>
    %109 = vector.broadcast %59 : vector<1x64xf32> to vector<16x64xf32>
    %110 = arith.mulf %49, %109 : vector<16x64xf32>
    %111 = vector.broadcast %66 : vector<1x64xf32> to vector<16x64xf32>
    %112 = arith.mulf %49, %111 : vector<16x64xf32>
    %113 = vector.broadcast %73 : vector<1x64xf32> to vector<16x64xf32>
    %114 = arith.mulf %49, %113 : vector<16x64xf32>
    %115 = vector.broadcast %80 : vector<1x64xf32> to vector<16x64xf32>
    %116 = arith.mulf %49, %115 : vector<16x64xf32>
    %117 = vector.broadcast %87 : vector<1x64xf32> to vector<16x64xf32>
    %118 = arith.mulf %49, %117 : vector<16x64xf32>
    %119 = vector.broadcast %94 : vector<1x64xf32> to vector<16x64xf32>
    %120 = arith.mulf %49, %119 : vector<16x64xf32>
    %121 = vector.broadcast %101 : vector<1x64xf32> to vector<16x64xf32>
    %122 = arith.mulf %49, %121 : vector<16x64xf32>
    %123 = vector.broadcast %108 : vector<1x64xf32> to vector<16x64xf32>
    %124 = arith.mulf %49, %123 : vector<16x64xf32>
    %125 = tpu.concatenate %110, %112, %114, %116, %118, %120, %122, %124 in 0 : vector<16x64xf32>, vector<16x64xf32>, vector<16x64xf32>, vector<16x64xf32>, vector<16x64xf32>, vector<16x64xf32>, vector<16x64xf32>, vector<16x64xf32> -> vector<128x64xf32>
    %126 = arith.truncf %125 : vector<128x64xf32> to vector<128x64xbf16>
    %127 = arith.truncf %50 : vector<16x64xf32> to vector<16x64xbf16>
    %cst_36 = arith.constant dense<0.000000e+00> : vector<128x16xf32>
    %128 = tpu.matmul %126, %127, %cst_36 {dimension_numbers = #tpu.dot_dimension_numbers<[1], [1], [0], [0], [0, 0, 1, 0], [], []>} : vector<128x64xbf16>, vector<16x64xbf16>, vector<128x16xf32> -> vector<128x16xf32>
    %129 = arith.addf %128, %4 : vector<128x16xf32>
    %cst_37 = arith.constant dense<0xFF800000> : vector<128xf32>
    %130 = vector.multi_reduction <maximumf>, %129, %cst_37 [1] : vector<128x16xf32> to vector<128xf32>
    %131 = vector.shape_cast %130 : vector<128xf32> to vector<128x1xf32>
    %132 = vector.broadcast %131 : vector<128x1xf32> to vector<128x16xf32>
    %133 = arith.subf %129, %132 : vector<128x16xf32>
    %134 = math.exp %133 : vector<128x16xf32>
    %cst_38 = arith.constant dense<0.000000e+00> : vector<128xf32>
    %135 = vector.multi_reduction <add>, %134, %cst_38 [1] : vector<128x16xf32> to vector<128xf32>
    %136 = vector.shape_cast %135 : vector<128xf32> to vector<128x1xf32>
    %137 = tpu.reciprocal %136 {approx = true} : vector<128x1xf32> -> vector<128x1xf32>
    %138 = vector.broadcast %137 : vector<128x1xf32> to vector<128x16xf32>
    %139 = arith.mulf %134, %138 : vector<128x16xf32>
    %140 = arith.truncf %139 : vector<128x16xf32> to vector<128x16xbf16>
    %141 = arith.truncf %51 : vector<16x64xf32> to vector<16x64xbf16>
    %cst_39 = arith.constant dense<0.000000e+00> : vector<128x64xf32>
    %142 = tpu.matmul %140, %141, %cst_39 {dimension_numbers = #tpu.dot_dimension_numbers<[1], [0], [0], [1], [0, 0, 1, 1], [], []>} : vector<128x16xbf16>, vector<16x64xbf16>, vector<128x64xf32> -> vector<128x64xf32>
    %143 = vector.extract_strided_slice %142 {offsets = [0, 0], sizes = [16, 64], strides = [1, 1]} : vector<128x64xf32> to vector<16x64xf32>
    %144 = vector.broadcast %59 : vector<1x64xf32> to vector<16x64xf32>
    %145 = arith.mulf %143, %144 : vector<16x64xf32>
    %146 = vector.extract_strided_slice %142 {offsets = [16, 0], sizes = [16, 64], strides = [1, 1]} : vector<128x64xf32> to vector<16x64xf32>
    %147 = vector.broadcast %66 : vector<1x64xf32> to vector<16x64xf32>
    %148 = arith.mulf %146, %147 : vector<16x64xf32>
    %149 = arith.addf %145, %148 : vector<16x64xf32>
    %150 = vector.extract_strided_slice %142 {offsets = [32, 0], sizes = [16, 64], strides = [1, 1]} : vector<128x64xf32> to vector<16x64xf32>
    %151 = vector.broadcast %73 : vector<1x64xf32> to vector<16x64xf32>
    %152 = arith.mulf %150, %151 : vector<16x64xf32>
    %153 = arith.addf %149, %152 : vector<16x64xf32>
    %154 = vector.extract_strided_slice %142 {offsets = [48, 0], sizes = [16, 64], strides = [1, 1]} : vector<128x64xf32> to vector<16x64xf32>
    %155 = vector.broadcast %80 : vector<1x64xf32> to vector<16x64xf32>
    %156 = arith.mulf %154, %155 : vector<16x64xf32>
    %157 = arith.addf %153, %156 : vector<16x64xf32>
    %158 = vector.extract_strided_slice %142 {offsets = [64, 0], sizes = [16, 64], strides = [1, 1]} : vector<128x64xf32> to vector<16x64xf32>
    %159 = vector.broadcast %87 : vector<1x64xf32> to vector<16x64xf32>
    %160 = arith.mulf %158, %159 : vector<16x64xf32>
    %161 = arith.addf %157, %160 : vector<16x64xf32>
    %162 = vector.extract_strided_slice %142 {offsets = [80, 0], sizes = [16, 64], strides = [1, 1]} : vector<128x64xf32> to vector<16x64xf32>
    %163 = vector.broadcast %94 : vector<1x64xf32> to vector<16x64xf32>
    %164 = arith.mulf %162, %163 : vector<16x64xf32>
    %165 = arith.addf %161, %164 : vector<16x64xf32>
    %166 = vector.extract_strided_slice %142 {offsets = [96, 0], sizes = [16, 64], strides = [1, 1]} : vector<128x64xf32> to vector<16x64xf32>
    %167 = vector.broadcast %101 : vector<1x64xf32> to vector<16x64xf32>
    %168 = arith.mulf %166, %167 : vector<16x64xf32>
    %169 = arith.addf %165, %168 : vector<16x64xf32>
    %170 = vector.extract_strided_slice %142 {offsets = [112, 0], sizes = [16, 64], strides = [1, 1]} : vector<128x64xf32> to vector<16x64xf32>
    %171 = vector.broadcast %108 : vector<1x64xf32> to vector<16x64xf32>
    %172 = arith.mulf %170, %171 : vector<16x64xf32>
    %173 = arith.addf %169, %172 : vector<16x64xf32>
    %174 = arith.truncf %173 : vector<16x64xf32> to vector<16x64xbf16>
    %cst_40 = arith.constant dense<0.000000e+00> : vector<16x64xf32>
    %175 = tpu.matmul %174, %8, %cst_40 {dimension_numbers = #tpu.dot_dimension_numbers<[1], [0], [0], [1], [0, 0, 1, 1], [], []>} : vector<16x64xbf16>, vector<64x64xbf16>, vector<16x64xf32> -> vector<16x64xf32>
    %176 = arith.addf %3, %175 : vector<16x64xf32>
    %177 = vector.broadcast %21 : vector<1x64xf32> to vector<16x64xf32>
    %178 = arith.addf %176, %177 : vector<16x64xf32>
    %cst_41 = arith.constant dense<0.000000e+00> : vector<16xf32>
    %179 = vector.multi_reduction <add>, %178, %cst_41 [1] : vector<16x64xf32> to vector<16xf32>
    %180 = vector.shape_cast %179 : vector<16xf32> to vector<16x1xf32>
    %cst_42 = arith.constant 6.400000e+01 : f32
    %181 = vector.broadcast %cst_42 : f32 to vector<16x1xf32>
    %182 = arith.divf %180, %181 : vector<16x1xf32>
    %183 = vector.broadcast %182 : vector<16x1xf32> to vector<16x64xf32>
    %184 = arith.subf %178, %183 : vector<16x64xf32>
    %185 = arith.mulf %184, %184 : vector<16x64xf32>
    %cst_43 = arith.constant dense<0.000000e+00> : vector<16xf32>
    %186 = vector.multi_reduction <add>, %185, %cst_43 [1] : vector<16x64xf32> to vector<16xf32>
    %187 = vector.shape_cast %186 : vector<16xf32> to vector<16x1xf32>
    %cst_44 = arith.constant 6.400000e+01 : f32
    %188 = vector.broadcast %cst_44 : f32 to vector<16x1xf32>
    %189 = arith.divf %187, %188 : vector<16x1xf32>
    %190 = vector.broadcast %182 : vector<16x1xf32> to vector<16x64xf32>
    %191 = arith.subf %178, %190 : vector<16x64xf32>
    %cst_45 = arith.constant 9.99999974E-6 : f32
    %192 = vector.broadcast %cst_45 : f32 to vector<16x1xf32>
    %193 = arith.addf %189, %192 : vector<16x1xf32>
    %194 = math.rsqrt %193 : vector<16x1xf32>
    %195 = vector.broadcast %194 : vector<16x1xf32> to vector<16x64xf32>
    %196 = arith.mulf %191, %195 : vector<16x64xf32>
    %197 = vector.broadcast %19 : vector<1x64xf32> to vector<16x64xf32>
    %198 = arith.mulf %196, %197 : vector<16x64xf32>
    %199 = vector.broadcast %20 : vector<1x64xf32> to vector<16x64xf32>
    %200 = arith.addf %198, %199 : vector<16x64xf32>
    %201 = arith.truncf %200 : vector<16x64xf32> to vector<16x64xbf16>
    %cst_46 = arith.constant dense<0.000000e+00> : vector<16x128xf32>
    %202 = tpu.matmul %201, %12, %cst_46 {dimension_numbers = #tpu.dot_dimension_numbers<[1], [0], [0], [1], [0, 0, 1, 1], [], []>} : vector<16x64xbf16>, vector<64x128xbf16>, vector<16x128xf32> -> vector<16x128xf32>
    %203 = vector.broadcast %14 : vector<1x128xf32> to vector<16x128xf32>
    %204 = arith.addf %202, %203 : vector<16x128xf32>
    %cst_47 = arith.constant 0.000000e+00 : f32
    %205 = vector.broadcast %cst_47 : f32 to vector<16x128xf32>
    %206 = arith.maximumf %204, %205 : vector<16x128xf32>
    %207 = arith.truncf %206 : vector<16x128xf32> to vector<16x128xbf16>
    %cst_48 = arith.constant dense<0.000000e+00> : vector<16x64xf32>
    %208 = tpu.matmul %207, %16, %cst_48 {dimension_numbers = #tpu.dot_dimension_numbers<[1], [0], [0], [1], [0, 0, 1, 1], [], []>} : vector<16x128xbf16>, vector<128x64xbf16>, vector<16x64xf32> -> vector<16x64xf32>
    %209 = arith.addf %178, %208 : vector<16x64xf32>
    %210 = vector.broadcast %22 : vector<1x64xf32> to vector<16x64xf32>
    %211 = arith.addf %209, %210 : vector<16x64xf32>
    %c0_49 = arith.constant 0 : index
    %c0_50 = arith.constant 0 : index
    %212 = vector.load %arg13[%c0_49, %c0_50] : memref<16x64xf32, #tpu.memory_space<vmem>>, vector<16x64xf32>
    tpu.vector_store %arg13[%c0_49, %c0_50], %211 {strides = array<i32>} : memref<16x64xf32, #tpu.memory_space<vmem>>, vector<16x64xf32>,
    %c1_i32 = arith.constant 1 : i32
    %213 = arith.cmpi eq, %arg0, %c1_i32 : i32
    %214 = arith.extui %213 : i1 to i32
    %c0_i32_51 = arith.constant 0 : i32
    %215 = arith.cmpi ne, %214, %c0_i32_51 : i32
    scf.if %215 {
      %216 = vector.extract_strided_slice %211 {offsets = [8, 0], sizes = [8, 64], strides = [1, 1]} : vector<16x64xf32> to vector<8x64xf32>
      %c0_52 = arith.constant 0 : index
      %c0_53 = arith.constant 0 : index
      %217 = vector.load %arg12[%c0_52, %c0_53] : memref<8x64xf32, #tpu.memory_space<vmem>>, vector<8x64xf32>
      tpu.vector_store %arg12[%c0_52, %c0_53], %216 {strides = array<i32>} : memref<8x64xf32, #tpu.memory_space<vmem>>, vector<8x64xf32>,
    } else {
    }
    return
  }
  func.func @transform_0(%arg0: i32) -> (i32, i32) {
    %c0_i32 = arith.constant 0 : i32
    %c0_i32_0 = arith.constant 0 : i32
    %c0_i32_1 = arith.constant 0 : i32
    return %c0_i32, %c0_i32_0 : i32, i32
  }
  func.func @transform_1(%arg0: i32) -> (i32, i32) {
    %c0_i32 = arith.constant 0 : i32
    %c0_i32_0 = arith.constant 0 : i32
    %c0_i32_1 = arith.constant 0 : i32
    return %c0_i32, %c0_i32_0 : i32, i32
  }
  func.func @transform_2(%arg0: i32) -> (i32, i32) {
    %c0_i32 = arith.constant 0 : i32
    %c0_i32_0 = arith.constant 0 : i32
    %c0_i32_1 = arith.constant 0 : i32
    return %c0_i32, %c0_i32_0 : i32, i32
  }
  func.func @transform_3(%arg0: i32) -> (i32, i32) {
    %c0_i32 = arith.constant 0 : i32
    %c0_i32_0 = arith.constant 0 : i32
    %c0_i32_1 = arith.constant 0 : i32
    return %c0_i32, %c0_i32_0 : i32, i32
  }
  func.func @transform_4(%arg0: i32) -> (i32, i32) {
    %c0_i32 = arith.constant 0 : i32
    %c0_i32_0 = arith.constant 0 : i32
    %c0_i32_1 = arith.constant 0 : i32
    return %c0_i32, %c0_i32_0 : i32, i32
  }
  func.func @transform_5(%arg0: i32) -> (i32, i32, i32) {
    %c0_i32 = arith.constant 0 : i32
    %c0_i32_0 = arith.constant 0 : i32
    %c0_i32_1 = arith.constant 0 : i32
    return %arg0, %c0_i32, %c0_i32_0 : i32, i32, i32
  }
  func.func @transform_6(%arg0: i32) -> (i32, i32, i32) {
    %c0_i32 = arith.constant 0 : i32
    %c0_i32_0 = arith.constant 0 : i32
    %c0_i32_1 = arith.constant 0 : i32
    return %arg0, %c0_i32, %c0_i32_0 : i32, i32, i32
  }
  func.func @transform_7(%arg0: i32) -> (i32, i32, i32) {
    %c0_i32 = arith.constant 0 : i32
    %c0_i32_0 = arith.constant 0 : i32
    %c0_i32_1 = arith.constant 0 : i32
    return %arg0, %c0_i32, %c0_i32_0 : i32, i32, i32
  }
  func.func @transform_8(%arg0: i32) -> (i32, i32, i32) {
    %c0_i32 = arith.constant 0 : i32
    %c0_i32_0 = arith.constant 0 : i32
    %c0_i32_1 = arith.constant 0 : i32
    return %arg0, %c0_i32, %c0_i32_0 : i32, i32, i32
  }
  func.func @transform_9(%arg0: i32) -> (i32, i32, i32) {
    %c0_i32 = arith.constant 0 : i32
    %c0_i32_0 = arith.constant 0 : i32
    %c0_i32_1 = arith.constant 0 : i32
    return %arg0, %c0_i32, %c0_i32_0 : i32, i32, i32
  }
  func.func @transform_10(%arg0: i32) -> (i32, i32, i32) {
    %c0_i32 = arith.constant 0 : i32
    %c0_i32_0 = arith.constant 0 : i32
    %c0_i32_1 = arith.constant 0 : i32
    return %arg0, %c0_i32, %c0_i32_0 : i32, i32, i32
  }
  func.func @transform_11(%arg0: i32) -> (i32, i32) {
    %c0_i32 = arith.constant 0 : i32
    %c0_i32_0 = arith.constant 0 : i32
    %c0_i32_1 = arith.constant 0 : i32
    return %c0_i32, %c0_i32_0 : i32, i32
  }
}

module attributes {stable_mosaic.version = 11 : i64} {
  func.func @_gpt_kernel(%arg0: i32, %arg1: memref<16xi32, #tpu.memory_space<smem>>, %arg2: memref<8x64xf32, #tpu.memory_space<vmem>>, %arg3: memref<128x64xf32, #tpu.memory_space<vmem>>, %arg4: memref<24x64xf32, #tpu.memory_space<vmem>>, %arg5: memref<96x24xf32, #tpu.memory_space<vmem>>, %arg6: memref<1x64x192xbf16, #tpu.memory_space<vmem>>, %arg7: memref<1x1x192xf32, #tpu.memory_space<vmem>>, %arg8: memref<1x64x64xbf16, #tpu.memory_space<vmem>>, %arg9: memref<1x6x64xf32, #tpu.memory_space<vmem>>, %arg10: memref<1x64x256xbf16, #tpu.memory_space<vmem>>, %arg11: memref<1x1x256xf32, #tpu.memory_space<vmem>>, %arg12: memref<1x256x64xbf16, #tpu.memory_space<vmem>>, %arg13: memref<2x64xf32, #tpu.memory_space<vmem>>, %arg14: memref<64x128xbf16, #tpu.memory_space<vmem>>, %arg15: memref<24x128xf32, #tpu.memory_space<vmem>>, %arg16: memref<24x64xf32, #tpu.memory_space<vmem>>) attributes {dimension_semantics = [#tpu.dimension_semantics<arbitrary>], iteration_bounds = array<i64: 2>, scalar_prefetch = 1 : i64, scratch_operands = 1 : i64, tpu.core_type = #tpu.core_type<tc>, window_params = [{pipeline_mode = #tpu.pipeline_mode<synchronous>, transform_indices = @transform_0, window_bounds = array<i64: 8, 64>}, {pipeline_mode = #tpu.pipeline_mode<synchronous>, transform_indices = @transform_1, window_bounds = array<i64: 128, 64>}, {pipeline_mode = #tpu.pipeline_mode<synchronous>, transform_indices = @transform_2, window_bounds = array<i64: 24, 64>}, {pipeline_mode = #tpu.pipeline_mode<synchronous>, transform_indices = @transform_3, window_bounds = array<i64: 96, 24>}, {transform_indices = @transform_4, window_bounds = array<i64: 1, 64, 192>}, {transform_indices = @transform_5, window_bounds = array<i64: 1, 1, 192>}, {transform_indices = @transform_6, window_bounds = array<i64: 1, 64, 64>}, {transform_indices = @transform_7, window_bounds = array<i64: 1, 6, 64>}, {transform_indices = @transform_8, window_bounds = array<i64: 1, 64, 256>}, {transform_indices = @transform_9, window_bounds = array<i64: 1, 1, 256>}, {transform_indices = @transform_10, window_bounds = array<i64: 1, 256, 64>}, {pipeline_mode = #tpu.pipeline_mode<synchronous>, transform_indices = @transform_11, window_bounds = array<i64: 2, 64>}, {pipeline_mode = #tpu.pipeline_mode<synchronous>, transform_indices = @transform_12, window_bounds = array<i64: 64, 128>}, {pipeline_mode = #tpu.pipeline_mode<synchronous>, transform_indices = @transform_13, window_bounds = array<i64: 24, 128>}]} {
    %c0_i32 = arith.constant 0 : i32
    %0 = arith.cmpi eq, %arg0, %c0_i32 : i32
    %1 = arith.extui %0 : i1 to i32
    %c0_i32_0 = arith.constant 0 : i32
    %2 = arith.cmpi ne, %1, %c0_i32_0 : i32
    scf.if %2 {
      %c0_54 = arith.constant 0 : index
      %c0_55 = arith.constant 0 : index
      %179 = vector.load %arg2[%c0_54, %c0_55] : memref<8x64xf32, #tpu.memory_space<vmem>>, vector<8x64xf32>
      %c0_56 = arith.constant 0 : index
      %180 = memref.load %arg1[%c0_56] : memref<16xi32, #tpu.memory_space<smem>>
      %181 = arith.index_cast %180 : i32 to index
      %c0_57 = arith.constant 0 : index
      %182 = vector.load %arg3[%181, %c0_57] : memref<128x64xf32, #tpu.memory_space<vmem>>, vector<1x64xf32>
      %c1 = arith.constant 1 : index
      %183 = memref.load %arg1[%c1] : memref<16xi32, #tpu.memory_space<smem>>
      %184 = arith.index_cast %183 : i32 to index
      %c0_58 = arith.constant 0 : index
      %185 = vector.load %arg3[%184, %c0_58] : memref<128x64xf32, #tpu.memory_space<vmem>>, vector<1x64xf32>
      %c2 = arith.constant 2 : index
      %186 = memref.load %arg1[%c2] : memref<16xi32, #tpu.memory_space<smem>>
      %187 = arith.index_cast %186 : i32 to index
      %c0_59 = arith.constant 0 : index
      %188 = vector.load %arg3[%187, %c0_59] : memref<128x64xf32, #tpu.memory_space<vmem>>, vector<1x64xf32>
      %c3 = arith.constant 3 : index
      %189 = memref.load %arg1[%c3] : memref<16xi32, #tpu.memory_space<smem>>
      %190 = arith.index_cast %189 : i32 to index
      %c0_60 = arith.constant 0 : index
      %191 = vector.load %arg3[%190, %c0_60] : memref<128x64xf32, #tpu.memory_space<vmem>>, vector<1x64xf32>
      %c4 = arith.constant 4 : index
      %192 = memref.load %arg1[%c4] : memref<16xi32, #tpu.memory_space<smem>>
      %193 = arith.index_cast %192 : i32 to index
      %c0_61 = arith.constant 0 : index
      %194 = vector.load %arg3[%193, %c0_61] : memref<128x64xf32, #tpu.memory_space<vmem>>, vector<1x64xf32>
      %c5 = arith.constant 5 : index
      %195 = memref.load %arg1[%c5] : memref<16xi32, #tpu.memory_space<smem>>
      %196 = arith.index_cast %195 : i32 to index
      %c0_62 = arith.constant 0 : index
      %197 = vector.load %arg3[%196, %c0_62] : memref<128x64xf32, #tpu.memory_space<vmem>>, vector<1x64xf32>
      %c6 = arith.constant 6 : index
      %198 = memref.load %arg1[%c6] : memref<16xi32, #tpu.memory_space<smem>>
      %199 = arith.index_cast %198 : i32 to index
      %c0_63 = arith.constant 0 : index
      %200 = vector.load %arg3[%199, %c0_63] : memref<128x64xf32, #tpu.memory_space<vmem>>, vector<1x64xf32>
      %c7 = arith.constant 7 : index
      %201 = memref.load %arg1[%c7] : memref<16xi32, #tpu.memory_space<smem>>
      %202 = arith.index_cast %201 : i32 to index
      %c0_64 = arith.constant 0 : index
      %203 = vector.load %arg3[%202, %c0_64] : memref<128x64xf32, #tpu.memory_space<vmem>>, vector<1x64xf32>
      %c8 = arith.constant 8 : index
      %204 = memref.load %arg1[%c8] : memref<16xi32, #tpu.memory_space<smem>>
      %205 = arith.index_cast %204 : i32 to index
      %c0_65 = arith.constant 0 : index
      %206 = vector.load %arg3[%205, %c0_65] : memref<128x64xf32, #tpu.memory_space<vmem>>, vector<1x64xf32>
      %c9 = arith.constant 9 : index
      %207 = memref.load %arg1[%c9] : memref<16xi32, #tpu.memory_space<smem>>
      %208 = arith.index_cast %207 : i32 to index
      %c0_66 = arith.constant 0 : index
      %209 = vector.load %arg3[%208, %c0_66] : memref<128x64xf32, #tpu.memory_space<vmem>>, vector<1x64xf32>
      %c10 = arith.constant 10 : index
      %210 = memref.load %arg1[%c10] : memref<16xi32, #tpu.memory_space<smem>>
      %211 = arith.index_cast %210 : i32 to index
      %c0_67 = arith.constant 0 : index
      %212 = vector.load %arg3[%211, %c0_67] : memref<128x64xf32, #tpu.memory_space<vmem>>, vector<1x64xf32>
      %c11 = arith.constant 11 : index
      %213 = memref.load %arg1[%c11] : memref<16xi32, #tpu.memory_space<smem>>
      %214 = arith.index_cast %213 : i32 to index
      %c0_68 = arith.constant 0 : index
      %215 = vector.load %arg3[%214, %c0_68] : memref<128x64xf32, #tpu.memory_space<vmem>>, vector<1x64xf32>
      %c12 = arith.constant 12 : index
      %216 = memref.load %arg1[%c12] : memref<16xi32, #tpu.memory_space<smem>>
      %217 = arith.index_cast %216 : i32 to index
      %c0_69 = arith.constant 0 : index
      %218 = vector.load %arg3[%217, %c0_69] : memref<128x64xf32, #tpu.memory_space<vmem>>, vector<1x64xf32>
      %c13 = arith.constant 13 : index
      %219 = memref.load %arg1[%c13] : memref<16xi32, #tpu.memory_space<smem>>
      %220 = arith.index_cast %219 : i32 to index
      %c0_70 = arith.constant 0 : index
      %221 = vector.load %arg3[%220, %c0_70] : memref<128x64xf32, #tpu.memory_space<vmem>>, vector<1x64xf32>
      %c14 = arith.constant 14 : index
      %222 = memref.load %arg1[%c14] : memref<16xi32, #tpu.memory_space<smem>>
      %223 = arith.index_cast %222 : i32 to index
      %c0_71 = arith.constant 0 : index
      %224 = vector.load %arg3[%223, %c0_71] : memref<128x64xf32, #tpu.memory_space<vmem>>, vector<1x64xf32>
      %c15 = arith.constant 15 : index
      %225 = memref.load %arg1[%c15] : memref<16xi32, #tpu.memory_space<smem>>
      %226 = arith.index_cast %225 : i32 to index
      %c0_72 = arith.constant 0 : index
      %227 = vector.load %arg3[%226, %c0_72] : memref<128x64xf32, #tpu.memory_space<vmem>>, vector<1x64xf32>
      %228 = tpu.concatenate %179, %182, %185, %188, %191, %194, %197, %200, %203, %206, %209, %212, %215, %218, %221, %224 in 0 : vector<8x64xf32>, vector<1x64xf32>, vector<1x64xf32>, vector<1x64xf32>, vector<1x64xf32>, vector<1x64xf32>, vector<1x64xf32>, vector<1x64xf32>, vector<1x64xf32>, vector<1x64xf32>, vector<1x64xf32>, vector<1x64xf32>, vector<1x64xf32>, vector<1x64xf32>, vector<1x64xf32>, vector<1x64xf32> -> vector<23x64xf32>
      %229 = tpu.concatenate %228, %227 in 0 : vector<23x64xf32>, vector<1x64xf32> -> vector<24x64xf32>
      %c0_73 = arith.constant 0 : index
      %c0_74 = arith.constant 0 : index
      %230 = vector.load %arg4[%c0_73, %c0_74] : memref<24x64xf32, #tpu.memory_space<vmem>>, vector<24x64xf32>
      %231 = arith.addf %229, %230 : vector<24x64xf32>
      %c0_75 = arith.constant 0 : index
      %c0_76 = arith.constant 0 : index
      %232 = vector.load %arg16[%c0_75, %c0_76] : memref<24x64xf32, #tpu.memory_space<vmem>>, vector<24x64xf32>
      tpu.vector_store %arg16[%c0_75, %c0_76], %231 {strides = array<i32>} : memref<24x64xf32, #tpu.memory_space<vmem>>, vector<24x64xf32>,
    } else {
    }
    %c0 = arith.constant 0 : index
    %c0_1 = arith.constant 0 : index
    %3 = vector.load %arg16[%c0, %c0_1] : memref<24x64xf32, #tpu.memory_space<vmem>>, vector<24x64xf32>
    %c0_2 = arith.constant 0 : index
    %c0_3 = arith.constant 0 : index
    %4 = vector.load %arg5[%c0_2, %c0_3] : memref<96x24xf32, #tpu.memory_space<vmem>>, vector<96x24xf32>
    %c0_4 = arith.constant 0 : index
    %c0_5 = arith.constant 0 : index
    %c0_6 = arith.constant 0 : index
    %5 = vector.load %arg6[%c0_4, %c0_5, %c0_6] : memref<1x64x192xbf16, #tpu.memory_space<vmem>>, vector<1x64x192xbf16>
    %6 = vector.shape_cast %5 : vector<1x64x192xbf16> to vector<64x192xbf16>
    %c0_7 = arith.constant 0 : index
    %c0_8 = arith.constant 0 : index
    %c0_9 = arith.constant 0 : index
    %7 = vector.load %arg7[%c0_7, %c0_8, %c0_9] : memref<1x1x192xf32, #tpu.memory_space<vmem>>, vector<1x1x192xf32>
    %8 = vector.shape_cast %7 : vector<1x1x192xf32> to vector<1x192xf32>
    %c0_10 = arith.constant 0 : index
    %c0_11 = arith.constant 0 : index
    %c0_12 = arith.constant 0 : index
    %9 = vector.load %arg8[%c0_10, %c0_11, %c0_12] : memref<1x64x64xbf16, #tpu.memory_space<vmem>>, vector<1x64x64xbf16>
    %10 = vector.shape_cast %9 : vector<1x64x64xbf16> to vector<64x64xbf16>
    %c0_13 = arith.constant 0 : index
    %c0_14 = arith.constant 0 : index
    %c0_15 = arith.constant 0 : index
    %11 = vector.load %arg9[%c0_13, %c0_14, %c0_15] : memref<1x6x64xf32, #tpu.memory_space<vmem>>, vector<1x6x64xf32>
    %12 = vector.shape_cast %11 : vector<1x6x64xf32> to vector<6x64xf32>
    %c0_16 = arith.constant 0 : index
    %c0_17 = arith.constant 0 : index
    %c0_18 = arith.constant 0 : index
    %13 = vector.load %arg10[%c0_16, %c0_17, %c0_18] : memref<1x64x256xbf16, #tpu.memory_space<vmem>>, vector<1x64x256xbf16>
    %14 = vector.shape_cast %13 : vector<1x64x256xbf16> to vector<64x256xbf16>
    %c0_19 = arith.constant 0 : index
    %c0_20 = arith.constant 0 : index
    %c0_21 = arith.constant 0 : index
    %15 = vector.load %arg11[%c0_19, %c0_20, %c0_21] : memref<1x1x256xf32, #tpu.memory_space<vmem>>, vector<1x1x256xf32>
    %16 = vector.shape_cast %15 : vector<1x1x256xf32> to vector<1x256xf32>
    %c0_22 = arith.constant 0 : index
    %c0_23 = arith.constant 0 : index
    %c0_24 = arith.constant 0 : index
    %17 = vector.load %arg12[%c0_22, %c0_23, %c0_24] : memref<1x256x64xbf16, #tpu.memory_space<vmem>>, vector<1x256x64xbf16>
    %18 = vector.shape_cast %17 : vector<1x256x64xbf16> to vector<256x64xbf16>
    %19 = vector.extract_strided_slice %12 {offsets = [0, 0], sizes = [1, 64], strides = [1, 1]} : vector<6x64xf32> to vector<1x64xf32>
    %20 = vector.extract_strided_slice %12 {offsets = [1, 0], sizes = [1, 64], strides = [1, 1]} : vector<6x64xf32> to vector<1x64xf32>
    %21 = vector.extract_strided_slice %12 {offsets = [2, 0], sizes = [1, 64], strides = [1, 1]} : vector<6x64xf32> to vector<1x64xf32>
    %22 = vector.extract_strided_slice %12 {offsets = [3, 0], sizes = [1, 64], strides = [1, 1]} : vector<6x64xf32> to vector<1x64xf32>
    %23 = vector.extract_strided_slice %12 {offsets = [4, 0], sizes = [1, 64], strides = [1, 1]} : vector<6x64xf32> to vector<1x64xf32>
    %24 = vector.extract_strided_slice %12 {offsets = [5, 0], sizes = [1, 64], strides = [1, 1]} : vector<6x64xf32> to vector<1x64xf32>
    %cst = arith.constant dense<0.000000e+00> : vector<24xf32>
    %25 = vector.multi_reduction <add>, %3, %cst [1] : vector<24x64xf32> to vector<24xf32>
    %26 = vector.shape_cast %25 : vector<24xf32> to vector<24x1xf32>
    %cst_25 = arith.constant 6.400000e+01 : f32
    %27 = vector.broadcast %cst_25 : f32 to vector<24x1xf32>
    %28 = arith.divf %26, %27 : vector<24x1xf32>
    %29 = vector.broadcast %28 : vector<24x1xf32> to vector<24x64xf32>
    %30 = arith.subf %3, %29 : vector<24x64xf32>
    %31 = arith.mulf %30, %30 : vector<24x64xf32>
    %cst_26 = arith.constant dense<0.000000e+00> : vector<24xf32>
    %32 = vector.multi_reduction <add>, %31, %cst_26 [1] : vector<24x64xf32> to vector<24xf32>
    %33 = vector.shape_cast %32 : vector<24xf32> to vector<24x1xf32>
    %cst_27 = arith.constant 6.400000e+01 : f32
    %34 = vector.broadcast %cst_27 : f32 to vector<24x1xf32>
    %35 = arith.divf %33, %34 : vector<24x1xf32>
    %36 = vector.broadcast %28 : vector<24x1xf32> to vector<24x64xf32>
    %37 = arith.subf %3, %36 : vector<24x64xf32>
    %cst_28 = arith.constant 9.99999974E-6 : f32
    %38 = vector.broadcast %cst_28 : f32 to vector<24x1xf32>
    %39 = arith.addf %35, %38 : vector<24x1xf32>
    %40 = math.rsqrt %39 : vector<24x1xf32>
    %41 = vector.broadcast %40 : vector<24x1xf32> to vector<24x64xf32>
    %42 = arith.mulf %37, %41 : vector<24x64xf32>
    %43 = vector.broadcast %19 : vector<1x64xf32> to vector<24x64xf32>
    %44 = arith.mulf %42, %43 : vector<24x64xf32>
    %45 = vector.broadcast %20 : vector<1x64xf32> to vector<24x64xf32>
    %46 = arith.addf %44, %45 : vector<24x64xf32>
    %47 = arith.truncf %46 : vector<24x64xf32> to vector<24x64xbf16>
    %cst_29 = arith.constant dense<0.000000e+00> : vector<24x192xf32>
    %48 = tpu.matmul %47, %6, %cst_29 {dimension_numbers = #tpu.dot_dimension_numbers<[1], [0], [0], [1], [0, 0, 1, 1], [], []>} : vector<24x64xbf16>, vector<64x192xbf16>, vector<24x192xf32> -> vector<24x192xf32>
    %49 = vector.broadcast %8 : vector<1x192xf32> to vector<24x192xf32>
    %50 = arith.addf %48, %49 : vector<24x192xf32>
    %51 = vector.extract_strided_slice %50 {offsets = [0, 0], sizes = [24, 64], strides = [1, 1]} : vector<24x192xf32> to vector<24x64xf32>
    %cst_30 = arith.constant 2.500000e-01 : f32
    %52 = vector.broadcast %cst_30 : f32 to vector<24x64xf32>
    %53 = arith.mulf %51, %52 : vector<24x64xf32>
    %54 = vector.extract_strided_slice %50 {offsets = [0, 64], sizes = [24, 64], strides = [1, 1]} : vector<24x192xf32> to vector<24x64xf32>
    %55 = vector.extract_strided_slice %50 {offsets = [0, 128], sizes = [24, 64], strides = [1, 1]} : vector<24x192xf32> to vector<24x64xf32>
    %56 = tpu.iota {dimensions = array<i32: 1>} : vector<1x64xi32>
    %c0_i32_31 = arith.constant 0 : i32
    %57 = vector.broadcast %c0_i32_31 : i32 to vector<1x64xi32>
    %58 = arith.cmpi sge, %56, %57 : vector<1x64xi32>
    %c16_i32 = arith.constant 16 : i32
    %59 = vector.broadcast %c16_i32 : i32 to vector<1x64xi32>
    %60 = arith.cmpi slt, %56, %59 : vector<1x64xi32>
    %61 = arith.andi %58, %60 : vector<1x64xi1>
    %62 = arith.extui %61 : vector<1x64xi1> to vector<1x64xi32>
    %63 = arith.sitofp %62 : vector<1x64xi32> to vector<1x64xf32>
    %c16_i32_32 = arith.constant 16 : i32
    %64 = vector.broadcast %c16_i32_32 : i32 to vector<1x64xi32>
    %65 = arith.cmpi sge, %56, %64 : vector<1x64xi32>
    %c32_i32 = arith.constant 32 : i32
    %66 = vector.broadcast %c32_i32 : i32 to vector<1x64xi32>
    %67 = arith.cmpi slt, %56, %66 : vector<1x64xi32>
    %68 = arith.andi %65, %67 : vector<1x64xi1>
    %69 = arith.extui %68 : vector<1x64xi1> to vector<1x64xi32>
    %70 = arith.sitofp %69 : vector<1x64xi32> to vector<1x64xf32>
    %c32_i32_33 = arith.constant 32 : i32
    %71 = vector.broadcast %c32_i32_33 : i32 to vector<1x64xi32>
    %72 = arith.cmpi sge, %56, %71 : vector<1x64xi32>
    %c48_i32 = arith.constant 48 : i32
    %73 = vector.broadcast %c48_i32 : i32 to vector<1x64xi32>
    %74 = arith.cmpi slt, %56, %73 : vector<1x64xi32>
    %75 = arith.andi %72, %74 : vector<1x64xi1>
    %76 = arith.extui %75 : vector<1x64xi1> to vector<1x64xi32>
    %77 = arith.sitofp %76 : vector<1x64xi32> to vector<1x64xf32>
    %c48_i32_34 = arith.constant 48 : i32
    %78 = vector.broadcast %c48_i32_34 : i32 to vector<1x64xi32>
    %79 = arith.cmpi sge, %56, %78 : vector<1x64xi32>
    %c64_i32 = arith.constant 64 : i32
    %80 = vector.broadcast %c64_i32 : i32 to vector<1x64xi32>
    %81 = arith.cmpi slt, %56, %80 : vector<1x64xi32>
    %82 = arith.andi %79, %81 : vector<1x64xi1>
    %83 = arith.extui %82 : vector<1x64xi1> to vector<1x64xi32>
    %84 = arith.sitofp %83 : vector<1x64xi32> to vector<1x64xf32>
    %85 = vector.broadcast %63 : vector<1x64xf32> to vector<24x64xf32>
    %86 = arith.mulf %53, %85 : vector<24x64xf32>
    %87 = vector.broadcast %70 : vector<1x64xf32> to vector<24x64xf32>
    %88 = arith.mulf %53, %87 : vector<24x64xf32>
    %89 = vector.broadcast %77 : vector<1x64xf32> to vector<24x64xf32>
    %90 = arith.mulf %53, %89 : vector<24x64xf32>
    %91 = vector.broadcast %84 : vector<1x64xf32> to vector<24x64xf32>
    %92 = arith.mulf %53, %91 : vector<24x64xf32>
    %93 = tpu.concatenate %86, %88, %90, %92 in 0 : vector<24x64xf32>, vector<24x64xf32>, vector<24x64xf32>, vector<24x64xf32> -> vector<96x64xf32>
    %94 = arith.truncf %93 : vector<96x64xf32> to vector<96x64xbf16>
    %95 = arith.truncf %54 : vector<24x64xf32> to vector<24x64xbf16>
    %cst_35 = arith.constant dense<0.000000e+00> : vector<96x24xf32>
    %96 = tpu.matmul %94, %95, %cst_35 {dimension_numbers = #tpu.dot_dimension_numbers<[1], [1], [0], [0], [0, 0, 1, 0], [], []>} : vector<96x64xbf16>, vector<24x64xbf16>, vector<96x24xf32> -> vector<96x24xf32>
    %97 = arith.addf %96, %4 : vector<96x24xf32>
    %cst_36 = arith.constant dense<0xFF800000> : vector<96xf32>
    %98 = vector.multi_reduction <maximumf>, %97, %cst_36 [1] : vector<96x24xf32> to vector<96xf32>
    %99 = vector.shape_cast %98 : vector<96xf32> to vector<96x1xf32>
    %100 = vector.broadcast %99 : vector<96x1xf32> to vector<96x24xf32>
    %101 = arith.subf %97, %100 : vector<96x24xf32>
    %102 = math.exp %101 : vector<96x24xf32>
    %cst_37 = arith.constant dense<0.000000e+00> : vector<96xf32>
    %103 = vector.multi_reduction <add>, %102, %cst_37 [1] : vector<96x24xf32> to vector<96xf32>
    %104 = vector.shape_cast %103 : vector<96xf32> to vector<96x1xf32>
    %105 = tpu.reciprocal %104 {approx = true} : vector<96x1xf32> -> vector<96x1xf32>
    %106 = vector.broadcast %105 : vector<96x1xf32> to vector<96x24xf32>
    %107 = arith.mulf %102, %106 : vector<96x24xf32>
    %108 = arith.truncf %107 : vector<96x24xf32> to vector<96x24xbf16>
    %109 = arith.truncf %55 : vector<24x64xf32> to vector<24x64xbf16>
    %cst_38 = arith.constant dense<0.000000e+00> : vector<96x64xf32>
    %110 = tpu.matmul %108, %109, %cst_38 {dimension_numbers = #tpu.dot_dimension_numbers<[1], [0], [0], [1], [0, 0, 1, 1], [], []>} : vector<96x24xbf16>, vector<24x64xbf16>, vector<96x64xf32> -> vector<96x64xf32>
    %111 = vector.extract_strided_slice %110 {offsets = [0, 0], sizes = [24, 64], strides = [1, 1]} : vector<96x64xf32> to vector<24x64xf32>
    %112 = vector.broadcast %63 : vector<1x64xf32> to vector<24x64xf32>
    %113 = arith.mulf %111, %112 : vector<24x64xf32>
    %114 = vector.extract_strided_slice %110 {offsets = [24, 0], sizes = [24, 64], strides = [1, 1]} : vector<96x64xf32> to vector<24x64xf32>
    %115 = vector.broadcast %70 : vector<1x64xf32> to vector<24x64xf32>
    %116 = arith.mulf %114, %115 : vector<24x64xf32>
    %117 = arith.addf %113, %116 : vector<24x64xf32>
    %118 = vector.extract_strided_slice %110 {offsets = [48, 0], sizes = [24, 64], strides = [1, 1]} : vector<96x64xf32> to vector<24x64xf32>
    %119 = vector.broadcast %77 : vector<1x64xf32> to vector<24x64xf32>
    %120 = arith.mulf %118, %119 : vector<24x64xf32>
    %121 = arith.addf %117, %120 : vector<24x64xf32>
    %122 = vector.extract_strided_slice %110 {offsets = [72, 0], sizes = [24, 64], strides = [1, 1]} : vector<96x64xf32> to vector<24x64xf32>
    %123 = vector.broadcast %84 : vector<1x64xf32> to vector<24x64xf32>
    %124 = arith.mulf %122, %123 : vector<24x64xf32>
    %125 = arith.addf %121, %124 : vector<24x64xf32>
    %126 = arith.truncf %125 : vector<24x64xf32> to vector<24x64xbf16>
    %cst_39 = arith.constant dense<0.000000e+00> : vector<24x64xf32>
    %127 = tpu.matmul %126, %10, %cst_39 {dimension_numbers = #tpu.dot_dimension_numbers<[1], [0], [0], [1], [0, 0, 1, 1], [], []>} : vector<24x64xbf16>, vector<64x64xbf16>, vector<24x64xf32> -> vector<24x64xf32>
    %128 = arith.addf %3, %127 : vector<24x64xf32>
    %129 = vector.broadcast %23 : vector<1x64xf32> to vector<24x64xf32>
    %130 = arith.addf %128, %129 : vector<24x64xf32>
    %cst_40 = arith.constant dense<0.000000e+00> : vector<24xf32>
    %131 = vector.multi_reduction <add>, %130, %cst_40 [1] : vector<24x64xf32> to vector<24xf32>
    %132 = vector.shape_cast %131 : vector<24xf32> to vector<24x1xf32>
    %cst_41 = arith.constant 6.400000e+01 : f32
    %133 = vector.broadcast %cst_41 : f32 to vector<24x1xf32>
    %134 = arith.divf %132, %133 : vector<24x1xf32>
    %135 = vector.broadcast %134 : vector<24x1xf32> to vector<24x64xf32>
    %136 = arith.subf %130, %135 : vector<24x64xf32>
    %137 = arith.mulf %136, %136 : vector<24x64xf32>
    %cst_42 = arith.constant dense<0.000000e+00> : vector<24xf32>
    %138 = vector.multi_reduction <add>, %137, %cst_42 [1] : vector<24x64xf32> to vector<24xf32>
    %139 = vector.shape_cast %138 : vector<24xf32> to vector<24x1xf32>
    %cst_43 = arith.constant 6.400000e+01 : f32
    %140 = vector.broadcast %cst_43 : f32 to vector<24x1xf32>
    %141 = arith.divf %139, %140 : vector<24x1xf32>
    %142 = vector.broadcast %134 : vector<24x1xf32> to vector<24x64xf32>
    %143 = arith.subf %130, %142 : vector<24x64xf32>
    %cst_44 = arith.constant 9.99999974E-6 : f32
    %144 = vector.broadcast %cst_44 : f32 to vector<24x1xf32>
    %145 = arith.addf %141, %144 : vector<24x1xf32>
    %146 = math.rsqrt %145 : vector<24x1xf32>
    %147 = vector.broadcast %146 : vector<24x1xf32> to vector<24x64xf32>
    %148 = arith.mulf %143, %147 : vector<24x64xf32>
    %149 = vector.broadcast %21 : vector<1x64xf32> to vector<24x64xf32>
    %150 = arith.mulf %148, %149 : vector<24x64xf32>
    %151 = vector.broadcast %22 : vector<1x64xf32> to vector<24x64xf32>
    %152 = arith.addf %150, %151 : vector<24x64xf32>
    %153 = arith.truncf %152 : vector<24x64xf32> to vector<24x64xbf16>
    %cst_45 = arith.constant dense<0.000000e+00> : vector<24x256xf32>
    %154 = tpu.matmul %153, %14, %cst_45 {dimension_numbers = #tpu.dot_dimension_numbers<[1], [0], [0], [1], [0, 0, 1, 1], [], []>} : vector<24x64xbf16>, vector<64x256xbf16>, vector<24x256xf32> -> vector<24x256xf32>
    %155 = vector.broadcast %16 : vector<1x256xf32> to vector<24x256xf32>
    %156 = arith.addf %154, %155 : vector<24x256xf32>
    %157 = arith.mulf %156, %156 : vector<24x256xf32>
    %158 = arith.mulf %156, %157 : vector<24x256xf32>
    %cst_46 = arith.constant 4.471500e-02 : f32
    %159 = vector.broadcast %cst_46 : f32 to vector<24x256xf32>
    %160 = arith.mulf %159, %158 : vector<24x256xf32>
    %161 = arith.addf %156, %160 : vector<24x256xf32>
    %cst_47 = arith.constant 0.797884583 : f32
    %162 = vector.broadcast %cst_47 : f32 to vector<24x256xf32>
    %163 = arith.mulf %162, %161 : vector<24x256xf32>
    %164 = math.tanh %163 : vector<24x256xf32>
    %cst_48 = arith.constant 1.000000e+00 : f32
    %165 = vector.broadcast %cst_48 : f32 to vector<24x256xf32>
    %166 = arith.addf %165, %164 : vector<24x256xf32>
    %cst_49 = arith.constant 5.000000e-01 : f32
    %167 = vector.broadcast %cst_49 : f32 to vector<24x256xf32>
    %168 = arith.mulf %167, %166 : vector<24x256xf32>
    %169 = arith.mulf %156, %168 : vector<24x256xf32>
    %170 = arith.truncf %169 : vector<24x256xf32> to vector<24x256xbf16>
    %cst_50 = arith.constant dense<0.000000e+00> : vector<24x64xf32>
    %171 = tpu.matmul %170, %18, %cst_50 {dimension_numbers = #tpu.dot_dimension_numbers<[1], [0], [0], [1], [0, 0, 1, 1], [], []>} : vector<24x256xbf16>, vector<256x64xbf16>, vector<24x64xf32> -> vector<24x64xf32>
    %172 = arith.addf %130, %171 : vector<24x64xf32>
    %173 = vector.broadcast %24 : vector<1x64xf32> to vector<24x64xf32>
    %174 = arith.addf %172, %173 : vector<24x64xf32>
    %c0_51 = arith.constant 0 : index
    %c0_52 = arith.constant 0 : index
    %175 = vector.load %arg16[%c0_51, %c0_52] : memref<24x64xf32, #tpu.memory_space<vmem>>, vector<24x64xf32>
    tpu.vector_store %arg16[%c0_51, %c0_52], %174 {strides = array<i32>} : memref<24x64xf32, #tpu.memory_space<vmem>>, vector<24x64xf32>,
    %c1_i32 = arith.constant 1 : i32
    %176 = arith.cmpi eq, %arg0, %c1_i32 : i32
    %177 = arith.extui %176 : i1 to i32
    %c0_i32_53 = arith.constant 0 : i32
    %178 = arith.cmpi ne, %177, %c0_i32_53 : i32
    scf.if %178 {
      %c0_54 = arith.constant 0 : index
      %c0_55 = arith.constant 0 : index
      %179 = vector.load %arg13[%c0_54, %c0_55] : memref<2x64xf32, #tpu.memory_space<vmem>>, vector<2x64xf32>
      %180 = vector.extract_strided_slice %179 {offsets = [0, 0], sizes = [1, 64], strides = [1, 1]} : vector<2x64xf32> to vector<1x64xf32>
      %181 = vector.extract_strided_slice %179 {offsets = [1, 0], sizes = [1, 64], strides = [1, 1]} : vector<2x64xf32> to vector<1x64xf32>
      %cst_56 = arith.constant dense<0.000000e+00> : vector<24xf32>
      %182 = vector.multi_reduction <add>, %174, %cst_56 [1] : vector<24x64xf32> to vector<24xf32>
      %183 = vector.shape_cast %182 : vector<24xf32> to vector<24x1xf32>
      %cst_57 = arith.constant 6.400000e+01 : f32
      %184 = vector.broadcast %cst_57 : f32 to vector<24x1xf32>
      %185 = arith.divf %183, %184 : vector<24x1xf32>
      %186 = vector.broadcast %185 : vector<24x1xf32> to vector<24x64xf32>
      %187 = arith.subf %174, %186 : vector<24x64xf32>
      %188 = arith.mulf %187, %187 : vector<24x64xf32>
      %cst_58 = arith.constant dense<0.000000e+00> : vector<24xf32>
      %189 = vector.multi_reduction <add>, %188, %cst_58 [1] : vector<24x64xf32> to vector<24xf32>
      %190 = vector.shape_cast %189 : vector<24xf32> to vector<24x1xf32>
      %cst_59 = arith.constant 6.400000e+01 : f32
      %191 = vector.broadcast %cst_59 : f32 to vector<24x1xf32>
      %192 = arith.divf %190, %191 : vector<24x1xf32>
      %193 = vector.broadcast %185 : vector<24x1xf32> to vector<24x64xf32>
      %194 = arith.subf %174, %193 : vector<24x64xf32>
      %cst_60 = arith.constant 9.99999974E-6 : f32
      %195 = vector.broadcast %cst_60 : f32 to vector<24x1xf32>
      %196 = arith.addf %192, %195 : vector<24x1xf32>
      %197 = math.rsqrt %196 : vector<24x1xf32>
      %198 = vector.broadcast %197 : vector<24x1xf32> to vector<24x64xf32>
      %199 = arith.mulf %194, %198 : vector<24x64xf32>
      %200 = vector.broadcast %180 : vector<1x64xf32> to vector<24x64xf32>
      %201 = arith.mulf %199, %200 : vector<24x64xf32>
      %202 = vector.broadcast %181 : vector<1x64xf32> to vector<24x64xf32>
      %203 = arith.addf %201, %202 : vector<24x64xf32>
      %204 = arith.truncf %203 : vector<24x64xf32> to vector<24x64xbf16>
      %c0_61 = arith.constant 0 : index
      %c0_62 = arith.constant 0 : index
      %205 = vector.load %arg14[%c0_61, %c0_62] : memref<64x128xbf16, #tpu.memory_space<vmem>>, vector<64x128xbf16>
      %cst_63 = arith.constant dense<0.000000e+00> : vector<24x128xf32>
      %206 = tpu.matmul %204, %205, %cst_63 {dimension_numbers = #tpu.dot_dimension_numbers<[1], [0], [0], [1], [0, 0, 1, 1], [], []>} : vector<24x64xbf16>, vector<64x128xbf16>, vector<24x128xf32> -> vector<24x128xf32>
      %c0_64 = arith.constant 0 : index
      %c0_65 = arith.constant 0 : index
      %207 = vector.load %arg15[%c0_64, %c0_65] : memref<24x128xf32, #tpu.memory_space<vmem>>, vector<24x128xf32>
      tpu.vector_store %arg15[%c0_64, %c0_65], %206 {strides = array<i32>} : memref<24x128xf32, #tpu.memory_space<vmem>>, vector<24x128xf32>,
    } else {
    }
    return
  }
  func.func @transform_0(%arg0: i32, %arg1: memref<16xi32, #tpu.memory_space<smem>>) -> (i32, i32) {
    %c0_i32 = arith.constant 0 : i32
    %c0_i32_0 = arith.constant 0 : i32
    %c0_i32_1 = arith.constant 0 : i32
    return %c0_i32, %c0_i32_0 : i32, i32
  }
  func.func @transform_1(%arg0: i32, %arg1: memref<16xi32, #tpu.memory_space<smem>>) -> (i32, i32) {
    %c0_i32 = arith.constant 0 : i32
    %c0_i32_0 = arith.constant 0 : i32
    %c0_i32_1 = arith.constant 0 : i32
    return %c0_i32, %c0_i32_0 : i32, i32
  }
  func.func @transform_2(%arg0: i32, %arg1: memref<16xi32, #tpu.memory_space<smem>>) -> (i32, i32) {
    %c0_i32 = arith.constant 0 : i32
    %c0_i32_0 = arith.constant 0 : i32
    %c0_i32_1 = arith.constant 0 : i32
    return %c0_i32, %c0_i32_0 : i32, i32
  }
  func.func @transform_3(%arg0: i32, %arg1: memref<16xi32, #tpu.memory_space<smem>>) -> (i32, i32) {
    %c0_i32 = arith.constant 0 : i32
    %c0_i32_0 = arith.constant 0 : i32
    %c0_i32_1 = arith.constant 0 : i32
    return %c0_i32, %c0_i32_0 : i32, i32
  }
  func.func @transform_4(%arg0: i32, %arg1: memref<16xi32, #tpu.memory_space<smem>>) -> (i32, i32, i32) {
    %c0_i32 = arith.constant 0 : i32
    %c0_i32_0 = arith.constant 0 : i32
    %c0_i32_1 = arith.constant 0 : i32
    return %arg0, %c0_i32, %c0_i32_0 : i32, i32, i32
  }
  func.func @transform_5(%arg0: i32, %arg1: memref<16xi32, #tpu.memory_space<smem>>) -> (i32, i32, i32) {
    %c0_i32 = arith.constant 0 : i32
    %c0_i32_0 = arith.constant 0 : i32
    %c0_i32_1 = arith.constant 0 : i32
    return %arg0, %c0_i32, %c0_i32_0 : i32, i32, i32
  }
  func.func @transform_6(%arg0: i32, %arg1: memref<16xi32, #tpu.memory_space<smem>>) -> (i32, i32, i32) {
    %c0_i32 = arith.constant 0 : i32
    %c0_i32_0 = arith.constant 0 : i32
    %c0_i32_1 = arith.constant 0 : i32
    return %arg0, %c0_i32, %c0_i32_0 : i32, i32, i32
  }
  func.func @transform_7(%arg0: i32, %arg1: memref<16xi32, #tpu.memory_space<smem>>) -> (i32, i32, i32) {
    %c0_i32 = arith.constant 0 : i32
    %c0_i32_0 = arith.constant 0 : i32
    %c0_i32_1 = arith.constant 0 : i32
    return %arg0, %c0_i32, %c0_i32_0 : i32, i32, i32
  }
  func.func @transform_8(%arg0: i32, %arg1: memref<16xi32, #tpu.memory_space<smem>>) -> (i32, i32, i32) {
    %c0_i32 = arith.constant 0 : i32
    %c0_i32_0 = arith.constant 0 : i32
    %c0_i32_1 = arith.constant 0 : i32
    return %arg0, %c0_i32, %c0_i32_0 : i32, i32, i32
  }
  func.func @transform_9(%arg0: i32, %arg1: memref<16xi32, #tpu.memory_space<smem>>) -> (i32, i32, i32) {
    %c0_i32 = arith.constant 0 : i32
    %c0_i32_0 = arith.constant 0 : i32
    %c0_i32_1 = arith.constant 0 : i32
    return %arg0, %c0_i32, %c0_i32_0 : i32, i32, i32
  }
  func.func @transform_10(%arg0: i32, %arg1: memref<16xi32, #tpu.memory_space<smem>>) -> (i32, i32, i32) {
    %c0_i32 = arith.constant 0 : i32
    %c0_i32_0 = arith.constant 0 : i32
    %c0_i32_1 = arith.constant 0 : i32
    return %arg0, %c0_i32, %c0_i32_0 : i32, i32, i32
  }
  func.func @transform_11(%arg0: i32, %arg1: memref<16xi32, #tpu.memory_space<smem>>) -> (i32, i32) {
    %c0_i32 = arith.constant 0 : i32
    %c0_i32_0 = arith.constant 0 : i32
    %c0_i32_1 = arith.constant 0 : i32
    return %c0_i32, %c0_i32_0 : i32, i32
  }
  func.func @transform_12(%arg0: i32, %arg1: memref<16xi32, #tpu.memory_space<smem>>) -> (i32, i32) {
    %c0_i32 = arith.constant 0 : i32
    %c0_i32_0 = arith.constant 0 : i32
    %c0_i32_1 = arith.constant 0 : i32
    return %c0_i32, %c0_i32_0 : i32, i32
  }
  func.func @transform_13(%arg0: i32, %arg1: memref<16xi32, #tpu.memory_space<smem>>) -> (i32, i32) {
    %c0_i32 = arith.constant 0 : i32
    %c0_i32_0 = arith.constant 0 : i32
    %c0_i32_1 = arith.constant 0 : i32
    return %c0_i32, %c0_i32_0 : i32, i32
  }
}

</mosaic_0001>

<llo_original>
// kernel: clip_caption_forward.2
$region0: #{clip_caption_forward.2}
  #allocation0 [shape = 'u32[]', space=smem, size = 0x4, offset = 0x4, fixed_abs, tag = 'smem constant byte address 0x4 - core index']
  #allocation1 [shape = 'u32[144,128]{1,0:T(1,128)}', space=vmem, size = 0x12000, scoped, tag = 'internal scratch']
  #allocation2 [shape = 'f32[16,64]{1,0:T(8,128)}', space=vmem, size = 0x2000, scoped, tag = 'scratch operand']
  %s0 = inlined_call_operand.vmem [shape: f32[2,64], index: 0, kind: input, shape index: {}]
  %s1 = inlined_call_operand.vmem [shape: bf16[64,256], index: 1, kind: input, shape index: {}]
  %s2 = inlined_call_operand.hbm [shape: f32[1,256], index: 2, kind: input, shape index: {}]
  %s3 = inlined_call_operand.vmem [shape: f32[4,64], index: 3, kind: input, shape index: {}]
  %s4 = inlined_call_operand.vmem [shape: f32[128,16], index: 4, kind: input, shape index: {}]
  %s5 = inlined_call_operand.vmem [shape: bf16[2,64,192], index: 5, kind: input, shape index: {}]
  %s6 = inlined_call_operand.hbm [shape: bf16[2,64,64], index: 6, kind: input, shape index: {}]
  %s7 = inlined_call_operand.vmem [shape: f32[2,6,64], index: 7, kind: input, shape index: {}]
  %s8 = inlined_call_operand.hbm [shape: bf16[2,64,128], index: 8, kind: input, shape index: {}]
  %s9 = inlined_call_operand.hbm [shape: f32[2,1,128], index: 9, kind: input, shape index: {}]
  %s10 = inlined_call_operand.vmem [shape: bf16[2,128,64], index: 10, kind: input, shape index: {}]
  %s11 = inlined_call_operand.vmem [shape: f32[8,64], index: 11, kind: output, shape index: {}]
  %s12 = sld [smem:[#allocation0]]
  $region101: #{clip_caption_forward.2} parent=0
    _
  %s14 = ssub.s32 1, %s12
  %s15 = scalar_select 0, %s14, %s12
  $region1: #{clip_caption_forward.2} parent=0
    #allocation3 [shape = 'u8[1024]{0}', space=vmem, size = 0x400, scoped, tag = 'input window, operand 2, single buffered']
    #allocation4 [shape = 's32[2]{0}', space=sflag, size = 0x8, scoped, tag = 'scoped memory for clip_caption_forward.2']
    #allocation5 [shape = 'u8[32768]{0}', space=vmem, size = 0x8000, scoped, tag = 'input window, operand 6']
    #allocation6 [shape = 's32[2]{0}', space=sflag, size = 0x8, scoped, tag = 'scoped memory for clip_caption_forward.2']
    #allocation7 [shape = 'u8[32768]{0}', space=vmem, size = 0x8000, scoped, tag = 'input window, operand 8']
    #allocation8 [shape = 'u8[1024]{0}', space=vmem, size = 0x400, scoped, tag = 'input window, operand 9']
    #allocation9 [shape = 's32[2]{0}', space=sflag, size = 0x8, scoped, tag = 'scoped memory for clip_caption_forward.2']
    %16 = vsyncpa [#allocation4], 0
    %17 = vsyncpa [#allocation6], 0
    %s18 = scalar_lea.sflag [#allocation6], 1
    %19 = vsyncpa %s18, 0
    %20 = vsyncpa [#allocation9], 0
    %s21 = scalar_lea.sflag [#allocation9], 1
    %22 = vsyncpa %s21, 0
    loop: start=0, step=1, limit=4
    $region2: #{clip_caption_forward.2} parent=1 // loop_pre_header
      _
    $region3: #{clip_caption_forward.2} parent=1 // loop_header
      %s24 = sphi 0, %s28
      %p25 = scmp.ge.s32.totalorder %s24, 4
      %s32 = sphi 0, %s32
      %s34 = sphi 0, %s32
      %s35 = sphi 0, %s34
      %s49 = sphi 0, %s35
      %s53 = sphi 0, %s53
      %s55 = sphi 0, %s53
      %s56 = sphi 0, %s55
      %s70 = sphi 0, %s56
      %s74 = sphi 0, %s74
      %s76 = sphi 0, %s74
      %s77 = sphi 0, %s76
      %s91 = sphi 0, %s77
      %s95 = sphi 0, %s95
      %s97 = sphi 0, %s95
      %s98 = sphi 0, %s97
      %s112 = sphi 0, %s98
      %s116 = sphi 0, %s116
      %s118 = sphi 0, %s116
      %s119 = sphi 0, %s118
      %s133 = sphi 0, %s119
      %s139 = sphi 0, %s141
      %s142 = sphi 0, %s139
      %s143 = sphi 0, %s142
      %s159 = sphi 0, %s143
      %s165 = sphi 0, %s167
      %s168 = sphi 0, %s165
      %s169 = sphi 0, %s168
      %s185 = sphi 0, %s169
      %s191 = sphi 0, %s193
      %s194 = sphi 0, %s191
      %s195 = sphi 0, %s194
      %s211 = sphi 0, %s195
      %s217 = sphi 0, %s219
      %s220 = sphi 0, %s217
      %s221 = sphi 0, %s220
      %s237 = sphi 0, %s221
      %s243 = sphi 0, %s245
      %s246 = sphi 0, %s243
      %s247 = sphi 0, %s246
      %s263 = sphi 0, %s247
      %s269 = sphi 0, %s271
      %s272 = sphi 0, %s269
      %s273 = sphi 0, %s272
      %s289 = sphi 0, %s273
      %s293 = sphi 0, %s293
      %s295 = sphi 0, %s293
      %s296 = sphi 0, %s295
      %s310 = sphi 0, %s296
    $region4: #{clip_caption_forward.2} parent=1 // loop_header_branch
      %27 = sbr.rel (%p25) target = $region8
    $region5: #{clip_caption_forward.2} parent=1 // loop_body
      %s29 = ssub.s32 %s24, 1
      %s30 = ssub.s32 %s24, 2
      %s31 = sadd.s32 %s24, 1
      %s33 = sadd.s32 %s32, 1
      %p36 = scmp.eq.s32.totalorder %s24, 1
      %p37 = scmp.ne.s32.totalorder %s32, %s34
      %p38 = scmp.eq.s32.totalorder %s24, 0
      %p39 = por %p37, %p38
      %p40 = scmp.ne.s32.totalorder %s32, %s34
      %p41 = scmp.eq.s32.totalorder %s29, 1
      %p42 = por %p40, %p41
      %p43 = scmp.ne.s32.totalorder %s34, %s35
      %p44 = scmp.eq.s32.totalorder %s29, 0
      %p45 = por %p43, %p44
      %p46 = scmp.ne.s32.totalorder %s34, %s35
      %p47 = scmp.eq.s32.totalorder %s30, 1
      %p48 = por %p46, %p47
      %p50 = scmp.ne.s32.totalorder %s35, %s49
      %p51 = scmp.eq.s32.totalorder %s30, 0
      %p52 = por %p50, %p51
      %s54 = sadd.s32 %s53, 1
      %p57 = scmp.eq.s32.totalorder %s24, 1
      %p58 = scmp.ne.s32.totalorder %s53, %s55
      %p59 = scmp.eq.s32.totalorder %s24, 0
      %p60 = por %p58, %p59
      %p61 = scmp.ne.s32.totalorder %s53, %s55
      %p62 = scmp.eq.s32.totalorder %s29, 1
      %p63 = por %p61, %p62
      %p64 = scmp.ne.s32.totalorder %s55, %s56
      %p65 = scmp.eq.s32.totalorder %s29, 0
      %p66 = por %p64, %p65
      %p67 = scmp.ne.s32.totalorder %s55, %s56
      %p68 = scmp.eq.s32.totalorder %s30, 1
      %p69 = por %p67, %p68
      %p71 = scmp.ne.s32.totalorder %s56, %s70
      %p72 = scmp.eq.s32.totalorder %s30, 0
      %p73 = por %p71, %p72
      %s75 = sadd.s32 %s74, 1
      %p78 = scmp.eq.s32.totalorder %s24, 1
      %p79 = scmp.ne.s32.totalorder %s74, %s76
      %p80 = scmp.eq.s32.totalorder %s24, 0
      %p81 = por %p79, %p80
      %p82 = scmp.ne.s32.totalorder %s74, %s76
      %p83 = scmp.eq.s32.totalorder %s29, 1
      %p84 = por %p82, %p83
      %p85 = scmp.ne.s32.totalorder %s76, %s77
      %p86 = scmp.eq.s32.totalorder %s29, 0
      %p87 = por %p85, %p86
      %p88 = scmp.ne.s32.totalorder %s76, %s77
      %p89 = scmp.eq.s32.totalorder %s30, 1
      %p90 = por %p88, %p89
      %p92 = scmp.ne.s32.totalorder %s77, %s91
      %p93 = scmp.eq.s32.totalorder %s30, 0
      %p94 = por %p92, %p93
      %s96 = sadd.s32 %s95, 1
      %p99 = scmp.eq.s32.totalorder %s24, 1
      %p100 = scmp.ne.s32.totalorder %s95, %s97
      %p101 = scmp.eq.s32.totalorder %s24, 0
      %p102 = por %p100, %p101
      %p103 = scmp.ne.s32.totalorder %s95, %s97
      %p104 = scmp.eq.s32.totalorder %s29, 1
      %p105 = por %p103, %p104
      %p106 = scmp.ne.s32.totalorder %s97, %s98
      %p107 = scmp.eq.s32.totalorder %s29, 0
      %p108 = por %p106, %p107
      %p109 = scmp.ne.s32.totalorder %s97, %s98
      %p110 = scmp.eq.s32.totalorder %s30, 1
      %p111 = por %p109, %p110
      %p113 = scmp.ne.s32.totalorder %s98, %s112
      %p114 = scmp.eq.s32.totalorder %s30, 0
      %p115 = por %p113, %p114
      %s117 = sadd.s32 %s116, 1
      %p120 = scmp.eq.s32.totalorder %s24, 1
      %p121 = scmp.ne.s32.totalorder %s116, %s118
      %p122 = scmp.eq.s32.totalorder %s24, 0
      %p123 = por %p121, %p122
      %p124 = scmp.ne.s32.totalorder %s116, %s118
      %p125 = scmp.eq.s32.totalorder %s29, 1
      %p126 = por %p124, %p125
      %p127 = scmp.ne.s32.totalorder %s118, %s119
      %p128 = scmp.eq.s32.totalorder %s29, 0
      %p129 = por %p127, %p128
      %p130 = scmp.ne.s32.totalorder %s118, %s119
      %p131 = scmp.eq.s32.totalorder %s30, 1
      %p132 = por %p130, %p131
      %p134 = scmp.ne.s32.totalorder %s119, %s133
      %p135 = scmp.eq.s32.totalorder %s30, 0
      %p136 = por %p134, %p135
      %s137 = ssub.s32 %s24, %s31
      %p138 = scmp.eq.s32.totalorder %s137, 0
      %s140 = sadd.s32 %s139, 1
      %s141 = scalar_select %p138, %s139, %s140
      %p144 = pneg %p138
      %p145 = scmp.eq.s32.totalorder %s24, 1
      %p146 = por %p144, %p145
      %p147 = scmp.ne.s32.totalorder %s139, %s142
      %p148 = scmp.eq.s32.totalorder %s24, 0
      %p149 = por %p147, %p148
      %p150 = scmp.ne.s32.totalorder %s139, %s142
      %p151 = scmp.eq.s32.totalorder %s29, 1
      %p152 = por %p150, %p151
      %p153 = scmp.ne.s32.totalorder %s142, %s143
      %p154 = scmp.eq.s32.totalorder %s29, 0
      %p155 = por %p153, %p154
      %p156 = scmp.ne.s32.totalorder %s142, %s143
      %p157 = scmp.eq.s32.totalorder %s30, 1
      %p158 = por %p156, %p157
      %p160 = scmp.ne.s32.totalorder %s143, %s159
      %p161 = scmp.eq.s32.totalorder %s30, 0
      %p162 = por %p160, %p161
      %s163 = ssub.s32 %s24, %s31
      %p164 = scmp.eq.s32.totalorder %s163, 0
      %s166 = sadd.s32 %s165, 1
      %s167 = scalar_select %p164, %s165, %s166
      %p170 = pneg %p164
      %p171 = scmp.eq.s32.totalorder %s24, 1
      %p172 = por %p170, %p171
      %p173 = scmp.ne.s32.totalorder %s165, %s168
      %p174 = scmp.eq.s32.totalorder %s24, 0
      %p175 = por %p173, %p174
      %p176 = scmp.ne.s32.totalorder %s165, %s168
      %p177 = scmp.eq.s32.totalorder %s29, 1
      %p178 = por %p176, %p177
      %p179 = scmp.ne.s32.totalorder %s168, %s169
      %p180 = scmp.eq.s32.totalorder %s29, 0
      %p181 = por %p179, %p180
      %p182 = scmp.ne.s32.totalorder %s168, %s169
      %p183 = scmp.eq.s32.totalorder %s30, 1
      %p184 = por %p182, %p183
      %p186 = scmp.ne.s32.totalorder %s169, %s185
      %p187 = scmp.eq.s32.totalorder %s30, 0
      %p188 = por %p186, %p187
      %s189 = ssub.s32 %s24, %s31
      %p190 = scmp.eq.s32.totalorder %s189, 0
      %s192 = sadd.s32 %s191, 1
      %s193 = scalar_select %p190, %s191, %s192
      %p196 = pneg %p190
      %p197 = scmp.eq.s32.totalorder %s24, 1
      %p198 = por %p196, %p197
      %p199 = scmp.ne.s32.totalorder %s191, %s194
      %p200 = scmp.eq.s32.totalorder %s24, 0
      %p201 = por %p199, %p200
      %p202 = scmp.ne.s32.totalorder %s191, %s194
      %p203 = scmp.eq.s32.totalorder %s29, 1
      %p204 = por %p202, %p203
      %p205 = scmp.ne.s32.totalorder %s194, %s195
      %p206 = scmp.eq.s32.totalorder %s29, 0
      %p207 = por %p205, %p206
      %p208 = scmp.ne.s32.totalorder %s194, %s195
      %p209 = scmp.eq.s32.totalorder %s30, 1
      %p210 = por %p208, %p209
      %p212 = scmp.ne.s32.totalorder %s195, %s211
      %p213 = scmp.eq.s32.totalorder %s30, 0
      %p214 = por %p212, %p213
      %s215 = ssub.s32 %s24, %s31
      %p216 = scmp.eq.s32.totalorder %s215, 0
      %s218 = sadd.s32 %s217, 1
      %s219 = scalar_select %p216, %s217, %s218
      %p222 = pneg %p216
      %p223 = scmp.eq.s32.totalorder %s24, 1
      %p224 = por %p222, %p223
      %p225 = scmp.ne.s32.totalorder %s217, %s220
      %p226 = scmp.eq.s32.totalorder %s24, 0
      %p227 = por %p225, %p226
      %p228 = scmp.ne.s32.totalorder %s217, %s220
      %p229 = scmp.eq.s32.totalorder %s29, 1
      %p230 = por %p228, %p229
      %p231 = scmp.ne.s32.totalorder %s220, %s221
      %p232 = scmp.eq.s32.totalorder %s29, 0
      %p233 = por %p231, %p232
      %p234 = scmp.ne.s32.totalorder %s220, %s221
      %p235 = scmp.eq.s32.totalorder %s30, 1
      %p236 = por %p234, %p235
      %p238 = scmp.ne.s32.totalorder %s221, %s237
      %p239 = scmp.eq.s32.totalorder %s30, 0
      %p240 = por %p238, %p239
      %s241 = ssub.s32 %s24, %s31
      %p242 = scmp.eq.s32.totalorder %s241, 0
      %s244 = sadd.s32 %s243, 1
      %s245 = scalar_select %p242, %s243, %s244
      %p248 = pneg %p242
      %p249 = scmp.eq.s32.totalorder %s24, 1
      %p250 = por %p248, %p249
      %p251 = scmp.ne.s32.totalorder %s243, %s246
      %p252 = scmp.eq.s32.totalorder %s24, 0
      %p253 = por %p251, %p252
      %p254 = scmp.ne.s32.totalorder %s243, %s246
      %p255 = scmp.eq.s32.totalorder %s29, 1
      %p256 = por %p254, %p255
      %p257 = scmp.ne.s32.totalorder %s246, %s247
      %p258 = scmp.eq.s32.totalorder %s29, 0
      %p259 = por %p257, %p258
      %p260 = scmp.ne.s32.totalorder %s246, %s247
      %p261 = scmp.eq.s32.totalorder %s30, 1
      %p262 = por %p260, %p261
      %p264 = scmp.ne.s32.totalorder %s247, %s263
      %p265 = scmp.eq.s32.totalorder %s30, 0
      %p266 = por %p264, %p265
      %s267 = ssub.s32 %s24, %s31
      %p268 = scmp.eq.s32.totalorder %s267, 0
      %s270 = sadd.s32 %s269, 1
      %s271 = scalar_select %p268, %s269, %s270
      %p274 = pneg %p268
      %p275 = scmp.eq.s32.totalorder %s24, 1
      %p276 = por %p274, %p275
      %p277 = scmp.ne.s32.totalorder %s269, %s272
      %p278 = scmp.eq.s32.totalorder %s24, 0
      %p279 = por %p277, %p278
      %p280 = scmp.ne.s32.totalorder %s269, %s272
      %p281 = scmp.eq.s32.totalorder %s29, 1
      %p282 = por %p280, %p281
      %p283 = scmp.ne.s32.totalorder %s272, %s273
      %p284 = scmp.eq.s32.totalorder %s29, 0
      %p285 = por %p283, %p284
      %p286 = scmp.ne.s32.totalorder %s272, %s273
      %p287 = scmp.eq.s32.totalorder %s30, 1
      %p288 = por %p286, %p287
      %p290 = scmp.ne.s32.totalorder %s273, %s289
      %p291 = scmp.eq.s32.totalorder %s30, 0
      %p292 = por %p290, %p291
      %s294 = sadd.s32 %s293, 1
      %p297 = scmp.eq.s32.totalorder %s24, 1
      %p298 = scmp.ne.s32.totalorder %s293, %s295
      %p299 = scmp.eq.s32.totalorder %s24, 0
      %p300 = por %p298, %p299
      %p301 = scmp.ne.s32.totalorder %s293, %s295
      %p302 = scmp.eq.s32.totalorder %s29, 1
      %p303 = por %p301, %p302
      %p304 = scmp.ne.s32.totalorder %s295, %s296
      %p305 = scmp.eq.s32.totalorder %s29, 0
      %p306 = por %p304, %p305
      %p307 = scmp.ne.s32.totalorder %s295, %s296
      %p308 = scmp.eq.s32.totalorder %s30, 1
      %p309 = por %p307, %p308
      %p311 = scmp.ne.s32.totalorder %s296, %s310
      %p312 = scmp.eq.s32.totalorder %s30, 0
      %p313 = por %p311, %p312
      %p314 = scmp.le.s32.totalorder 1, %s24
      %p315 = scmp.lt.s32.totalorder %s24, 3
      %p316 = pnand %p314, %p315
      %p317 = pneg %p316
      // Predicated region
      $region9: #{clip_caption_forward.2} parent=5 // pred_check
        _
      $region10: #{clip_caption_forward.2} parent=5 // pred_check_branch
        %319 = sbr.rel (%p316) target = $region12
      $region11: #{clip_caption_forward.2} parent=5 // pred_region
        %s320 = ssub.s32 %s24, 1
        // Predicated region
        $region13: #{clip_caption_forward.2} parent=11 // pred_check
          %p321 = pneg %p45
        $region14: #{clip_caption_forward.2} parent=11 // pred_check_branch
          %323 = sbr.rel (%p321) target = $region16
        $region15: #{clip_caption_forward.2} parent=11 // pred_region
          _
        $region16: #{clip_caption_forward.2} parent=11 // pred_fallthru
          _
        // Predicated region
        $region17: #{clip_caption_forward.2} parent=11 // pred_check
          %p324 = pneg %p66
        $region18: #{clip_caption_forward.2} parent=11 // pred_check_branch
          %326 = sbr.rel (%p324) target = $region20
        $region19: #{clip_caption_forward.2} parent=11 // pred_region
          _
        $region20: #{clip_caption_forward.2} parent=11 // pred_fallthru
          _
        // Predicated region
        $region21: #{clip_caption_forward.2} parent=11 // pred_check
          %p327 = pneg %p87
        $region22: #{clip_caption_forward.2} parent=11 // pred_check_branch
          %329 = sbr.rel (%p327) target = $region24
        $region23: #{clip_caption_forward.2} parent=11 // pred_region
          %s331 = ssub.s32 32, 32
          %332 = vsyncadd [#allocation4], %s331
          %s334 = sshll.u32 [#allocation3], 4
          %s335 = int_to_ptr.vmem [resolvable:$true] %s334
          %337 = dma.hbm_to_vmem [thread:$0]  %s2, 32, %s335, [#allocation4]
        $region24: #{clip_caption_forward.2} parent=11 // pred_fallthru
          _
        // Predicated region
        $region25: #{clip_caption_forward.2} parent=11 // pred_check
          %p338 = pneg %p108
        $region26: #{clip_caption_forward.2} parent=11 // pred_check_branch
          %340 = sbr.rel (%p338) target = $region28
        $region27: #{clip_caption_forward.2} parent=11 // pred_region
          _
        $region28: #{clip_caption_forward.2} parent=11 // pred_fallthru
          _
        // Predicated region
        $region29: #{clip_caption_forward.2} parent=11 // pred_check
          %p341 = pneg %p129
        $region30: #{clip_caption_forward.2} parent=11 // pred_check_branch
          %343 = sbr.rel (%p341) target = $region32
        $region31: #{clip_caption_forward.2} parent=11 // pred_region
          _
        $region32: #{clip_caption_forward.2} parent=11 // pred_fallthru
          _
      $region12: #{clip_caption_forward.2} parent=5 // pred_fallthru
        _
      %p344 = scmp.lt.s32.totalorder %s24, 2
      // Predicated region
      $region33: #{clip_caption_forward.2} parent=5 // pred_check
        %p345 = pneg %p344
      $region34: #{clip_caption_forward.2} parent=5 // pred_check_branch
        %347 = sbr.rel (%p345) target = $region36
      $region35: #{clip_caption_forward.2} parent=5 // pred_region
        // Predicated region
        $region37: #{clip_caption_forward.2} parent=35 // pred_check
          %p348 = pneg %p149
        $region38: #{clip_caption_forward.2} parent=35 // pred_check_branch
          %350 = sbr.rel (%p348) target = $region40
        $region39: #{clip_caption_forward.2} parent=35 // pred_region
          %p351 = scmp.lt.s32.totalorder %s24, 1
          %s352 = scalar_select %p351, %s24, 1
          %s353 = smul.addr %s352, 16
          %s354 = smul.addr %s353, 4
          %s355 = scalar_lea.vmem %s5, %s354
        $region40: #{clip_caption_forward.2} parent=35 // pred_fallthru
          _
        // Predicated region
        $region41: #{clip_caption_forward.2} parent=35 // pred_check
          %p356 = pneg %p175
        $region42: #{clip_caption_forward.2} parent=35 // pred_check_branch
          %358 = sbr.rel (%p356) target = $region44
        $region43: #{clip_caption_forward.2} parent=35 // pred_region
          %s359 = sand.u32 %s24, 1
          %s360 = scalar_lea.sflag [#allocation6], %s359
          %s361 = sand.u32 %s165, 1
          %s362 = smul.addr %s361, 32
          %s363 = scalar_lea.vmem [#allocation5], %s362
          %s365 = ssub.s32 512, 512
          %366 = vsyncadd %s360, %s365
          %s367 = smul.addr %s24, 8
          %s368 = smul.addr %s367, 64
          %s369 = scalar_lea.hbm %s6, %s368
          %s370 = sshll.u32 %s363, 4
          %s371 = int_to_ptr.vmem [resolvable:$true] %s370
          %376 = dma.hbm_to_vmem [thread:$0]  %s369, 512, %s371, %s360, 64, 64, 4
        $region44: #{clip_caption_forward.2} parent=35 // pred_fallthru
          _
        // Predicated region
        $region45: #{clip_caption_forward.2} parent=35 // pred_check
          %p377 = pneg %p201
        $region46: #{clip_caption_forward.2} parent=35 // pred_check_branch
          %379 = sbr.rel (%p377) target = $region48
        $region47: #{clip_caption_forward.2} parent=35 // pred_region
          %p380 = scmp.lt.s32.totalorder %s24, 1
          %s381 = scalar_select %p380, %s24, 1
          %s382 = smul.addr %s381, 8
          %s383 = scalar_lea.vmem %s7, %s382
        $region48: #{clip_caption_forward.2} parent=35 // pred_fallthru
          _
        // Predicated region
        $region49: #{clip_caption_forward.2} parent=35 // pred_check
          %p384 = pneg %p227
        $region50: #{clip_caption_forward.2} parent=35 // pred_check_branch
          %386 = sbr.rel (%p384) target = $region52
        $region51: #{clip_caption_forward.2} parent=35 // pred_region
          %s387 = sand.u32 %s24, 1
          %s388 = scalar_lea.sflag [#allocation6], %s387
          %s389 = sand.u32 %s217, 1
          %s390 = smul.addr %s389, 32
          %s391 = scalar_lea.vmem [#allocation7], %s390
          %s393 = ssub.s32 512, 512
          %394 = vsyncadd %s388, %s393
          %s395 = smul.addr %s24, 8
          %s396 = smul.addr %s395, 64
          %s397 = scalar_lea.hbm %s8, %s396
          %s398 = sshll.u32 %s391, 4
          %s399 = int_to_ptr.vmem [resolvable:$true] %s398
          %404 = dma.hbm_to_vmem [thread:$0]  %s397, 512, %s399, %s388, 64, 64, 4
        $region52: #{clip_caption_forward.2} parent=35 // pred_fallthru
          _
        // Predicated region
        $region53: #{clip_caption_forward.2} parent=35 // pred_check
          %p405 = pneg %p253
        $region54: #{clip_caption_forward.2} parent=35 // pred_check_branch
          %407 = sbr.rel (%p405) target = $region56
        $region55: #{clip_caption_forward.2} parent=35 // pred_region
          %s408 = sand.u32 %s243, 1
          %s409 = scalar_lea.sflag [#allocation9], %s408
          %s410 = sand.u32 %s243, 1
          %s411 = scalar_lea.vmem [#allocation8], %s410
          %s413 = ssub.s32 16, 16
          %414 = vsyncadd %s409, %s413
          %s415 = smul.addr %s24, 16
          %s416 = scalar_lea.hbm %s9, %s415
          %s418 = sshll.u32 %s411, 4
          %s419 = int_to_ptr.vmem [resolvable:$true] %s418
          %421 = dma.hbm_to_vmem [thread:$0]  %s416, 16, %s419, %s409
        $region56: #{clip_caption_forward.2} parent=35 // pred_fallthru
          _
        // Predicated region
        $region57: #{clip_caption_forward.2} parent=35 // pred_check
          %p422 = pneg %p279
        $region58: #{clip_caption_forward.2} parent=35 // pred_check_branch
          %424 = sbr.rel (%p422) target = $region60
        $region59: #{clip_caption_forward.2} parent=35 // pred_region
          %p425 = scmp.lt.s32.totalorder %s24, 1
          %s426 = scalar_select %p425, %s24, 1
          %s427 = smul.addr %s426, 16
          %s428 = smul.addr %s427, 4
          %s429 = scalar_lea.vmem %s10, %s428
        $region60: #{clip_caption_forward.2} parent=35 // pred_fallthru
          _
      $region36: #{clip_caption_forward.2} parent=5 // pred_fallthru
        _
      %p430 = scmp.le.s32.totalorder 1, %s24
      %p431 = scmp.lt.s32.totalorder %s24, 3
      %p432 = pnand %p430, %p431
      %p433 = pneg %p432
      // Predicated region
      $region61: #{clip_caption_forward.2} parent=5 // pred_check
        _
      $region62: #{clip_caption_forward.2} parent=5 // pred_check_branch
        %435 = sbr.rel (%p432) target = $region64
      $region63: #{clip_caption_forward.2} parent=5 // pred_region
        %s436 = ssub.s32 %s24, 1
        // Predicated region
        $region65: #{clip_caption_forward.2} parent=63 // pred_check
          %p437 = pneg %p87
        $region66: #{clip_caption_forward.2} parent=63 // pred_check_branch
          %439 = sbr.rel (%p437) target = $region68
        $region67: #{clip_caption_forward.2} parent=63 // pred_region
          %440 = dma.done [#allocation4], 32
        $region68: #{clip_caption_forward.2} parent=63 // pred_fallthru
          _
        %s441 = sand.u32 %s29, 1
        %s442 = scalar_lea.sflag [#allocation6], %s441
        %s443 = sand.u32 %s168, 1
        %s444 = smul.addr %s443, 32
        %s445 = scalar_lea.vmem [#allocation5], %s444
        // Predicated region
        $region69: #{clip_caption_forward.2} parent=63 // pred_check
          %p446 = pneg %p181
        $region70: #{clip_caption_forward.2} parent=63 // pred_check_branch
          %448 = sbr.rel (%p446) target = $region72
        $region71: #{clip_caption_forward.2} parent=63 // pred_region
          %449 = dma.done %s442, 512
        $region72: #{clip_caption_forward.2} parent=63 // pred_fallthru
          _
        %s450 = sand.u32 %s29, 1
        %s451 = scalar_lea.sflag [#allocation6], %s450
        %s452 = sand.u32 %s220, 1
        %s453 = smul.addr %s452, 32
        %s454 = scalar_lea.vmem [#allocation7], %s453
        // Predicated region
        $region73: #{clip_caption_forward.2} parent=63 // pred_check
          %p455 = pneg %p233
        $region74: #{clip_caption_forward.2} parent=63 // pred_check_branch
          %457 = sbr.rel (%p455) target = $region76
        $region75: #{clip_caption_forward.2} parent=63 // pred_region
          %458 = dma.done %s451, 512
        $region76: #{clip_caption_forward.2} parent=63 // pred_fallthru
          _
        %s459 = sand.u32 %s246, 1
        %s460 = scalar_lea.sflag [#allocation9], %s459
        %s461 = sand.u32 %s246, 1
        %s462 = scalar_lea.vmem [#allocation8], %s461
        // Predicated region
        $region77: #{clip_caption_forward.2} parent=63 // pred_check
          %p463 = pneg %p259
        $region78: #{clip_caption_forward.2} parent=63 // pred_check_branch
          %465 = sbr.rel (%p463) target = $region80
        $region79: #{clip_caption_forward.2} parent=63 // pred_region
          %466 = dma.done %s460, 16
        $region80: #{clip_caption_forward.2} parent=63 // pred_fallthru
          _
        %p467 = pneg %p45
        %p468 = pneg %p42
        %p469 = pneg %p66
        %p470 = pneg %p63
        %p471 = pneg %p87
        %p472 = pneg %p84
        %p473 = pneg %p108
        %p474 = pneg %p105
        %p475 = pneg %p129
        %p476 = pneg %p126
        %p477 = scmp.lt.s32.totalorder %s29, 1
        %s478 = scalar_select %p477, %s29, 1
        %s479 = smul.addr %s478, 16
        %s480 = smul.addr %s479, 4
        %s481 = scalar_lea.vmem %s5, %s480
        %p482 = pneg %p155
        %p483 = pneg %p152
        %s484 = sand.u32 %s29, 1
        %s485 = scalar_lea.sflag [#allocation6], %s484
        %s486 = sand.u32 %s168, 1
        %s487 = smul.addr %s486, 32
        %s488 = scalar_lea.vmem [#allocation5], %s487
        %p489 = pneg %p181
        %p490 = pneg %p178
        %p491 = scmp.lt.s32.totalorder %s29, 1
        %s492 = scalar_select %p491, %s29, 1
        %s493 = smul.addr %s492, 8
        %s494 = scalar_lea.vmem %s7, %s493
        %p495 = pneg %p207
        %p496 = pneg %p204
        %s497 = sand.u32 %s29, 1
        %s498 = scalar_lea.sflag [#allocation6], %s497
        %s499 = sand.u32 %s220, 1
        %s500 = smul.addr %s499, 32
        %s501 = scalar_lea.vmem [#allocation7], %s500
        %p502 = pneg %p233
        %p503 = pneg %p230
        %s504 = sand.u32 %s246, 1
        %s505 = scalar_lea.sflag [#allocation9], %s504
        %s506 = sand.u32 %s246, 1
        %s507 = scalar_lea.vmem [#allocation8], %s506
        %p508 = pneg %p259
        %p509 = pneg %p256
        %p510 = scmp.lt.s32.totalorder %s29, 1
        %s511 = scalar_select %p510, %s29, 1
        %s512 = smul.addr %s511, 16
        %s513 = smul.addr %s512, 4
        %s514 = scalar_lea.vmem %s10, %s513
        %p515 = pneg %p285
        %p516 = pneg %p282
        %p517 = pneg %p306
        %p518 = pneg %p303
        %p519 = scmp.lt.s32.totalorder %s29, 1
        %s520 = scalar_select %p519, %s29, 1
        %s521 = smul.addr %s520, 16
        %s522 = smul.addr %s521, 4
        %s523 = scalar_lea.vmem %s5, %s522
        %p524 = scmp.lt.s32.totalorder %s29, 1
        %s525 = scalar_select %p524, %s29, 1
        %s526 = smul.addr %s525, 8
        %s527 = scalar_lea.vmem %s7, %s526
        %p528 = scmp.lt.s32.totalorder %s29, 1
        %s529 = scalar_select %p528, %s29, 1
        %s530 = smul.addr %s529, 16
        %s531 = smul.addr %s530, 4
        %s532 = scalar_lea.vmem %s10, %s531
        %p534 = scmp.eq.s32.totalorder %s29, 0
        // Predicated region
        $region81: #{clip_caption_forward.2} parent=63 // pred_check
          %p535 = pneg %p534
        $region82: #{clip_caption_forward.2} parent=63 // pred_check_branch
          %537 = sbr.rel (%p535) target = $region84
        $region83: #{clip_caption_forward.2} parent=63 // pred_region
          %v538 = vld [vmem:[%s0] sm:$0x3]
          %v539 = vpack.c.bf16 %v538, %v538
          %v540 = vld [vmem:[%s1] sm:$0xff]
          %v541 = vld [vmem:[%s1 + $0x8] sm:$0xff]
          %v542 = vld [vmem:[%s1 + $0x10] sm:$0xff]
          %v543 = vld [vmem:[%s1 + $0x18] sm:$0xff]
          %v544 = vld [vmem:[%s1 + $0x20] sm:$0xff]
          %v545 = vld [vmem:[%s1 + $0x28] sm:$0xff]
          %v546 = vld [vmem:[%s1 + $0x30] sm:$0xff]
          %v547 = vld [vmem:[%s1 + $0x38] sm:$0xff]
          %v548 = vld [vmem:[#allocation3] sm:$0x3]
          %v550 = vlaneseq
          %v551 = vshrl.u32 %v550, 7
          %v552 = vsub.s32 0, %v551
          %v553 = vrot.slane %v548, %v552
          %v554 = vlaneseq
          %v555 = vshrl.u32 %v554, 7
          %v556 = vsub.s32 1, %v555
          %v557 = vrot.slane %v548, %v556
          %v568 = vunpack.c.l.b16 %v540
          %v569 = vunpack.c.h.b16 %v540
          %v570 = vunpack.c.l.b16 %v541
          %v571 = vunpack.c.h.b16 %v541
          %v572 = vunpack.c.l.b16 %v542
          %v573 = vunpack.c.h.b16 %v542
          %v574 = vunpack.c.l.b16 %v543
          %v575 = vunpack.c.h.b16 %v543
          %v576 = vunpack.c.l.b16 %v544
          %v577 = vunpack.c.h.b16 %v544
          %v578 = vunpack.c.l.b16 %v545
          %v579 = vunpack.c.h.b16 %v545
          %v580 = vunpack.c.l.b16 %v546
          %v581 = vunpack.c.h.b16 %v546
          %v582 = vunpack.c.l.b16 %v547
          %v583 = vunpack.c.h.b16 %v547
          %v584 = vpack.c.b16 %v570, %v568
          %v585 = vpack.c.b16 %v571, %v569
          %v586 = vpack.c.b16 %v574, %v572
          %v587 = vpack.c.b16 %v575, %v573
          %v588 = vpack.c.b16 %v578, %v576
          %v589 = vpack.c.b16 %v579, %v577
          %v590 = vpack.c.b16 %v582, %v580
          %v591 = vpack.c.b16 %v583, %v581
          %vm600 = vcmask 523264
          %v602 = vsel %vm600, %v539, 0
          %604 = vmatprep.subr.bf16.mxu0 %v585
          %605 = vmatpush1.bf16.msra.mxu0 %v584
          %606 = vmatprep.subr.bf16.mxu0 %v587
          %607 = vmatpush1.bf16.msra.mxu0 %v586
          %608 = vmatprep.subr.bf16.mxu0 %v589
          %609 = vmatpush1.bf16.msra.mxu0 %v588
          %610 = vmatprep.subr.bf16.mxu0 %v591
          %611 = vmatpush1.bf16.msra.mxu0 %v590
          %612 = vmatprep.subr.bf16.mxu0 0
          %613 = vmatpush1.bf16.msra.mxu0 0
          %614 = vmatprep.subr.bf16.mxu0 0
          %615 = vmatpush1.bf16.msra.mxu0 0
          %616 = vmatprep.subr.bf16.mxu0 0
          %617 = vmatpush1.bf16.msra.mxu0 0
          %618 = vmatprep.subr.bf16.mxu0 0
          %619 = vmatpush1.bf16.msra.mxu0 0
          %620 = vmatprep.subr.bf16.mxu0 0
          %621 = vmatpush1.bf16.msra.mxu0 0
          %622 = vmatprep.subr.bf16.mxu0 0
          %623 = vmatpush1.bf16.msra.mxu0 0
          %624 = vmatprep.subr.bf16.mxu0 0
          %625 = vmatpush1.bf16.msra.mxu0 0
          %626 = vmatprep.subr.bf16.mxu0 0
          %627 = vmatpush1.bf16.msra.mxu0 0
          %628 = vmatprep.subr.bf16.mxu0 0
          %629 = vmatpush1.bf16.msra.mxu0 0
          %630 = vmatprep.subr.bf16.mxu0 0
          %631 = vmatpush1.bf16.msra.mxu0 0
          %632 = vmatprep.subr.bf16.mxu0 0
          %633 = vmatpush1.bf16.msra.mxu0 0
          %634 = vmatprep.subr.bf16.mxu0 0
          %635 = vmatpush1.bf16.msra.mxu0 0
          %636 = vmatprep.mubr.bf16.mxu0 0
          %637 = vmatmul.mubr.bf16.gmra.mrb[0].mxu0 %v602
          %v638 = vpop.f32.mrb[0].mxu0
          %v639 = vadd.f32 %v553, %v638
          %v640 = vpop.f32.mrb[0].mxu0
          %v641 = vadd.f32 %v557, %v640
          %v642 = vpop.f32.mrb[0].mxu0
          %v643 = vpop.f32.mrb[0].mxu0
          %644 = vdwg.mxu0
          %v645 = vld [vmem:[%s3] sm:$0xf]
          %v646 = vlaneseq
          %v647 = vshrl.u32 %v646, 7
          %v648 = vsub.s32 0, %v647
          %v649 = vrot.slane %v645, %v648
          %v650 = vlaneseq
          %v651 = vshrl.u32 %v650, 7
          %v652 = vsub.s32 1, %v651
          %v653 = vrot.slane %v645, %v652
          %v654 = vlaneseq
          %v655 = vshrl.u32 %v654, 7
          %v656 = vsub.s32 2, %v655
          %v657 = vrot.slane %v645, %v656
          %v658 = vlaneseq
          %v659 = vshrl.u32 %v658, 7
          %v660 = vsub.s32 3, %v659
          %v661 = vrot.slane %v645, %v660
          %v663 = vrot.slane %v639, 6
          %664 = vrot.lane.b32.xlu0 %v663, 64
          %v665 = vpop.permute.xlu0 %664
          %v668 = vrot.slane %v641, 4
          %v670 = vrot.slane %v641, 2
          %671 = vrot.lane.b32.xlu0 %v670, 64
          %v672 = vpop.permute.xlu0 %671
          %vm674 = vcmask 1041408
          %v675 = vsel %vm674, %v639, %v665
          %vm676 = vcmask 1043456
          %v677 = vsel %vm676, %v675, %v668
          %vm678 = vcmask 1045504
          %v679 = vsel %vm678, %v677, %v672
          %v680 = vsel %vm674, %v649, %v653
          %v681 = vsel %vm676, %v680, %v657
          %v682 = vsel %vm678, %v681, %v661
          %683 = vst.msk [vmem:[#allocation2] sm:$0xff] %vm600, %v679
          %684 = vst.msk [vmem:[#allocation2 + $0x8] sm:$0xff] %vm600, %v682
        $region84: #{clip_caption_forward.2} parent=63 // pred_fallthru
          _
        %v685 = vld [vmem:[#allocation2] sm:$0xff]
        %v686 = vld [vmem:[#allocation2 + $0x8] sm:$0xff]
        %v687 = vld [vmem:[%s4] sm:$0xff]
        %v688 = vld [vmem:[%s4 + $0x8] sm:$0xff]
        %v689 = vld [vmem:[%s4 + $0x10] sm:$0xff]
        %v690 = vld [vmem:[%s4 + $0x18] sm:$0xff]
        %v691 = vld [vmem:[%s4 + $0x20] sm:$0xff]
        %v692 = vld [vmem:[%s4 + $0x28] sm:$0xff]
        %v693 = vld [vmem:[%s4 + $0x30] sm:$0xff]
        %v694 = vld [vmem:[%s4 + $0x38] sm:$0xff]
        %v695 = vld [vmem:[%s4 + $0x40] sm:$0xff]
        %v696 = vld [vmem:[%s4 + $0x48] sm:$0xff]
        %v697 = vld [vmem:[%s4 + $0x50] sm:$0xff]
        %v698 = vld [vmem:[%s4 + $0x58] sm:$0xff]
        %v699 = vld [vmem:[%s4 + $0x60] sm:$0xff]
        %v700 = vld [vmem:[%s4 + $0x68] sm:$0xff]
        %v701 = vld [vmem:[%s4 + $0x70] sm:$0xff]
        %v702 = vld [vmem:[%s4 + $0x78] sm:$0xff]
        %v703 = vld [vmem:[%s523] sm:$0xff]
        %v704 = vld [vmem:[%s523 + $0x8] sm:$0xff]
        %v705 = vld [vmem:[%s523 + $0x10] sm:$0xff]
        %v706 = vld [vmem:[%s523 + $0x18] sm:$0xff]
        %v707 = vld [vmem:[%s523 + $0x20] sm:$0xff]
        %v708 = vld [vmem:[%s523 + $0x28] sm:$0xff]
        %v709 = vld [vmem:[%s523 + $0x30] sm:$0xff]
        %v710 = vld [vmem:[%s523 + $0x38] sm:$0xff]
        %v711 = vld [vmem:[%s445] sm:$0xf]
        %v712 = vld [vmem:[%s445 + $0x4] sm:$0xf]
        %v713 = vld [vmem:[%s445 + $0x8] sm:$0xf]
        %v714 = vld [vmem:[%s445 + $0xc] sm:$0xf]
        %v715 = vld [vmem:[%s445 + $0x10] sm:$0xf]
        %v716 = vld [vmem:[%s445 + $0x14] sm:$0xf]
        %v717 = vld [vmem:[%s445 + $0x18] sm:$0xf]
        %v718 = vld [vmem:[%s445 + $0x1c] sm:$0xf]
        %v719 = vld [vmem:[%s527] sm:$0x3f]
        %v720 = vld [vmem:[%s454] sm:$0xf]
        %v721 = vld [vmem:[%s454 + $0x4] sm:$0xf]
        %v722 = vld [vmem:[%s454 + $0x8] sm:$0xf]
        %v723 = vld [vmem:[%s454 + $0xc] sm:$0xf]
        %v724 = vld [vmem:[%s454 + $0x10] sm:$0xf]
        %v725 = vld [vmem:[%s454 + $0x14] sm:$0xf]
        %v726 = vld [vmem:[%s454 + $0x18] sm:$0xf]
        %v727 = vld [vmem:[%s454 + $0x1c] sm:$0xf]
        %v728 = vld [vmem:[%s462] sm:$0x1]
        %v729 = vld [vmem:[%s532] sm:$0xf]
        %v730 = vld [vmem:[%s532 + $0x4] sm:$0xf]
        %v731 = vld [vmem:[%s532 + $0x8] sm:$0xf]
        %v732 = vld [vmem:[%s532 + $0xc] sm:$0xf]
        %v733 = vld [vmem:[%s532 + $0x10] sm:$0xf]
        %v734 = vld [vmem:[%s532 + $0x14] sm:$0xf]
        %v735 = vld [vmem:[%s532 + $0x18] sm:$0xf]
        %v736 = vld [vmem:[%s532 + $0x1c] sm:$0xf]
        %v737 = vld [vmem:[%s532 + $0x20] sm:$0xf]
        %v738 = vld [vmem:[%s532 + $0x24] sm:$0xf]
        %v739 = vld [vmem:[%s532 + $0x28] sm:$0xf]
        %v740 = vld [vmem:[%s532 + $0x2c] sm:$0xf]
        %v741 = vld [vmem:[%s532 + $0x30] sm:$0xf]
        %v742 = vld [vmem:[%s532 + $0x34] sm:$0xf]
        %v743 = vld [vmem:[%s532 + $0x38] sm:$0xf]
        %v744 = vld [vmem:[%s532 + $0x3c] sm:$0xf]
        %vm745 = vcmask 523264
        %v746 = vsel %vm745, %v685, 0.0
        %747 = vadd.xlane.f32.xlu0 %v746
        %v748 = vpop.xlane.xlu0 %747
        %v749 = vsel %vm745, %v686, 0.0
        %750 = vadd.xlane.f32.xlu0 %v749
        %v751 = vpop.xlane.xlu0 %750
        %v752 = vrcp.pop 64.0
        %v753 = vmul.f32 %v748, %v752
        %v754 = vmul.f32 %v751, %v752
        %v755 = vsub.f32 %v685, %v753
        %v756 = vsub.f32 %v686, %v754
        %v757 = vmul.f32 %v755, %v755
        %v758 = vmul.f32 %v756, %v756
        %v759 = vsel %vm745, %v757, 0.0
        %760 = vadd.xlane.f32.xlu0 %v759
        %v761 = vpop.xlane.xlu0 %760
        %v762 = vsel %vm745, %v758, 0.0
        %763 = vadd.xlane.f32.xlu0 %v762
        %v764 = vpop.xlane.xlu0 %763
        %v765 = vmul.f32 %v761, %v752
        %v766 = vmul.f32 %v764, %v752
        %v767 = vadd.f32 %v765, 1e-05
        %v768 = vadd.f32 %v766, 1e-05
        %v769 = vrsqrt.pop %v767
        %v770 = vrsqrt.pop %v768
        %v771 = vmul.f32 %v755, %v769
        %v772 = vmul.f32 %v756, %v770
        %v773 = vlaneseq
        %v774 = vshrl.u32 %v773, 7
        %v775 = vsub.s32 0, %v774
        %v776 = vrot.slane %v719, %v775
        %v777 = vmul.f32 %v771, %v776
        %v778 = vmul.f32 %v772, %v776
        %v779 = vlaneseq
        %v780 = vshrl.u32 %v779, 7
        %v781 = vsub.s32 1, %v780
        %v782 = vrot.slane %v719, %v781
        %v783 = vadd.f32 %v777, %v782
        %v784 = vadd.f32 %v778, %v782
        %v785 = vpack.c.bf16 %v784, %v783
        %v794 = vunpack.c.l.b16 %v703
        %v795 = vunpack.c.h.b16 %v703
        %v796 = vunpack.c.l.b16 %v704
        %v797 = vunpack.c.h.b16 %v704
        %v798 = vunpack.c.l.b16 %v705
        %v799 = vunpack.c.h.b16 %v705
        %v800 = vunpack.c.l.b16 %v706
        %v801 = vunpack.c.h.b16 %v706
        %v802 = vunpack.c.l.b16 %v707
        %v803 = vunpack.c.h.b16 %v707
        %v804 = vunpack.c.l.b16 %v708
        %v805 = vunpack.c.h.b16 %v708
        %v806 = vunpack.c.l.b16 %v709
        %v807 = vunpack.c.h.b16 %v709
        %v808 = vunpack.c.l.b16 %v710
        %v809 = vunpack.c.h.b16 %v710
        %v810 = vpack.c.b16 %v796, %v794
        %v811 = vpack.c.b16 %v797, %v795
        %v812 = vpack.c.b16 %v800, %v798
        %v813 = vpack.c.b16 %v801, %v799
        %v814 = vpack.c.b16 %v804, %v802
        %v815 = vpack.c.b16 %v805, %v803
        %v816 = vpack.c.b16 %v808, %v806
        %v817 = vpack.c.b16 %v809, %v807
        %v827 = vsel %vm745, %v785, 0
        %829 = vmatprep.subr.bf16.mxu0 %v811
        %830 = vmatpush1.bf16.msra.mxu0 %v810
        %831 = vmatprep.subr.bf16.mxu0 %v813
        %832 = vmatpush1.bf16.msra.mxu0 %v812
        %833 = vmatprep.subr.bf16.mxu0 %v815
        %834 = vmatpush1.bf16.msra.mxu0 %v814
        %835 = vmatprep.subr.bf16.mxu0 %v817
        %836 = vmatpush1.bf16.msra.mxu0 %v816
        %837 = vmatprep.subr.bf16.mxu0 0
        %838 = vmatpush1.bf16.msra.mxu0 0
        %839 = vmatprep.subr.bf16.mxu0 0
        %840 = vmatpush1.bf16.msra.mxu0 0
        %841 = vmatprep.subr.bf16.mxu0 0
        %842 = vmatpush1.bf16.msra.mxu0 0
        %843 = vmatprep.subr.bf16.mxu0 0
        %844 = vmatpush1.bf16.msra.mxu0 0
        %845 = vmatprep.subr.bf16.mxu0 0
        %846 = vmatpush1.bf16.msra.mxu0 0
        %847 = vmatprep.subr.bf16.mxu0 0
        %848 = vmatpush1.bf16.msra.mxu0 0
        %849 = vmatprep.subr.bf16.mxu0 0
        %850 = vmatpush1.bf16.msra.mxu0 0
        %851 = vmatprep.subr.bf16.mxu0 0
        %852 = vmatpush1.bf16.msra.mxu0 0
        %853 = vmatprep.subr.bf16.mxu0 0
        %854 = vmatpush1.bf16.msra.mxu0 0
        %855 = vmatprep.subr.bf16.mxu0 0
        %856 = vmatpush1.bf16.msra.mxu0 0
        %857 = vmatprep.subr.bf16.mxu0 0
        %858 = vmatpush1.bf16.msra.mxu0 0
        %859 = vmatprep.subr.bf16.mxu0 0
        %860 = vmatpush1.bf16.msra.mxu0 0
        %861 = vmatprep.mubr.bf16.mxu0 0
        %862 = vmatmul.mubr.bf16.gmra.mrb[0].mxu0 %v827
        %v863 = vpop.f32.mrb[0].mxu0
        %v864 = vadd.f32 0.0, %v863
        %v865 = vpop.f32.mrb[0].mxu0
        %v866 = vadd.f32 0.0, %v865
        %v867 = vpop.f32.mrb[0].mxu0
        %v868 = vadd.f32 0.0, %v867
        %v869 = vpop.f32.mrb[0].mxu0
        %v870 = vadd.f32 0.0, %v869
        %871 = vdwg.mxu0
        %v872 = vmul.f32 %v864, 0.35355338
        %v873 = vmul.f32 %v868, 0.35355338
        %v874 = vlaneseq
        %v875 = vand.u32 %v874, 127
        %vm876 = vcmp.ge.s32.totalorder %v875, 0
        %vm877 = vcmp.lt.s32.totalorder %v875, 8
        %vm878 = vmand %vm876, %vm877
        %v879 = vsel %vm878, 1, 0
        %v880 = vcvt.s32.f32 %v879
        %vm881 = vcmp.ge.s32.totalorder %v875, 8
        %vm882 = vcmp.lt.s32.totalorder %v875, 16
        %vm883 = vmand %vm881, %vm882
        %v884 = vsel %vm883, 1, 0
        %v885 = vcvt.s32.f32 %v884
        %vm886 = vcmp.ge.s32.totalorder %v875, 16
        %vm887 = vcmp.lt.s32.totalorder %v875, 24
        %vm888 = vmand %vm886, %vm887
        %v889 = vsel %vm888, 1, 0
        %v890 = vcvt.s32.f32 %v889
        %vm891 = vcmp.ge.s32.totalorder %v875, 24
        %vm892 = vcmp.lt.s32.totalorder %v875, 32
        %vm893 = vmand %vm891, %vm892
        %v894 = vsel %vm893, 1, 0
        %v895 = vcvt.s32.f32 %v894
        %vm896 = vcmp.ge.s32.totalorder %v875, 32
        %vm897 = vcmp.lt.s32.totalorder %v875, 40
        %vm898 = vmand %vm896, %vm897
        %v899 = vsel %vm898, 1, 0
        %v900 = vcvt.s32.f32 %v899
        %vm901 = vcmp.ge.s32.totalorder %v875, 40
        %vm902 = vcmp.lt.s32.totalorder %v875, 48
        %vm903 = vmand %vm901, %vm902
        %v904 = vsel %vm903, 1, 0
        %v905 = vcvt.s32.f32 %v904
        %vm906 = vcmp.ge.s32.totalorder %v875, 48
        %vm907 = vcmp.lt.s32.totalorder %v875, 56
        %vm908 = vmand %vm906, %vm907
        %v909 = vsel %vm908, 1, 0
        %v910 = vcvt.s32.f32 %v909
        %vm911 = vcmp.ge.s32.totalorder %v875, 56
        %vm912 = vcmp.lt.s32.totalorder %v875, 64
        %vm913 = vmand %vm911, %vm912
        %v914 = vsel %vm913, 1, 0
        %v915 = vcvt.s32.f32 %v914
        %v916 = vmul.f32 %v872, %v880
        %v917 = vmul.f32 %v873, %v880
        %v918 = vmul.f32 %v872, %v885
        %v919 = vmul.f32 %v873, %v885
        %v920 = vmul.f32 %v872, %v890
        %v921 = vmul.f32 %v873, %v890
        %v922 = vmul.f32 %v872, %v895
        %v923 = vmul.f32 %v873, %v895
        %v924 = vmul.f32 %v872, %v900
        %v925 = vmul.f32 %v873, %v900
        %v926 = vmul.f32 %v872, %v905
        %v927 = vmul.f32 %v873, %v905
        %v928 = vmul.f32 %v872, %v910
        %v929 = vmul.f32 %v873, %v910
        %v930 = vmul.f32 %v872, %v915
        %v931 = vmul.f32 %v873, %v915
        %v932 = vpack.c.bf16 %v917, %v916
        %v933 = vpack.c.bf16 %v919, %v918
        %v934 = vpack.c.bf16 %v921, %v920
        %v935 = vpack.c.bf16 %v923, %v922
        %v936 = vpack.c.bf16 %v925, %v924
        %v937 = vpack.c.bf16 %v927, %v926
        %v938 = vpack.c.bf16 %v929, %v928
        %v939 = vpack.c.bf16 %v931, %v930
        %v940 = vpack.c.bf16 %v868, %v864
        %942 = vrot.lane.b32.xlu0 %v940, 64
        %v943 = vpop.permute.xlu0 %942
        %v945 = vsel %vm745, %v932, 0
        %v948 = vsel %vm745, %v933, 0
        %v951 = vsel %vm745, %v934, 0
        %v954 = vsel %vm745, %v935, 0
        %v957 = vsel %vm745, %v936, 0
        %v960 = vsel %vm745, %v937, 0
        %v963 = vsel %vm745, %v938, 0
        %v966 = vsel %vm745, %v939, 0
        %v969 = vsel %vm745, %v943, 0
        %971 = vmatprep.subr.bf16.mxu0 0
        %972 = vmatpush1.bf16.xpose.msra.mxu0 %v969
        %973 = vmatprep.subr.bf16.mxu0 0
        %974 = vmatpush1.bf16.xpose.msra.mxu0 0
        %975 = vmatprep.subr.bf16.mxu0 0
        %976 = vmatpush1.bf16.xpose.msra.mxu0 0
        %977 = vmatprep.subr.bf16.mxu0 0
        %978 = vmatpush1.bf16.xpose.msra.mxu0 0
        %979 = vmatprep.subr.bf16.mxu0 0
        %980 = vmatpush1.bf16.xpose.msra.mxu0 0
        %981 = vmatprep.subr.bf16.mxu0 0
        %982 = vmatpush1.bf16.xpose.msra.mxu0 0
        %983 = vmatprep.subr.bf16.mxu0 0
        %984 = vmatpush1.bf16.xpose.msra.mxu0 0
        %985 = vmatprep.subr.bf16.mxu0 0
        %986 = vmatpush1.bf16.xpose.msra.mxu0 0
        %987 = vmatprep.subr.bf16.mxu0 0
        %988 = vmatpush1.bf16.xpose.msra.mxu0 0
        %989 = vmatprep.subr.bf16.mxu0 0
        %990 = vmatpush1.bf16.xpose.msra.mxu0 0
        %991 = vmatprep.subr.bf16.mxu0 0
        %992 = vmatpush1.bf16.xpose.msra.mxu0 0
        %993 = vmatprep.subr.bf16.mxu0 0
        %994 = vmatpush1.bf16.xpose.msra.mxu0 0
        %995 = vmatprep.subr.bf16.mxu0 0
        %996 = vmatpush1.bf16.xpose.msra.mxu0 0
        %997 = vmatprep.subr.bf16.mxu0 0
        %998 = vmatpush1.bf16.xpose.msra.mxu0 0
        %999 = vmatprep.subr.bf16.mxu0 0
        %1000 = vmatpush1.bf16.xpose.msra.mxu0 0
        %1001 = vmatprep.subr.bf16.mxu0 0
        %1002 = vmatpush1.bf16.xpose.msra.mxu0 0
        %1003 = vmatprep.mubr.bf16.mxu0 0
        %1004 = vmatmul.mubr.bf16.gmra.mrb[0].mxu0 %v945
        %v1005 = vpop.f32.mrb[0].mxu0
        %v1006 = vadd.f32 %v687, %v1005
        %v1007 = vpop.f32.mrb[0].mxu0
        %v1008 = vpop.f32.mrb[0].mxu0
        %v1009 = vadd.f32 %v688, %v1008
        %v1010 = vpop.f32.mrb[0].mxu0
        %1011 = vmatprep.mubr.bf16.mxu0 0
        %1012 = vmatmul.mubr.bf16.gmra.mrb[0].mxu0 %v948
        %v1013 = vpop.f32.mrb[0].mxu0
        %v1014 = vadd.f32 %v689, %v1013
        %v1015 = vpop.f32.mrb[0].mxu0
        %v1016 = vpop.f32.mrb[0].mxu0
        %v1017 = vadd.f32 %v690, %v1016
        %v1018 = vpop.f32.mrb[0].mxu0
        %1019 = vmatprep.mubr.bf16.mxu0 0
        %1020 = vmatmul.mubr.bf16.gmra.mrb[0].mxu0 %v951
        %v1021 = vpop.f32.mrb[0].mxu0
        %v1022 = vadd.f32 %v691, %v1021
        %v1023 = vpop.f32.mrb[0].mxu0
        %v1024 = vpop.f32.mrb[0].mxu0
        %v1025 = vadd.f32 %v692, %v1024
        %v1026 = vpop.f32.mrb[0].mxu0
        %1027 = vmatprep.mubr.bf16.mxu0 0
        %1028 = vmatmul.mubr.bf16.gmra.mrb[0].mxu0 %v954
        %v1029 = vpop.f32.mrb[0].mxu0
        %v1030 = vadd.f32 %v693, %v1029
        %v1031 = vpop.f32.mrb[0].mxu0
        %v1032 = vpop.f32.mrb[0].mxu0
        %v1033 = vadd.f32 %v694, %v1032
        %v1034 = vpop.f32.mrb[0].mxu0
        %1035 = vmatprep.mubr.bf16.mxu0 0
        %1036 = vmatmul.mubr.bf16.gmra.mrb[0].mxu0 %v957
        %v1037 = vpop.f32.mrb[0].mxu0
        %v1038 = vadd.f32 %v695, %v1037
        %v1039 = vpop.f32.mrb[0].mxu0
        %v1040 = vpop.f32.mrb[0].mxu0
        %v1041 = vadd.f32 %v696, %v1040
        %v1042 = vpop.f32.mrb[0].mxu0
        %1043 = vmatprep.mubr.bf16.mxu0 0
        %1044 = vmatmul.mubr.bf16.gmra.mrb[0].mxu0 %v960
        %v1045 = vpop.f32.mrb[0].mxu0
        %v1046 = vadd.f32 %v697, %v1045
        %v1047 = vpop.f32.mrb[0].mxu0
        %v1048 = vpop.f32.mrb[0].mxu0
        %v1049 = vadd.f32 %v698, %v1048
        %v1050 = vpop.f32.mrb[0].mxu0
        %1051 = vmatprep.mubr.bf16.mxu0 0
        %1052 = vmatmul.mubr.bf16.gmra.mrb[0].mxu0 %v963
        %v1053 = vpop.f32.mrb[0].mxu0
        %v1054 = vadd.f32 %v699, %v1053
        %v1055 = vpop.f32.mrb[0].mxu0
        %v1056 = vpop.f32.mrb[0].mxu0
        %v1057 = vadd.f32 %v700, %v1056
        %v1058 = vpop.f32.mrb[0].mxu0
        %1059 = vmatprep.mubr.bf16.mxu0 0
        %1060 = vmatmul.mubr.bf16.gmra.mrb[0].mxu0 %v966
        %v1061 = vpop.f32.mrb[0].mxu0
        %v1062 = vadd.f32 %v701, %v1061
        %v1063 = vpop.f32.mrb[0].mxu0
        %v1064 = vpop.f32.mrb[0].mxu0
        %v1065 = vadd.f32 %v702, %v1064
        %v1066 = vpop.f32.mrb[0].mxu0
        %1067 = vdwg.mxu0
        %vm1068 = vcmask 130048
        %v1069 = vsel %vm1068, %v1006, -inf
        %1070 = vmax.xlane.f32.xlu0 %v1069
        %v1071 = vpop.xlane.xlu0 %1070
        %v1072 = vsel %vm1068, %v1009, -inf
        %1073 = vmax.xlane.f32.xlu0 %v1072
        %v1074 = vpop.xlane.xlu0 %1073
        %v1075 = vsel %vm1068, %v1014, -inf
        %1076 = vmax.xlane.f32.xlu0 %v1075
        %v1077 = vpop.xlane.xlu0 %1076
        %v1078 = vsel %vm1068, %v1017, -inf
        %1079 = vmax.xlane.f32.xlu0 %v1078
        %v1080 = vpop.xlane.xlu0 %1079
        %v1081 = vsel %vm1068, %v1022, -inf
        %1082 = vmax.xlane.f32.xlu0 %v1081
        %v1083 = vpop.xlane.xlu0 %1082
        %v1084 = vsel %vm1068, %v1025, -inf
        %1085 = vmax.xlane.f32.xlu0 %v1084
        %v1086 = vpop.xlane.xlu0 %1085
        %v1087 = vsel %vm1068, %v1030, -inf
        %1088 = vmax.xlane.f32.xlu0 %v1087
        %v1089 = vpop.xlane.xlu0 %1088
        %v1090 = vsel %vm1068, %v1033, -inf
        %1091 = vmax.xlane.f32.xlu0 %v1090
        %v1092 = vpop.xlane.xlu0 %1091
        %v1093 = vsel %vm1068, %v1038, -inf
        %1094 = vmax.xlane.f32.xlu0 %v1093
        %v1095 = vpop.xlane.xlu0 %1094
        %v1096 = vsel %vm1068, %v1041, -inf
        %1097 = vmax.xlane.f32.xlu0 %v1096
        %v1098 = vpop.xlane.xlu0 %1097
        %v1099 = vsel %vm1068, %v1046, -inf
        %1100 = vmax.xlane.f32.xlu0 %v1099
        %v1101 = vpop.xlane.xlu0 %1100
        %v1102 = vsel %vm1068, %v1049, -inf
        %1103 = vmax.xlane.f32.xlu0 %v1102
        %v1104 = vpop.xlane.xlu0 %1103
        %v1105 = vsel %vm1068, %v1054, -inf
        %1106 = vmax.xlane.f32.xlu0 %v1105
        %v1107 = vpop.xlane.xlu0 %1106
        %v1108 = vsel %vm1068, %v1057, -inf
        %1109 = vmax.xlane.f32.xlu0 %v1108
        %v1110 = vpop.xlane.xlu0 %1109
        %v1111 = vsel %vm1068, %v1062, -inf
        %1112 = vmax.xlane.f32.xlu0 %v1111
        %v1113 = vpop.xlane.xlu0 %1112
        %v1114 = vsel %vm1068, %v1065, -inf
        %1115 = vmax.xlane.f32.xlu0 %v1114
        %v1116 = vpop.xlane.xlu0 %1115
        %v1117 = vsub.f32 %v1006, %v1071
        %v1118 = vsub.f32 %v1009, %v1074
        %v1119 = vsub.f32 %v1014, %v1077
        %v1120 = vsub.f32 %v1017, %v1080
        %v1121 = vsub.f32 %v1022, %v1083
        %v1122 = vsub.f32 %v1025, %v1086
        %v1123 = vsub.f32 %v1030, %v1089
        %v1124 = vsub.f32 %v1033, %v1092
        %v1125 = vsub.f32 %v1038, %v1095
        %v1126 = vsub.f32 %v1041, %v1098
        %v1127 = vsub.f32 %v1046, %v1101
        %v1128 = vsub.f32 %v1049, %v1104
        %v1129 = vsub.f32 %v1054, %v1107
        %v1130 = vsub.f32 %v1057, %v1110
        %v1131 = vsub.f32 %v1062, %v1113
        %v1132 = vsub.f32 %v1065, %v1116
        %v1133 = vmul.f32 %v1117, 1.442695
        %v1134 = vpow.pop %v1133
        %v1135 = vmul.f32 %v1118, 1.442695
        %v1136 = vpow.pop %v1135
        %v1137 = vmul.f32 %v1119, 1.442695
        %v1138 = vpow.pop %v1137
        %v1139 = vmul.f32 %v1120, 1.442695
        %v1140 = vpow.pop %v1139
        %v1141 = vmul.f32 %v1121, 1.442695
        %v1142 = vpow.pop %v1141
        %v1143 = vmul.f32 %v1122, 1.442695
        %v1144 = vpow.pop %v1143
        %v1145 = vmul.f32 %v1123, 1.442695
        %v1146 = vpow.pop %v1145
        %v1147 = vmul.f32 %v1124, 1.442695
        %v1148 = vpow.pop %v1147
        %v1149 = vmul.f32 %v1125, 1.442695
        %v1150 = vpow.pop %v1149
        %v1151 = vmul.f32 %v1126, 1.442695
        %v1152 = vpow.pop %v1151
        %v1153 = vmul.f32 %v1127, 1.442695
        %v1154 = vpow.pop %v1153
        %v1155 = vmul.f32 %v1128, 1.442695
        %v1156 = vpow.pop %v1155
        %v1157 = vmul.f32 %v1129, 1.442695
        %v1158 = vpow.pop %v1157
        %v1159 = vmul.f32 %v1130, 1.442695
        %v1160 = vpow.pop %v1159
        %v1161 = vmul.f32 %v1131, 1.442695
        %v1162 = vpow.pop %v1161
        %v1163 = vmul.f32 %v1132, 1.442695
        %v1164 = vpow.pop %v1163
        %v1165 = vsel %vm1068, %v1134, 0.0
        %1166 = vadd.xlane.f32.xlu0 %v1165
        %v1167 = vpop.xlane.xlu0 %1166
        %v1168 = vsel %vm1068, %v1136, 0.0
        %1169 = vadd.xlane.f32.xlu0 %v1168
        %v1170 = vpop.xlane.xlu0 %1169
        %v1171 = vsel %vm1068, %v1138, 0.0
        %1172 = vadd.xlane.f32.xlu0 %v1171
        %v1173 = vpop.xlane.xlu0 %1172
        %v1174 = vsel %vm1068, %v1140, 0.0
        %1175 = vadd.xlane.f32.xlu0 %v1174
        %v1176 = vpop.xlane.xlu0 %1175
        %v1177 = vsel %vm1068, %v1142, 0.0
        %1178 = vadd.xlane.f32.xlu0 %v1177
        %v1179 = vpop.xlane.xlu0 %1178
        %v1180 = vsel %vm1068, %v1144, 0.0
        %1181 = vadd.xlane.f32.xlu0 %v1180
        %v1182 = vpop.xlane.xlu0 %1181
        %v1183 = vsel %vm1068, %v1146, 0.0
        %1184 = vadd.xlane.f32.xlu0 %v1183
        %v1185 = vpop.xlane.xlu0 %1184
        %v1186 = vsel %vm1068, %v1148, 0.0
        %1187 = vadd.xlane.f32.xlu0 %v1186
        %v1188 = vpop.xlane.xlu0 %1187
        %v1189 = vsel %vm1068, %v1150, 0.0
        %1190 = vadd.xlane.f32.xlu0 %v1189
        %v1191 = vpop.xlane.xlu0 %1190
        %v1192 = vsel %vm1068, %v1152, 0.0
        %1193 = vadd.xlane.f32.xlu0 %v1192
        %v1194 = vpop.xlane.xlu0 %1193
        %v1195 = vsel %vm1068, %v1154, 0.0
        %1196 = vadd.xlane.f32.xlu0 %v1195
        %v1197 = vpop.xlane.xlu0 %1196
        %v1198 = vsel %vm1068, %v1156, 0.0
        %1199 = vadd.xlane.f32.xlu0 %v1198
        %v1200 = vpop.xlane.xlu0 %1199
        %v1201 = vsel %vm1068, %v1158, 0.0
        %1202 = vadd.xlane.f32.xlu0 %v1201
        %v1203 = vpop.xlane.xlu0 %1202
        %v1204 = vsel %vm1068, %v1160, 0.0
        %1205 = vadd.xlane.f32.xlu0 %v1204
        %v1206 = vpop.xlane.xlu0 %1205
        %v1207 = vsel %vm1068, %v1162, 0.0
        %1208 = vadd.xlane.f32.xlu0 %v1207
        %v1209 = vpop.xlane.xlu0 %1208
        %v1210 = vsel %vm1068, %v1164, 0.0
        %1211 = vadd.xlane.f32.xlu0 %v1210
        %v1212 = vpop.xlane.xlu0 %1211
        %v1213 = vrcp.pop %v1167
        %v1214 = vrcp.pop %v1170
        %v1215 = vrcp.pop %v1173
        %v1216 = vrcp.pop %v1176
        %v1217 = vrcp.pop %v1179
        %v1218 = vrcp.pop %v1182
        %v1219 = vrcp.pop %v1185
        %v1220 = vrcp.pop %v1188
        %v1221 = vrcp.pop %v1191
        %v1222 = vrcp.pop %v1194
        %v1223 = vrcp.pop %v1197
        %v1224 = vrcp.pop %v1200
        %v1225 = vrcp.pop %v1203
        %v1226 = vrcp.pop %v1206
        %v1227 = vrcp.pop %v1209
        %v1228 = vrcp.pop %v1212
        %v1229 = vmul.f32 %v1134, %v1213
        %v1230 = vmul.f32 %v1136, %v1214
        %v1231 = vmul.f32 %v1138, %v1215
        %v1232 = vmul.f32 %v1140, %v1216
        %v1233 = vmul.f32 %v1142, %v1217
        %v1234 = vmul.f32 %v1144, %v1218
        %v1235 = vmul.f32 %v1146, %v1219
        %v1236 = vmul.f32 %v1148, %v1220
        %v1237 = vmul.f32 %v1150, %v1221
        %v1238 = vmul.f32 %v1152, %v1222
        %v1239 = vmul.f32 %v1154, %v1223
        %v1240 = vmul.f32 %v1156, %v1224
        %v1241 = vmul.f32 %v1158, %v1225
        %v1242 = vmul.f32 %v1160, %v1226
        %v1243 = vmul.f32 %v1162, %v1227
        %v1244 = vmul.f32 %v1164, %v1228
        %v1245 = vpack.c.bf16 %v1230, %v1229
        %v1246 = vpack.c.bf16 %v1232, %v1231
        %v1247 = vpack.c.bf16 %v1234, %v1233
        %v1248 = vpack.c.bf16 %v1236, %v1235
        %v1249 = vpack.c.bf16 %v1238, %v1237
        %v1250 = vpack.c.bf16 %v1240, %v1239
        %v1251 = vpack.c.bf16 %v1242, %v1241
        %v1252 = vpack.c.bf16 %v1244, %v1243
        %v1253 = vpack.c.bf16 %v870, %v866
        %v1255 = vsel %vm1068, %v1245, 0
        %v1258 = vsel %vm1068, %v1246, 0
        %v1261 = vsel %vm1068, %v1247, 0
        %v1264 = vsel %vm1068, %v1248, 0
        %v1267 = vsel %vm1068, %v1249, 0
        %v1270 = vsel %vm1068, %v1250, 0
        %v1273 = vsel %vm1068, %v1251, 0
        %v1276 = vsel %vm1068, %v1252, 0
        %1278 = vmatprep.subr.bf16.mxu0 0
        %1279 = vmatpush1.bf16.msra.mxu0 %v1253
        %1280 = vmatprep.subr.bf16.mxu0 0
        %1281 = vmatpush1.bf16.msra.mxu0 0
        %1282 = vmatprep.subr.bf16.mxu0 0
        %1283 = vmatpush1.bf16.msra.mxu0 0
        %1284 = vmatprep.subr.bf16.mxu0 0
        %1285 = vmatpush1.bf16.msra.mxu0 0
        %1286 = vmatprep.subr.bf16.mxu0 0
        %1287 = vmatpush1.bf16.msra.mxu0 0
        %1288 = vmatprep.subr.bf16.mxu0 0
        %1289 = vmatpush1.bf16.msra.mxu0 0
        %1290 = vmatprep.subr.bf16.mxu0 0
        %1291 = vmatpush1.bf16.msra.mxu0 0
        %1292 = vmatprep.subr.bf16.mxu0 0
        %1293 = vmatpush1.bf16.msra.mxu0 0
        %1294 = vmatprep.subr.bf16.mxu0 0
        %1295 = vmatpush1.bf16.msra.mxu0 0
        %1296 = vmatprep.subr.bf16.mxu0 0
        %1297 = vmatpush1.bf16.msra.mxu0 0
        %1298 = vmatprep.subr.bf16.mxu0 0
        %1299 = vmatpush1.bf16.msra.mxu0 0
        %1300 = vmatprep.subr.bf16.mxu0 0
        %1301 = vmatpush1.bf16.msra.mxu0 0
        %1302 = vmatprep.subr.bf16.mxu0 0
        %1303 = vmatpush1.bf16.msra.mxu0 0
        %1304 = vmatprep.subr.bf16.mxu0 0
        %1305 = vmatpush1.bf16.msra.mxu0 0
        %1306 = vmatprep.subr.bf16.mxu0 0
        %1307 = vmatpush1.bf16.msra.mxu0 0
        %1308 = vmatprep.subr.bf16.mxu0 0
        %1309 = vmatpush1.bf16.msra.mxu0 0
        %1310 = vmatprep.mubr.bf16.mxu0 0
        %1311 = vmatmul.mubr.bf16.gmra.mrb[0].mxu0 %v1255
        %v1312 = vpop.f32.mrb[0].mxu0
        %v1313 = vadd.f32 0.0, %v1312
        %v1314 = vpop.f32.mrb[0].mxu0
        %v1315 = vpop.f32.mrb[0].mxu0
        %v1316 = vadd.f32 0.0, %v1315
        %v1317 = vpop.f32.mrb[0].mxu0
        %1318 = vmatprep.mubr.bf16.mxu0 0
        %1319 = vmatmul.mubr.bf16.gmra.mrb[0].mxu0 %v1258
        %v1320 = vpop.f32.mrb[0].mxu0
        %v1321 = vadd.f32 0.0, %v1320
        %v1322 = vpop.f32.mrb[0].mxu0
        %v1323 = vpop.f32.mrb[0].mxu0
        %v1324 = vadd.f32 0.0, %v1323
        %v1325 = vpop.f32.mrb[0].mxu0
        %1326 = vmatprep.mubr.bf16.mxu0 0
        %1327 = vmatmul.mubr.bf16.gmra.mrb[0].mxu0 %v1261
        %v1328 = vpop.f32.mrb[0].mxu0
        %v1329 = vadd.f32 0.0, %v1328
        %v1330 = vpop.f32.mrb[0].mxu0
        %v1331 = vpop.f32.mrb[0].mxu0
        %v1332 = vadd.f32 0.0, %v1331
        %v1333 = vpop.f32.mrb[0].mxu0
        %1334 = vmatprep.mubr.bf16.mxu0 0
        %1335 = vmatmul.mubr.bf16.gmra.mrb[0].mxu0 %v1264
        %v1336 = vpop.f32.mrb[0].mxu0
        %v1337 = vadd.f32 0.0, %v1336
        %v1338 = vpop.f32.mrb[0].mxu0
        %v1339 = vpop.f32.mrb[0].mxu0
        %v1340 = vadd.f32 0.0, %v1339
        %v1341 = vpop.f32.mrb[0].mxu0
        %1342 = vmatprep.mubr.bf16.mxu0 0
        %1343 = vmatmul.mubr.bf16.gmra.mrb[0].mxu0 %v1267
        %v1344 = vpop.f32.mrb[0].mxu0
        %v1345 = vadd.f32 0.0, %v1344
        %v1346 = vpop.f32.mrb[0].mxu0
        %v1347 = vpop.f32.mrb[0].mxu0
        %v1348 = vadd.f32 0.0, %v1347
        %v1349 = vpop.f32.mrb[0].mxu0
        %1350 = vmatprep.mubr.bf16.mxu0 0
        %1351 = vmatmul.mubr.bf16.gmra.mrb[0].mxu0 %v1270
        %v1352 = vpop.f32.mrb[0].mxu0
        %v1353 = vadd.f32 0.0, %v1352
        %v1354 = vpop.f32.mrb[0].mxu0
        %v1355 = vpop.f32.mrb[0].mxu0
        %v1356 = vadd.f32 0.0, %v1355
        %v1357 = vpop.f32.mrb[0].mxu0
        %1358 = vmatprep.mubr.bf16.mxu0 0
        %1359 = vmatmul.mubr.bf16.gmra.mrb[0].mxu0 %v1273
        %v1360 = vpop.f32.mrb[0].mxu0
        %v1361 = vadd.f32 0.0, %v1360
        %v1362 = vpop.f32.mrb[0].mxu0
        %v1363 = vpop.f32.mrb[0].mxu0
        %v1364 = vadd.f32 0.0, %v1363
        %v1365 = vpop.f32.mrb[0].mxu0
        %1366 = vmatprep.mubr.bf16.mxu0 0
        %1367 = vmatmul.mubr.bf16.gmra.mrb[0].mxu0 %v1276
        %v1368 = vpop.f32.mrb[0].mxu0
        %v1369 = vadd.f32 0.0, %v1368
        %v1370 = vpop.f32.mrb[0].mxu0
        %v1371 = vpop.f32.mrb[0].mxu0
        %v1372 = vadd.f32 0.0, %v1371
        %v1373 = vpop.f32.mrb[0].mxu0
        %1374 = vdwg.mxu0
        %v1375 = vmul.f32 %v1313, %v880
        %v1376 = vmul.f32 %v1316, %v880
        %v1377 = vmul.f32 %v1321, %v885
        %v1378 = vmul.f32 %v1324, %v885
        %v1379 = vadd.f32 %v1375, %v1377
        %v1380 = vadd.f32 %v1376, %v1378
        %v1381 = vmul.f32 %v1329, %v890
        %v1382 = vmul.f32 %v1332, %v890
        %v1383 = vadd.f32 %v1379, %v1381
        %v1384 = vadd.f32 %v1380, %v1382
        %v1385 = vmul.f32 %v1337, %v895
        %v1386 = vmul.f32 %v1340, %v895
        %v1387 = vadd.f32 %v1383, %v1385
        %v1388 = vadd.f32 %v1384, %v1386
        %v1389 = vmul.f32 %v1345, %v900
        %v1390 = vmul.f32 %v1348, %v900
        %v1391 = vadd.f32 %v1387, %v1389
        %v1392 = vadd.f32 %v1388, %v1390
        %v1393 = vmul.f32 %v1353, %v905
        %v1394 = vmul.f32 %v1356, %v905
        %v1395 = vadd.f32 %v1391, %v1393
        %v1396 = vadd.f32 %v1392, %v1394
        %v1397 = vmul.f32 %v1361, %v910
        %v1398 = vmul.f32 %v1364, %v910
        %v1399 = vadd.f32 %v1395, %v1397
        %v1400 = vadd.f32 %v1396, %v1398
        %v1401 = vmul.f32 %v1369, %v915
        %v1402 = vmul.f32 %v1372, %v915
        %v1403 = vadd.f32 %v1399, %v1401
        %v1404 = vadd.f32 %v1400, %v1402
        %v1405 = vpack.c.bf16 %v1404, %v1403
        %v1414 = vunpack.c.l.b16 %v711
        %v1415 = vunpack.c.l.b16 %v712
        %v1416 = vunpack.c.l.b16 %v713
        %v1417 = vunpack.c.l.b16 %v714
        %v1418 = vunpack.c.l.b16 %v715
        %v1419 = vunpack.c.l.b16 %v716
        %v1420 = vunpack.c.l.b16 %v717
        %v1421 = vunpack.c.l.b16 %v718
        %v1422 = vpack.c.b16 %v1415, %v1414
        %v1423 = vpack.c.b16 %v1417, %v1416
        %v1424 = vpack.c.b16 %v1419, %v1418
        %v1425 = vpack.c.b16 %v1421, %v1420
        %v1431 = vsel %vm745, %v1405, 0
        %1433 = vmatprep.subr.bf16.mxu0 0
        %1434 = vmatpush1.bf16.msra.mxu0 %v1422
        %1435 = vmatprep.subr.bf16.mxu0 0
        %1436 = vmatpush1.bf16.msra.mxu0 %v1423
        %1437 = vmatprep.subr.bf16.mxu0 0
        %1438 = vmatpush1.bf16.msra.mxu0 %v1424
        %1439 = vmatprep.subr.bf16.mxu0 0
        %1440 = vmatpush1.bf16.msra.mxu0 %v1425
        %1441 = vmatprep.subr.bf16.mxu0 0
        %1442 = vmatpush1.bf16.msra.mxu0 0
        %1443 = vmatprep.subr.bf16.mxu0 0
        %1444 = vmatpush1.bf16.msra.mxu0 0
        %1445 = vmatprep.subr.bf16.mxu0 0
        %1446 = vmatpush1.bf16.msra.mxu0 0
        %1447 = vmatprep.subr.bf16.mxu0 0
        %1448 = vmatpush1.bf16.msra.mxu0 0
        %1449 = vmatprep.subr.bf16.mxu0 0
        %1450 = vmatpush1.bf16.msra.mxu0 0
        %1451 = vmatprep.subr.bf16.mxu0 0
        %1452 = vmatpush1.bf16.msra.mxu0 0
        %1453 = vmatprep.subr.bf16.mxu0 0
        %1454 = vmatpush1.bf16.msra.mxu0 0
        %1455 = vmatprep.subr.bf16.mxu0 0
        %1456 = vmatpush1.bf16.msra.mxu0 0
        %1457 = vmatprep.subr.bf16.mxu0 0
        %1458 = vmatpush1.bf16.msra.mxu0 0
        %1459 = vmatprep.subr.bf16.mxu0 0
        %1460 = vmatpush1.bf16.msra.mxu0 0
        %1461 = vmatprep.subr.bf16.mxu0 0
        %1462 = vmatpush1.bf16.msra.mxu0 0
        %1463 = vmatprep.subr.bf16.mxu0 0
        %1464 = vmatpush1.bf16.msra.mxu0 0
        %1465 = vmatprep.mubr.bf16.mxu0 0
        %1466 = vmatmul.mubr.bf16.gmra.mrb[0].mxu0 %v1431
        %v1467 = vpop.f32.mrb[0].mxu0
        %v1468 = vadd.f32 0.0, %v1467
        %v1469 = vpop.f32.mrb[0].mxu0
        %v1470 = vpop.f32.mrb[0].mxu0
        %v1471 = vadd.f32 0.0, %v1470
        %v1472 = vpop.f32.mrb[0].mxu0
        %1473 = vdwg.mxu0
        %v1474 = vadd.f32 %v685, %v1468
        %v1475 = vadd.f32 %v686, %v1471
        %v1476 = vlaneseq
        %v1477 = vshrl.u32 %v1476, 7
        %v1478 = vsub.s32 4, %v1477
        %v1479 = vrot.slane %v719, %v1478
        %v1480 = vadd.f32 %v1474, %v1479
        %v1481 = vadd.f32 %v1475, %v1479
        %v1482 = vsel %vm745, %v1480, 0.0
        %1483 = vadd.xlane.f32.xlu0 %v1482
        %v1484 = vpop.xlane.xlu0 %1483
        %v1485 = vsel %vm745, %v1481, 0.0
        %1486 = vadd.xlane.f32.xlu0 %v1485
        %v1487 = vpop.xlane.xlu0 %1486
        %v1488 = vmul.f32 %v1484, %v752
        %v1489 = vmul.f32 %v1487, %v752
        %v1490 = vsub.f32 %v1480, %v1488
        %v1491 = vsub.f32 %v1481, %v1489
        %v1492 = vmul.f32 %v1490, %v1490
        %v1493 = vmul.f32 %v1491, %v1491
        %v1494 = vsel %vm745, %v1492, 0.0
        %1495 = vadd.xlane.f32.xlu0 %v1494
        %v1496 = vpop.xlane.xlu0 %1495
        %v1497 = vsel %vm745, %v1493, 0.0
        %1498 = vadd.xlane.f32.xlu0 %v1497
        %v1499 = vpop.xlane.xlu0 %1498
        %v1500 = vmul.f32 %v1496, %v752
        %v1501 = vmul.f32 %v1499, %v752
        %v1502 = vadd.f32 %v1500, 1e-05
        %v1503 = vadd.f32 %v1501, 1e-05
        %v1504 = vrsqrt.pop %v1502
        %v1505 = vrsqrt.pop %v1503
        %v1506 = vmul.f32 %v1490, %v1504
        %v1507 = vmul.f32 %v1491, %v1505
        %v1508 = vlaneseq
        %v1509 = vshrl.u32 %v1508, 7
        %v1510 = vsub.s32 2, %v1509
        %v1511 = vrot.slane %v719, %v1510
        %v1512 = vmul.f32 %v1506, %v1511
        %v1513 = vmul.f32 %v1507, %v1511
        %v1514 = vlaneseq
        %v1515 = vshrl.u32 %v1514, 7
        %v1516 = vsub.s32 3, %v1515
        %v1517 = vrot.slane %v719, %v1516
        %v1518 = vadd.f32 %v1512, %v1517
        %v1519 = vadd.f32 %v1513, %v1517
        %v1520 = vpack.c.bf16 %v1519, %v1518
        %v1522 = vlaneseq
        %v1523 = vshrl.u32 %v1522, 7
        %v1524 = vsub.s32 0, %v1523
        %v1525 = vrot.slane %v728, %v1524
        %v1535 = vunpack.c.l.b16 %v720
        %v1536 = vunpack.c.l.b16 %v721
        %v1537 = vunpack.c.l.b16 %v722
        %v1538 = vunpack.c.l.b16 %v723
        %v1539 = vunpack.c.l.b16 %v724
        %v1540 = vunpack.c.l.b16 %v725
        %v1541 = vunpack.c.l.b16 %v726
        %v1542 = vunpack.c.l.b16 %v727
        %v1543 = vpack.c.b16 %v1536, %v1535
        %v1544 = vpack.c.b16 %v1538, %v1537
        %v1545 = vpack.c.b16 %v1540, %v1539
        %v1546 = vpack.c.b16 %v1542, %v1541
        %v1552 = vsel %vm745, %v1520, 0
        %1554 = vmatprep.subr.bf16.mxu0 0
        %1555 = vmatpush1.bf16.msra.mxu0 %v1543
        %1556 = vmatprep.subr.bf16.mxu0 0
        %1557 = vmatpush1.bf16.msra.mxu0 %v1544
        %1558 = vmatprep.subr.bf16.mxu0 0
        %1559 = vmatpush1.bf16.msra.mxu0 %v1545
        %1560 = vmatprep.subr.bf16.mxu0 0
        %1561 = vmatpush1.bf16.msra.mxu0 %v1546
        %1562 = vmatprep.subr.bf16.mxu0 0
        %1563 = vmatpush1.bf16.msra.mxu0 0
        %1564 = vmatprep.subr.bf16.mxu0 0
        %1565 = vmatpush1.bf16.msra.mxu0 0
        %1566 = vmatprep.subr.bf16.mxu0 0
        %1567 = vmatpush1.bf16.msra.mxu0 0
        %1568 = vmatprep.subr.bf16.mxu0 0
        %1569 = vmatpush1.bf16.msra.mxu0 0
        %1570 = vmatprep.subr.bf16.mxu0 0
        %1571 = vmatpush1.bf16.msra.mxu0 0
        %1572 = vmatprep.subr.bf16.mxu0 0
        %1573 = vmatpush1.bf16.msra.mxu0 0
        %1574 = vmatprep.subr.bf16.mxu0 0
        %1575 = vmatpush1.bf16.msra.mxu0 0
        %1576 = vmatprep.subr.bf16.mxu0 0
        %1577 = vmatpush1.bf16.msra.mxu0 0
        %1578 = vmatprep.subr.bf16.mxu0 0
        %1579 = vmatpush1.bf16.msra.mxu0 0
        %1580 = vmatprep.subr.bf16.mxu0 0
        %1581 = vmatpush1.bf16.msra.mxu0 0
        %1582 = vmatprep.subr.bf16.mxu0 0
        %1583 = vmatpush1.bf16.msra.mxu0 0
        %1584 = vmatprep.subr.bf16.mxu0 0
        %1585 = vmatpush1.bf16.msra.mxu0 0
        %1586 = vmatprep.mubr.bf16.mxu0 0
        %1587 = vmatmul.mubr.bf16.gmra.mrb[0].mxu0 %v1552
        %v1588 = vpop.f32.mrb[0].mxu0
        %v1589 = vadd.f32 %v1525, %v1588
        %v1590 = vpop.f32.mrb[0].mxu0
        %v1591 = vpop.f32.mrb[0].mxu0
        %v1592 = vadd.f32 %v1525, %v1591
        %v1593 = vpop.f32.mrb[0].mxu0
        %1594 = vdwg.mxu0
        %v1595 = vmax.f32 %v1589, 0.0
        %v1596 = vmax.f32 %v1592, 0.0
        %v1597 = vpack.c.bf16 %v1596, %v1595
        %v1614 = vunpack.c.l.b16 %v729
        %v1615 = vunpack.c.l.b16 %v730
        %v1616 = vunpack.c.l.b16 %v731
        %v1617 = vunpack.c.l.b16 %v732
        %v1618 = vunpack.c.l.b16 %v733
        %v1619 = vunpack.c.l.b16 %v734
        %v1620 = vunpack.c.l.b16 %v735
        %v1621 = vunpack.c.l.b16 %v736
        %v1622 = vunpack.c.l.b16 %v737
        %v1623 = vunpack.c.l.b16 %v738
        %v1624 = vunpack.c.l.b16 %v739
        %v1625 = vunpack.c.l.b16 %v740
        %v1626 = vunpack.c.l.b16 %v741
        %v1627 = vunpack.c.l.b16 %v742
        %v1628 = vunpack.c.l.b16 %v743
        %v1629 = vunpack.c.l.b16 %v744
        %v1630 = vpack.c.b16 %v1615, %v1614
        %v1631 = vpack.c.b16 %v1617, %v1616
        %v1632 = vpack.c.b16 %v1619, %v1618
        %v1633 = vpack.c.b16 %v1621, %v1620
        %v1634 = vpack.c.b16 %v1623, %v1622
        %v1635 = vpack.c.b16 %v1625, %v1624
        %v1636 = vpack.c.b16 %v1627, %v1626
        %v1637 = vpack.c.b16 %v1629, %v1628
        %1646 = vmatprep.subr.bf16.mxu0 0
        %1647 = vmatpush1.bf16.msra.mxu0 %v1630
        %1648 = vmatprep.subr.bf16.mxu0 0
        %1649 = vmatpush1.bf16.msra.mxu0 %v1631
        %1650 = vmatprep.subr.bf16.mxu0 0
        %1651 = vmatpush1.bf16.msra.mxu0 %v1632
        %1652 = vmatprep.subr.bf16.mxu0 0
        %1653 = vmatpush1.bf16.msra.mxu0 %v1633
        %1654 = vmatprep.subr.bf16.mxu0 0
        %1655 = vmatpush1.bf16.msra.mxu0 %v1634
        %1656 = vmatprep.subr.bf16.mxu0 0
        %1657 = vmatpush1.bf16.msra.mxu0 %v1635
        %1658 = vmatprep.subr.bf16.mxu0 0
        %1659 = vmatpush1.bf16.msra.mxu0 %v1636
        %1660 = vmatprep.subr.bf16.mxu0 0
        %1661 = vmatpush1.bf16.msra.mxu0 %v1637
        %1662 = vmatprep.subr.bf16.mxu0 0
        %1663 = vmatpush1.bf16.msra.mxu0 0
        %1664 = vmatprep.subr.bf16.mxu0 0
        %1665 = vmatpush1.bf16.msra.mxu0 0
        %1666 = vmatprep.subr.bf16.mxu0 0
        %1667 = vmatpush1.bf16.msra.mxu0 0
        %1668 = vmatprep.subr.bf16.mxu0 0
        %1669 = vmatpush1.bf16.msra.mxu0 0
        %1670 = vmatprep.subr.bf16.mxu0 0
        %1671 = vmatpush1.bf16.msra.mxu0 0
        %1672 = vmatprep.subr.bf16.mxu0 0
        %1673 = vmatpush1.bf16.msra.mxu0 0
        %1674 = vmatprep.subr.bf16.mxu0 0
        %1675 = vmatpush1.bf16.msra.mxu0 0
        %1676 = vmatprep.subr.bf16.mxu0 0
        %1677 = vmatpush1.bf16.msra.mxu0 0
        %1678 = vmatprep.mubr.bf16.mxu0 0
        %1679 = vmatmul.mubr.bf16.gmra.mrb[0].mxu0 %v1597
        %v1680 = vpop.f32.mrb[0].mxu0
        %v1681 = vadd.f32 0.0, %v1680
        %v1682 = vpop.f32.mrb[0].mxu0
        %v1683 = vpop.f32.mrb[0].mxu0
        %v1684 = vadd.f32 0.0, %v1683
        %v1685 = vpop.f32.mrb[0].mxu0
        %1686 = vdwg.mxu0
        %v1687 = vadd.f32 %v1480, %v1681
        %v1688 = vadd.f32 %v1481, %v1684
        %v1689 = vlaneseq
        %v1690 = vshrl.u32 %v1689, 7
        %v1691 = vsub.s32 5, %v1690
        %v1692 = vrot.slane %v719, %v1691
        %v1693 = vadd.f32 %v1687, %v1692
        %v1694 = vadd.f32 %v1688, %v1692
        %1695 = vst.msk [vmem:[#allocation2] sm:$0xff] %vm745, %v1693
        %1696 = vst.msk [vmem:[#allocation2 + $0x8] sm:$0xff] %vm745, %v1694
        %p1697 = scmp.eq.s32.totalorder %s29, 1
        // Predicated region
        $region85: #{clip_caption_forward.2} parent=63 // pred_check
          %p1698 = pneg %p1697
        $region86: #{clip_caption_forward.2} parent=63 // pred_check_branch
          %1700 = sbr.rel (%p1698) target = $region88
        $region87: #{clip_caption_forward.2} parent=63 // pred_region
          %1701 = vst.msk [vmem:[%s11] sm:$0xff] %vm745, %v1694
        $region88: #{clip_caption_forward.2} parent=63 // pred_fallthru
          _
        // Predicated region
        $region89: #{clip_caption_forward.2} parent=63 // pred_check
          %p1702 = pneg %p303
        $region90: #{clip_caption_forward.2} parent=63 // pred_check_branch
          %1704 = sbr.rel (%p1702) target = $region92
        $region91: #{clip_caption_forward.2} parent=63 // pred_region
          _
        $region92: #{clip_caption_forward.2} parent=63 // pred_fallthru
          _
        // Predicated region
        $region93: #{clip_caption_forward.2} parent=63 // pred_check
          %p1705 = pneg %p303
        $region94: #{clip_caption_forward.2} parent=63 // pred_check_branch
          %1707 = sbr.rel (%p1705) target = $region96
        $region95: #{clip_caption_forward.2} parent=63 // pred_region
          _
        $region96: #{clip_caption_forward.2} parent=63 // pred_fallthru
          _
      $region64: #{clip_caption_forward.2} parent=5 // pred_fallthru
        _
      %p1708 = scmp.le.s32.totalorder 2, %s24
      // Predicated region
      $region97: #{clip_caption_forward.2} parent=5 // pred_check
        %p1709 = pneg %p1708
      $region98: #{clip_caption_forward.2} parent=5 // pred_check_branch
        %1711 = sbr.rel (%p1709) target = $region100
      $region99: #{clip_caption_forward.2} parent=5 // pred_region
        %s1712 = ssub.s32 %s24, 2
      $region100: #{clip_caption_forward.2} parent=5 // pred_fallthru
        _
    $region6: #{clip_caption_forward.2} parent=1 // loop_footer
      %s28 = sadd.s32 1, %s24
    $region7: #{clip_caption_forward.2} parent=1 // loop_footer_branch
      %23 = sbr.rel target = $region3
    $region8: #{clip_caption_forward.2} parent=1 // loop_exit
      _
    %1713 = vsyncpa [#allocation4], 1
    %s1714 = scalar_lea.sflag [#allocation4], 1
    %1715 = vsyncpa %s1714, 1
    %1716 = vsyncpa [#allocation6], 1
    %s1717 = scalar_lea.sflag [#allocation6], 1
    %1718 = vsyncpa %s1717, 1
    %1719 = vsyncpa [#allocation9], 1
    %s1720 = scalar_lea.sflag [#allocation9], 1
    %1721 = vsyncpa %s1720, 1

// kernel: clip_caption_forward.3
$region0: #{clip_caption_forward.3}
  #allocation0 [shape = 'u32[]', space=smem, size = 0x4, offset = 0x4, fixed_abs, tag = 'smem constant byte address 0x4 - core index']
  #allocation1 [shape = 'u32[144,128]{1,0:T(1,128)}', space=vmem, size = 0x12000, scoped, tag = 'internal scratch']
  #allocation2 [shape = 'f32[24,64]{1,0:T(8,128)}', space=vmem, size = 0x3000, scoped, tag = 'scratch operand']
  #allocation3 [shape = 's32[1]{0}', space=sflag, size = 0x4, scoped, tag = 'scoped memory for clip_caption_forward.3']
  #allocation4 [shape = 'u8[512]{0}', space=smem, size = 0x200, scoped, tag = 'prefetched SMEM operand 0']
  %s0 = inlined_call_operand.vmem [shape: s32[16], index: 0, kind: input, shape index: {}]
  %s1 = inlined_call_operand.vmem [shape: f32[8,64], index: 1, kind: input, shape index: {}]
  %s2 = inlined_call_operand.vmem [shape: f32[128,64], index: 2, kind: input, shape index: {}]
  %s3 = inlined_call_operand.vmem [shape: f32[24,64], index: 3, kind: input, shape index: {}]
  %s4 = inlined_call_operand.vmem [shape: f32[96,24], index: 4, kind: input, shape index: {}]
  %s5 = inlined_call_operand.vmem [shape: bf16[2,64,192], index: 5, kind: input, shape index: {}]
  %s6 = inlined_call_operand.vmem [shape: f32[2,1,192], index: 6, kind: input, shape index: {}]
  %s7 = inlined_call_operand.vmem [shape: bf16[2,64,64], index: 7, kind: input, shape index: {}]
  %s8 = inlined_call_operand.vmem [shape: f32[2,6,64], index: 8, kind: input, shape index: {}]
  %s9 = inlined_call_operand.vmem [shape: bf16[2,64,256], index: 9, kind: input, shape index: {}]
  %s10 = inlined_call_operand.vmem [shape: f32[2,1,256], index: 10, kind: input, shape index: {}]
  %s11 = inlined_call_operand.vmem [shape: bf16[2,256,64], index: 11, kind: input, shape index: {}]
  %s12 = inlined_call_operand.vmem [shape: f32[2,64], index: 12, kind: input, shape index: {}]
  %s13 = inlined_call_operand.vmem [shape: bf16[64,128], index: 13, kind: input, shape index: {}]
  %s14 = inlined_call_operand.hbm [shape: f32[24,128], index: 14, kind: output, shape index: {}]
  %s15 = sld [smem:[#allocation0]]
  $region93: #{clip_caption_forward.3} parent=0
    _
  %s17 = ssub.s32 1, %s15
  %s18 = scalar_select 0, %s17, %s15
  %s19 = sshll.u32 %s0, 4
  %s20 = int_to_ptr.vmem [resolvable:$true] %s19
  %22 = dma.vmem_to_smem %s20, 16, [#allocation4], [#allocation3]
  %23 = dma.done [#allocation3], 16
  %24 = sfence
  $region1: #{clip_caption_forward.3} parent=0
    #allocation5 [shape = 'u8[12288]{0}', space=vmem, size = 0x3000, scoped, tag = 'output window, operand 0, single buffered']
    #allocation6 [shape = 's32[2]{0}', space=sflag, size = 0x8, scoped, tag = 'scoped memory for clip_caption_forward.3']
    %25 = vsyncpa [#allocation6], 0
    loop: start=0, step=1, limit=4
    $region2: #{clip_caption_forward.3} parent=1 // loop_pre_header
      _
    $region3: #{clip_caption_forward.3} parent=1 // loop_header
      %s27 = sphi 0, %s31
      %p28 = scmp.ge.s32.totalorder %s27, 4
      %s35 = sphi 0, %s35
      %s37 = sphi 0, %s35
      %s38 = sphi 0, %s37
      %s52 = sphi 0, %s38
      %s56 = sphi 0, %s56
      %s58 = sphi 0, %s56
      %s59 = sphi 0, %s58
      %s73 = sphi 0, %s59
      %s77 = sphi 0, %s77
      %s79 = sphi 0, %s77
      %s80 = sphi 0, %s79
      %s94 = sphi 0, %s80
      %s98 = sphi 0, %s98
      %s100 = sphi 0, %s98
      %s101 = sphi 0, %s100
      %s115 = sphi 0, %s101
      %s121 = sphi 0, %s123
      %s124 = sphi 0, %s121
      %s125 = sphi 0, %s124
      %s141 = sphi 0, %s125
      %s147 = sphi 0, %s149
      %s150 = sphi 0, %s147
      %s151 = sphi 0, %s150
      %s167 = sphi 0, %s151
      %s173 = sphi 0, %s175
      %s176 = sphi 0, %s173
      %s177 = sphi 0, %s176
      %s193 = sphi 0, %s177
      %s199 = sphi 0, %s201
      %s202 = sphi 0, %s199
      %s203 = sphi 0, %s202
      %s219 = sphi 0, %s203
      %s225 = sphi 0, %s227
      %s228 = sphi 0, %s225
      %s229 = sphi 0, %s228
      %s245 = sphi 0, %s229
      %s251 = sphi 0, %s253
      %s254 = sphi 0, %s251
      %s255 = sphi 0, %s254
      %s271 = sphi 0, %s255
      %s277 = sphi 0, %s279
      %s280 = sphi 0, %s277
      %s281 = sphi 0, %s280
      %s297 = sphi 0, %s281
      %s301 = sphi 0, %s301
      %s303 = sphi 0, %s301
      %s304 = sphi 0, %s303
      %s318 = sphi 0, %s304
      %s322 = sphi 0, %s322
      %s324 = sphi 0, %s322
      %s325 = sphi 0, %s324
      %s339 = sphi 0, %s325
      %s343 = sphi 0, %s343
      %s345 = sphi 0, %s343
      %s346 = sphi 0, %s345
      %s360 = sphi 0, %s346
    $region4: #{clip_caption_forward.3} parent=1 // loop_header_branch
      %30 = sbr.rel (%p28) target = $region8
    $region5: #{clip_caption_forward.3} parent=1 // loop_body
      %s32 = ssub.s32 %s27, 1
      %s33 = ssub.s32 %s27, 2
      %s34 = sadd.s32 %s27, 1
      %s36 = sadd.s32 %s35, 1
      %p39 = scmp.eq.s32.totalorder %s27, 1
      %p40 = scmp.ne.s32.totalorder %s35, %s37
      %p41 = scmp.eq.s32.totalorder %s27, 0
      %p42 = por %p40, %p41
      %p43 = scmp.ne.s32.totalorder %s35, %s37
      %p44 = scmp.eq.s32.totalorder %s32, 1
      %p45 = por %p43, %p44
      %p46 = scmp.ne.s32.totalorder %s37, %s38
      %p47 = scmp.eq.s32.totalorder %s32, 0
      %p48 = por %p46, %p47
      %p49 = scmp.ne.s32.totalorder %s37, %s38
      %p50 = scmp.eq.s32.totalorder %s33, 1
      %p51 = por %p49, %p50
      %p53 = scmp.ne.s32.totalorder %s38, %s52
      %p54 = scmp.eq.s32.totalorder %s33, 0
      %p55 = por %p53, %p54
      %s57 = sadd.s32 %s56, 1
      %p60 = scmp.eq.s32.totalorder %s27, 1
      %p61 = scmp.ne.s32.totalorder %s56, %s58
      %p62 = scmp.eq.s32.totalorder %s27, 0
      %p63 = por %p61, %p62
      %p64 = scmp.ne.s32.totalorder %s56, %s58
      %p65 = scmp.eq.s32.totalorder %s32, 1
      %p66 = por %p64, %p65
      %p67 = scmp.ne.s32.totalorder %s58, %s59
      %p68 = scmp.eq.s32.totalorder %s32, 0
      %p69 = por %p67, %p68
      %p70 = scmp.ne.s32.totalorder %s58, %s59
      %p71 = scmp.eq.s32.totalorder %s33, 1
      %p72 = por %p70, %p71
      %p74 = scmp.ne.s32.totalorder %s59, %s73
      %p75 = scmp.eq.s32.totalorder %s33, 0
      %p76 = por %p74, %p75
      %s78 = sadd.s32 %s77, 1
      %p81 = scmp.eq.s32.totalorder %s27, 1
      %p82 = scmp.ne.s32.totalorder %s77, %s79
      %p83 = scmp.eq.s32.totalorder %s27, 0
      %p84 = por %p82, %p83
      %p85 = scmp.ne.s32.totalorder %s77, %s79
      %p86 = scmp.eq.s32.totalorder %s32, 1
      %p87 = por %p85, %p86
      %p88 = scmp.ne.s32.totalorder %s79, %s80
      %p89 = scmp.eq.s32.totalorder %s32, 0
      %p90 = por %p88, %p89
      %p91 = scmp.ne.s32.totalorder %s79, %s80
      %p92 = scmp.eq.s32.totalorder %s33, 1
      %p93 = por %p91, %p92
      %p95 = scmp.ne.s32.totalorder %s80, %s94
      %p96 = scmp.eq.s32.totalorder %s33, 0
      %p97 = por %p95, %p96
      %s99 = sadd.s32 %s98, 1
      %p102 = scmp.eq.s32.totalorder %s27, 1
      %p103 = scmp.ne.s32.totalorder %s98, %s100
      %p104 = scmp.eq.s32.totalorder %s27, 0
      %p105 = por %p103, %p104
      %p106 = scmp.ne.s32.totalorder %s98, %s100
      %p107 = scmp.eq.s32.totalorder %s32, 1
      %p108 = por %p106, %p107
      %p109 = scmp.ne.s32.totalorder %s100, %s101
      %p110 = scmp.eq.s32.totalorder %s32, 0
      %p111 = por %p109, %p110
      %p112 = scmp.ne.s32.totalorder %s100, %s101
      %p113 = scmp.eq.s32.totalorder %s33, 1
      %p114 = por %p112, %p113
      %p116 = scmp.ne.s32.totalorder %s101, %s115
      %p117 = scmp.eq.s32.totalorder %s33, 0
      %p118 = por %p116, %p117
      %s119 = ssub.s32 %s27, %s34
      %p120 = scmp.eq.s32.totalorder %s119, 0
      %s122 = sadd.s32 %s121, 1
      %s123 = scalar_select %p120, %s121, %s122
      %p126 = pneg %p120
      %p127 = scmp.eq.s32.totalorder %s27, 1
      %p128 = por %p126, %p127
      %p129 = scmp.ne.s32.totalorder %s121, %s124
      %p130 = scmp.eq.s32.totalorder %s27, 0
      %p131 = por %p129, %p130
      %p132 = scmp.ne.s32.totalorder %s121, %s124
      %p133 = scmp.eq.s32.totalorder %s32, 1
      %p134 = por %p132, %p133
      %p135 = scmp.ne.s32.totalorder %s124, %s125
      %p136 = scmp.eq.s32.totalorder %s32, 0
      %p137 = por %p135, %p136
      %p138 = scmp.ne.s32.totalorder %s124, %s125
      %p139 = scmp.eq.s32.totalorder %s33, 1
      %p140 = por %p138, %p139
      %p142 = scmp.ne.s32.totalorder %s125, %s141
      %p143 = scmp.eq.s32.totalorder %s33, 0
      %p144 = por %p142, %p143
      %s145 = ssub.s32 %s27, %s34
      %p146 = scmp.eq.s32.totalorder %s145, 0
      %s148 = sadd.s32 %s147, 1
      %s149 = scalar_select %p146, %s147, %s148
      %p152 = pneg %p146
      %p153 = scmp.eq.s32.totalorder %s27, 1
      %p154 = por %p152, %p153
      %p155 = scmp.ne.s32.totalorder %s147, %s150
      %p156 = scmp.eq.s32.totalorder %s27, 0
      %p157 = por %p155, %p156
      %p158 = scmp.ne.s32.totalorder %s147, %s150
      %p159 = scmp.eq.s32.totalorder %s32, 1
      %p160 = por %p158, %p159
      %p161 = scmp.ne.s32.totalorder %s150, %s151
      %p162 = scmp.eq.s32.totalorder %s32, 0
      %p163 = por %p161, %p162
      %p164 = scmp.ne.s32.totalorder %s150, %s151
      %p165 = scmp.eq.s32.totalorder %s33, 1
      %p166 = por %p164, %p165
      %p168 = scmp.ne.s32.totalorder %s151, %s167
      %p169 = scmp.eq.s32.totalorder %s33, 0
      %p170 = por %p168, %p169
      %s171 = ssub.s32 %s27, %s34
      %p172 = scmp.eq.s32.totalorder %s171, 0
      %s174 = sadd.s32 %s173, 1
      %s175 = scalar_select %p172, %s173, %s174
      %p178 = pneg %p172
      %p179 = scmp.eq.s32.totalorder %s27, 1
      %p180 = por %p178, %p179
      %p181 = scmp.ne.s32.totalorder %s173, %s176
      %p182 = scmp.eq.s32.totalorder %s27, 0
      %p183 = por %p181, %p182
      %p184 = scmp.ne.s32.totalorder %s173, %s176
      %p185 = scmp.eq.s32.totalorder %s32, 1
      %p186 = por %p184, %p185
      %p187 = scmp.ne.s32.totalorder %s176, %s177
      %p188 = scmp.eq.s32.totalorder %s32, 0
      %p189 = por %p187, %p188
      %p190 = scmp.ne.s32.totalorder %s176, %s177
      %p191 = scmp.eq.s32.totalorder %s33, 1
      %p192 = por %p190, %p191
      %p194 = scmp.ne.s32.totalorder %s177, %s193
      %p195 = scmp.eq.s32.totalorder %s33, 0
      %p196 = por %p194, %p195
      %s197 = ssub.s32 %s27, %s34
      %p198 = scmp.eq.s32.totalorder %s197, 0
      %s200 = sadd.s32 %s199, 1
      %s201 = scalar_select %p198, %s199, %s200
      %p204 = pneg %p198
      %p205 = scmp.eq.s32.totalorder %s27, 1
      %p206 = por %p204, %p205
      %p207 = scmp.ne.s32.totalorder %s199, %s202
      %p208 = scmp.eq.s32.totalorder %s27, 0
      %p209 = por %p207, %p208
      %p210 = scmp.ne.s32.totalorder %s199, %s202
      %p211 = scmp.eq.s32.totalorder %s32, 1
      %p212 = por %p210, %p211
      %p213 = scmp.ne.s32.totalorder %s202, %s203
      %p214 = scmp.eq.s32.totalorder %s32, 0
      %p215 = por %p213, %p214
      %p216 = scmp.ne.s32.totalorder %s202, %s203
      %p217 = scmp.eq.s32.totalorder %s33, 1
      %p218 = por %p216, %p217
      %p220 = scmp.ne.s32.totalorder %s203, %s219
      %p221 = scmp.eq.s32.totalorder %s33, 0
      %p222 = por %p220, %p221
      %s223 = ssub.s32 %s27, %s34
      %p224 = scmp.eq.s32.totalorder %s223, 0
      %s226 = sadd.s32 %s225, 1
      %s227 = scalar_select %p224, %s225, %s226
      %p230 = pneg %p224
      %p231 = scmp.eq.s32.totalorder %s27, 1
      %p232 = por %p230, %p231
      %p233 = scmp.ne.s32.totalorder %s225, %s228
      %p234 = scmp.eq.s32.totalorder %s27, 0
      %p235 = por %p233, %p234
      %p236 = scmp.ne.s32.totalorder %s225, %s228
      %p237 = scmp.eq.s32.totalorder %s32, 1
      %p238 = por %p236, %p237
      %p239 = scmp.ne.s32.totalorder %s228, %s229
      %p240 = scmp.eq.s32.totalorder %s32, 0
      %p241 = por %p239, %p240
      %p242 = scmp.ne.s32.totalorder %s228, %s229
      %p243 = scmp.eq.s32.totalorder %s33, 1
      %p244 = por %p242, %p243
      %p246 = scmp.ne.s32.totalorder %s229, %s245
      %p247 = scmp.eq.s32.totalorder %s33, 0
      %p248 = por %p246, %p247
      %s249 = ssub.s32 %s27, %s34
      %p250 = scmp.eq.s32.totalorder %s249, 0
      %s252 = sadd.s32 %s251, 1
      %s253 = scalar_select %p250, %s251, %s252
      %p256 = pneg %p250
      %p257 = scmp.eq.s32.totalorder %s27, 1
      %p258 = por %p256, %p257
      %p259 = scmp.ne.s32.totalorder %s251, %s254
      %p260 = scmp.eq.s32.totalorder %s27, 0
      %p261 = por %p259, %p260
      %p262 = scmp.ne.s32.totalorder %s251, %s254
      %p263 = scmp.eq.s32.totalorder %s32, 1
      %p264 = por %p262, %p263
      %p265 = scmp.ne.s32.totalorder %s254, %s255
      %p266 = scmp.eq.s32.totalorder %s32, 0
      %p267 = por %p265, %p266
      %p268 = scmp.ne.s32.totalorder %s254, %s255
      %p269 = scmp.eq.s32.totalorder %s33, 1
      %p270 = por %p268, %p269
      %p272 = scmp.ne.s32.totalorder %s255, %s271
      %p273 = scmp.eq.s32.totalorder %s33, 0
      %p274 = por %p272, %p273
      %s275 = ssub.s32 %s27, %s34
      %p276 = scmp.eq.s32.totalorder %s275, 0
      %s278 = sadd.s32 %s277, 1
      %s279 = scalar_select %p276, %s277, %s278
      %p282 = pneg %p276
      %p283 = scmp.eq.s32.totalorder %s27, 1
      %p284 = por %p282, %p283
      %p285 = scmp.ne.s32.totalorder %s277, %s280
      %p286 = scmp.eq.s32.totalorder %s27, 0
      %p287 = por %p285, %p286
      %p288 = scmp.ne.s32.totalorder %s277, %s280
      %p289 = scmp.eq.s32.totalorder %s32, 1
      %p290 = por %p288, %p289
      %p291 = scmp.ne.s32.totalorder %s280, %s281
      %p292 = scmp.eq.s32.totalorder %s32, 0
      %p293 = por %p291, %p292
      %p294 = scmp.ne.s32.totalorder %s280, %s281
      %p295 = scmp.eq.s32.totalorder %s33, 1
      %p296 = por %p294, %p295
      %p298 = scmp.ne.s32.totalorder %s281, %s297
      %p299 = scmp.eq.s32.totalorder %s33, 0
      %p300 = por %p298, %p299
      %s302 = sadd.s32 %s301, 1
      %p305 = scmp.eq.s32.totalorder %s27, 1
      %p306 = scmp.ne.s32.totalorder %s301, %s303
      %p307 = scmp.eq.s32.totalorder %s27, 0
      %p308 = por %p306, %p307
      %p309 = scmp.ne.s32.totalorder %s301, %s303
      %p310 = scmp.eq.s32.totalorder %s32, 1
      %p311 = por %p309, %p310
      %p312 = scmp.ne.s32.totalorder %s303, %s304
      %p313 = scmp.eq.s32.totalorder %s32, 0
      %p314 = por %p312, %p313
      %p315 = scmp.ne.s32.totalorder %s303, %s304
      %p316 = scmp.eq.s32.totalorder %s33, 1
      %p317 = por %p315, %p316
      %p319 = scmp.ne.s32.totalorder %s304, %s318
      %p320 = scmp.eq.s32.totalorder %s33, 0
      %p321 = por %p319, %p320
      %s323 = sadd.s32 %s322, 1
      %p326 = scmp.eq.s32.totalorder %s27, 1
      %p327 = scmp.ne.s32.totalorder %s322, %s324
      %p328 = scmp.eq.s32.totalorder %s27, 0
      %p329 = por %p327, %p328
      %p330 = scmp.ne.s32.totalorder %s322, %s324
      %p331 = scmp.eq.s32.totalorder %s32, 1
      %p332 = por %p330, %p331
      %p333 = scmp.ne.s32.totalorder %s324, %s325
      %p334 = scmp.eq.s32.totalorder %s32, 0
      %p335 = por %p333, %p334
      %p336 = scmp.ne.s32.totalorder %s324, %s325
      %p337 = scmp.eq.s32.totalorder %s33, 1
      %p338 = por %p336, %p337
      %p340 = scmp.ne.s32.totalorder %s325, %s339
      %p341 = scmp.eq.s32.totalorder %s33, 0
      %p342 = por %p340, %p341
      %s344 = sadd.s32 %s343, 1
      %p347 = scmp.eq.s32.totalorder %s27, 1
      %p348 = scmp.ne.s32.totalorder %s343, %s345
      %p349 = scmp.eq.s32.totalorder %s27, 0
      %p350 = por %p348, %p349
      %p351 = scmp.ne.s32.totalorder %s343, %s345
      %p352 = scmp.eq.s32.totalorder %s32, 1
      %p353 = por %p351, %p352
      %p354 = scmp.ne.s32.totalorder %s345, %s346
      %p355 = scmp.eq.s32.totalorder %s32, 0
      %p356 = por %p354, %p355
      %p357 = scmp.ne.s32.totalorder %s345, %s346
      %p358 = scmp.eq.s32.totalorder %s33, 1
      %p359 = por %p357, %p358
      %p361 = scmp.ne.s32.totalorder %s346, %s360
      %p362 = scmp.eq.s32.totalorder %s33, 0
      %p363 = por %p361, %p362
      %p364 = scmp.le.s32.totalorder 1, %s27
      %p365 = scmp.lt.s32.totalorder %s27, 3
      %p366 = pnand %p364, %p365
      %p367 = pneg %p366
      // Predicated region
      $region9: #{clip_caption_forward.3} parent=5 // pred_check
        _
      $region10: #{clip_caption_forward.3} parent=5 // pred_check_branch
        %369 = sbr.rel (%p366) target = $region12
      $region11: #{clip_caption_forward.3} parent=5 // pred_region
        %s370 = ssub.s32 %s27, 1
        // Predicated region
        $region13: #{clip_caption_forward.3} parent=11 // pred_check
          %p371 = pneg %p48
        $region14: #{clip_caption_forward.3} parent=11 // pred_check_branch
          %373 = sbr.rel (%p371) target = $region16
        $region15: #{clip_caption_forward.3} parent=11 // pred_region
          _
        $region16: #{clip_caption_forward.3} parent=11 // pred_fallthru
          _
        // Predicated region
        $region17: #{clip_caption_forward.3} parent=11 // pred_check
          %p374 = pneg %p69
        $region18: #{clip_caption_forward.3} parent=11 // pred_check_branch
          %376 = sbr.rel (%p374) target = $region20
        $region19: #{clip_caption_forward.3} parent=11 // pred_region
          _
        $region20: #{clip_caption_forward.3} parent=11 // pred_fallthru
          _
        // Predicated region
        $region21: #{clip_caption_forward.3} parent=11 // pred_check
          %p377 = pneg %p90
        $region22: #{clip_caption_forward.3} parent=11 // pred_check_branch
          %379 = sbr.rel (%p377) target = $region24
        $region23: #{clip_caption_forward.3} parent=11 // pred_region
          _
        $region24: #{clip_caption_forward.3} parent=11 // pred_fallthru
          _
        // Predicated region
        $region25: #{clip_caption_forward.3} parent=11 // pred_check
          %p380 = pneg %p111
        $region26: #{clip_caption_forward.3} parent=11 // pred_check_branch
          %382 = sbr.rel (%p380) target = $region28
        $region27: #{clip_caption_forward.3} parent=11 // pred_region
          _
        $region28: #{clip_caption_forward.3} parent=11 // pred_fallthru
          _
        // Predicated region
        $region29: #{clip_caption_forward.3} parent=11 // pred_check
          %p383 = pneg %p314
        $region30: #{clip_caption_forward.3} parent=11 // pred_check_branch
          %385 = sbr.rel (%p383) target = $region32
        $region31: #{clip_caption_forward.3} parent=11 // pred_region
          _
        $region32: #{clip_caption_forward.3} parent=11 // pred_fallthru
          _
        // Predicated region
        $region33: #{clip_caption_forward.3} parent=11 // pred_check
          %p386 = pneg %p335
        $region34: #{clip_caption_forward.3} parent=11 // pred_check_branch
          %388 = sbr.rel (%p386) target = $region36
        $region35: #{clip_caption_forward.3} parent=11 // pred_region
          _
        $region36: #{clip_caption_forward.3} parent=11 // pred_fallthru
          _
      $region12: #{clip_caption_forward.3} parent=5 // pred_fallthru
        _
      %p389 = scmp.lt.s32.totalorder %s27, 2
      // Predicated region
      $region37: #{clip_caption_forward.3} parent=5 // pred_check
        %p390 = pneg %p389
      $region38: #{clip_caption_forward.3} parent=5 // pred_check_branch
        %392 = sbr.rel (%p390) target = $region40
      $region39: #{clip_caption_forward.3} parent=5 // pred_region
        // Predicated region
        $region41: #{clip_caption_forward.3} parent=39 // pred_check
          %p393 = pneg %p131
        $region42: #{clip_caption_forward.3} parent=39 // pred_check_branch
          %395 = sbr.rel (%p393) target = $region44
        $region43: #{clip_caption_forward.3} parent=39 // pred_region
          %p396 = scmp.lt.s32.totalorder %s27, 1
          %s397 = scalar_select %p396, %s27, 1
          %s398 = smul.addr %s397, 16
          %s399 = smul.addr %s398, 4
          %s400 = scalar_lea.vmem %s5, %s399
        $region44: #{clip_caption_forward.3} parent=39 // pred_fallthru
          _
        // Predicated region
        $region45: #{clip_caption_forward.3} parent=39 // pred_check
          %p401 = pneg %p157
        $region46: #{clip_caption_forward.3} parent=39 // pred_check_branch
          %403 = sbr.rel (%p401) target = $region48
        $region47: #{clip_caption_forward.3} parent=39 // pred_region
          %p404 = scmp.lt.s32.totalorder %s27, 1
          %s405 = scalar_select %p404, %s27, 1
          %s406 = smul.addr %s405, 2
          %s407 = scalar_lea.vmem %s6, %s406
        $region48: #{clip_caption_forward.3} parent=39 // pred_fallthru
          _
        // Predicated region
        $region49: #{clip_caption_forward.3} parent=39 // pred_check
          %p408 = pneg %p183
        $region50: #{clip_caption_forward.3} parent=39 // pred_check_branch
          %410 = sbr.rel (%p408) target = $region52
        $region51: #{clip_caption_forward.3} parent=39 // pred_region
          %p411 = scmp.lt.s32.totalorder %s27, 1
          %s412 = scalar_select %p411, %s27, 1
          %s413 = smul.addr %s412, 8
          %s414 = smul.addr %s413, 4
          %s415 = scalar_lea.vmem %s7, %s414
        $region52: #{clip_caption_forward.3} parent=39 // pred_fallthru
          _
        // Predicated region
        $region53: #{clip_caption_forward.3} parent=39 // pred_check
          %p416 = pneg %p209
        $region54: #{clip_caption_forward.3} parent=39 // pred_check_branch
          %418 = sbr.rel (%p416) target = $region56
        $region55: #{clip_caption_forward.3} parent=39 // pred_region
          %p419 = scmp.lt.s32.totalorder %s27, 1
          %s420 = scalar_select %p419, %s27, 1
          %s421 = smul.addr %s420, 8
          %s422 = scalar_lea.vmem %s8, %s421
        $region56: #{clip_caption_forward.3} parent=39 // pred_fallthru
          _
        // Predicated region
        $region57: #{clip_caption_forward.3} parent=39 // pred_check
          %p423 = pneg %p235
        $region58: #{clip_caption_forward.3} parent=39 // pred_check_branch
          %425 = sbr.rel (%p423) target = $region60
        $region59: #{clip_caption_forward.3} parent=39 // pred_region
          %p426 = scmp.lt.s32.totalorder %s27, 1
          %s427 = scalar_select %p426, %s27, 1
          %s428 = smul.addr %s427, 16
          %s429 = smul.addr %s428, 4
          %s430 = scalar_lea.vmem %s9, %s429
        $region60: #{clip_caption_forward.3} parent=39 // pred_fallthru
          _
        // Predicated region
        $region61: #{clip_caption_forward.3} parent=39 // pred_check
          %p431 = pneg %p261
        $region62: #{clip_caption_forward.3} parent=39 // pred_check_branch
          %433 = sbr.rel (%p431) target = $region64
        $region63: #{clip_caption_forward.3} parent=39 // pred_region
          %p434 = scmp.lt.s32.totalorder %s27, 1
          %s435 = scalar_select %p434, %s27, 1
          %s436 = smul.addr %s435, 2
          %s437 = scalar_lea.vmem %s10, %s436
        $region64: #{clip_caption_forward.3} parent=39 // pred_fallthru
          _
        // Predicated region
        $region65: #{clip_caption_forward.3} parent=39 // pred_check
          %p438 = pneg %p287
        $region66: #{clip_caption_forward.3} parent=39 // pred_check_branch
          %440 = sbr.rel (%p438) target = $region68
        $region67: #{clip_caption_forward.3} parent=39 // pred_region
          %p441 = scmp.lt.s32.totalorder %s27, 1
          %s442 = scalar_select %p441, %s27, 1
          %s443 = smul.addr %s442, 32
          %s444 = smul.addr %s443, 4
          %s445 = scalar_lea.vmem %s11, %s444
        $region68: #{clip_caption_forward.3} parent=39 // pred_fallthru
          _
      $region40: #{clip_caption_forward.3} parent=5 // pred_fallthru
        _
      %p446 = scmp.le.s32.totalorder 1, %s27
      %p447 = scmp.lt.s32.totalorder %s27, 3
      %p448 = pnand %p446, %p447
      %p449 = pneg %p448
      // Predicated region
      $region69: #{clip_caption_forward.3} parent=5 // pred_check
        _
      $region70: #{clip_caption_forward.3} parent=5 // pred_check_branch
        %451 = sbr.rel (%p448) target = $region72
      $region71: #{clip_caption_forward.3} parent=5 // pred_region
        %s452 = ssub.s32 %s27, 1
        %p453 = pneg %p48
        %p454 = pneg %p45
        %p455 = pneg %p69
        %p456 = pneg %p66
        %p457 = pneg %p90
        %p458 = pneg %p87
        %p459 = pneg %p111
        %p460 = pneg %p108
        %p461 = scmp.lt.s32.totalorder %s32, 1
        %s462 = scalar_select %p461, %s32, 1
        %s463 = smul.addr %s462, 16
        %s464 = smul.addr %s463, 4
        %s465 = scalar_lea.vmem %s5, %s464
        %p466 = pneg %p137
        %p467 = pneg %p134
        %p468 = scmp.lt.s32.totalorder %s32, 1
        %s469 = scalar_select %p468, %s32, 1
        %s470 = smul.addr %s469, 2
        %s471 = scalar_lea.vmem %s6, %s470
        %p472 = pneg %p163
        %p473 = pneg %p160
        %p474 = scmp.lt.s32.totalorder %s32, 1
        %s475 = scalar_select %p474, %s32, 1
        %s476 = smul.addr %s475, 8
        %s477 = smul.addr %s476, 4
        %s478 = scalar_lea.vmem %s7, %s477
        %p479 = pneg %p189
        %p480 = pneg %p186
        %p481 = scmp.lt.s32.totalorder %s32, 1
        %s482 = scalar_select %p481, %s32, 1
        %s483 = smul.addr %s482, 8
        %s484 = scalar_lea.vmem %s8, %s483
        %p485 = pneg %p215
        %p486 = pneg %p212
        %p487 = scmp.lt.s32.totalorder %s32, 1
        %s488 = scalar_select %p487, %s32, 1
        %s489 = smul.addr %s488, 16
        %s490 = smul.addr %s489, 4
        %s491 = scalar_lea.vmem %s9, %s490
        %p492 = pneg %p241
        %p493 = pneg %p238
        %p494 = scmp.lt.s32.totalorder %s32, 1
        %s495 = scalar_select %p494, %s32, 1
        %s496 = smul.addr %s495, 2
        %s497 = scalar_lea.vmem %s10, %s496
        %p498 = pneg %p267
        %p499 = pneg %p264
        %p500 = scmp.lt.s32.totalorder %s32, 1
        %s501 = scalar_select %p500, %s32, 1
        %s502 = smul.addr %s501, 32
        %s503 = smul.addr %s502, 4
        %s504 = scalar_lea.vmem %s11, %s503
        %p505 = pneg %p293
        %p506 = pneg %p290
        %p507 = pneg %p314
        %p508 = pneg %p311
        %p509 = pneg %p335
        %p510 = pneg %p332
        %p511 = pneg %p356
        %p512 = pneg %p353
        %p513 = scmp.lt.s32.totalorder %s32, 1
        %s514 = scalar_select %p513, %s32, 1
        %s515 = smul.addr %s514, 16
        %s516 = smul.addr %s515, 4
        %s517 = scalar_lea.vmem %s5, %s516
        %p518 = scmp.lt.s32.totalorder %s32, 1
        %s519 = scalar_select %p518, %s32, 1
        %s520 = smul.addr %s519, 2
        %s521 = scalar_lea.vmem %s6, %s520
        %p522 = scmp.lt.s32.totalorder %s32, 1
        %s523 = scalar_select %p522, %s32, 1
        %s524 = smul.addr %s523, 8
        %s525 = smul.addr %s524, 4
        %s526 = scalar_lea.vmem %s7, %s525
        %p527 = scmp.lt.s32.totalorder %s32, 1
        %s528 = scalar_select %p527, %s32, 1
        %s529 = smul.addr %s528, 8
        %s530 = scalar_lea.vmem %s8, %s529
        %p531 = scmp.lt.s32.totalorder %s32, 1
        %s532 = scalar_select %p531, %s32, 1
        %s533 = smul.addr %s532, 16
        %s534 = smul.addr %s533, 4
        %s535 = scalar_lea.vmem %s9, %s534
        %p536 = scmp.lt.s32.totalorder %s32, 1
        %s537 = scalar_select %p536, %s32, 1
        %s538 = smul.addr %s537, 2
        %s539 = scalar_lea.vmem %s10, %s538
        %p540 = scmp.lt.s32.totalorder %s32, 1
        %s541 = scalar_select %p540, %s32, 1
        %s542 = smul.addr %s541, 32
        %s543 = smul.addr %s542, 4
        %s544 = scalar_lea.vmem %s11, %s543
        %p546 = scmp.eq.s32.totalorder %s32, 0
        // Predicated region
        $region73: #{clip_caption_forward.3} parent=71 // pred_check
          %p547 = pneg %p546
        $region74: #{clip_caption_forward.3} parent=71 // pred_check_branch
          %549 = sbr.rel (%p547) target = $region76
        $region75: #{clip_caption_forward.3} parent=71 // pred_region
          %v550 = vld [vmem:[%s1] sm:$0xff]
          %s551 = sld [smem:[#allocation4]]
          %s552 = scalar_lea.vmem %s2, %s551
          %v553 = vld [vmem:[%s552] sm:$0x1]
          %s554 = sld [smem:[#allocation4 + $0x1]]
          %s555 = scalar_lea.vmem %s2, %s554
          %v556 = vld [vmem:[%s555] sm:$0x1]
          %s557 = sld [smem:[#allocation4 + $0x2]]
          %s558 = scalar_lea.vmem %s2, %s557
          %v559 = vld [vmem:[%s558] sm:$0x1]
          %s560 = sld [smem:[#allocation4 + $0x3]]
          %s561 = scalar_lea.vmem %s2, %s560
          %v562 = vld [vmem:[%s561] sm:$0x1]
          %s563 = sld [smem:[#allocation4 + $0x4]]
          %s564 = scalar_lea.vmem %s2, %s563
          %v565 = vld [vmem:[%s564] sm:$0x1]
          %s566 = sld [smem:[#allocation4 + $0x5]]
          %s567 = scalar_lea.vmem %s2, %s566
          %v568 = vld [vmem:[%s567] sm:$0x1]
          %s569 = sld [smem:[#allocation4 + $0x6]]
          %s570 = scalar_lea.vmem %s2, %s569
          %v571 = vld [vmem:[%s570] sm:$0x1]
          %s572 = sld [smem:[#allocation4 + $0x7]]
          %s573 = scalar_lea.vmem %s2, %s572
          %v574 = vld [vmem:[%s573] sm:$0x1]
          %s575 = sld [smem:[#allocation4 + $0x8]]
          %s576 = scalar_lea.vmem %s2, %s575
          %v577 = vld [vmem:[%s576] sm:$0x1]
          %s578 = sld [smem:[#allocation4 + $0x9]]
          %s579 = scalar_lea.vmem %s2, %s578
          %v580 = vld [vmem:[%s579] sm:$0x1]
          %s581 = sld [smem:[#allocation4 + $0xa]]
          %s582 = scalar_lea.vmem %s2, %s581
          %v583 = vld [vmem:[%s582] sm:$0x1]
          %s584 = sld [smem:[#allocation4 + $0xb]]
          %s585 = scalar_lea.vmem %s2, %s584
          %v586 = vld [vmem:[%s585] sm:$0x1]
          %s587 = sld [smem:[#allocation4 + $0xc]]
          %s588 = scalar_lea.vmem %s2, %s587
          %v589 = vld [vmem:[%s588] sm:$0x1]
          %s590 = sld [smem:[#allocation4 + $0xd]]
          %s591 = scalar_lea.vmem %s2, %s590
          %v592 = vld [vmem:[%s591] sm:$0x1]
          %s593 = sld [smem:[#allocation4 + $0xe]]
          %s594 = scalar_lea.vmem %s2, %s593
          %v595 = vld [vmem:[%s594] sm:$0x1]
          %s596 = sld [smem:[#allocation4 + $0xf]]
          %s597 = scalar_lea.vmem %s2, %s596
          %v598 = vld [vmem:[%s597] sm:$0x1]
          %v600 = vrot.slane %v556, 7
          %v603 = vrot.slane %v559, 6
          %v606 = vrot.slane %v562, 5
          %v609 = vrot.slane %v565, 4
          %v612 = vrot.slane %v568, 3
          %v615 = vrot.slane %v571, 2
          %v618 = vrot.slane %v574, 1
          %v621 = vrot.slane %v580, 7
          %v624 = vrot.slane %v583, 6
          %v627 = vrot.slane %v586, 5
          %v630 = vrot.slane %v589, 4
          %v633 = vrot.slane %v592, 3
          %v636 = vrot.slane %v595, 2
          %vm638 = vcmask 1040384
          %v639 = vsel %vm638, %v553, %v600
          %vm640 = vcmask 1041408
          %v641 = vsel %vm640, %v639, %v603
          %vm642 = vcmask 1042432
          %v643 = vsel %vm642, %v641, %v606
          %vm644 = vcmask 1043456
          %v645 = vsel %vm644, %v643, %v609
          %vm646 = vcmask 1044480
          %v647 = vsel %vm646, %v645, %v612
          %vm648 = vcmask 1045504
          %v649 = vsel %vm648, %v647, %v615
          %vm650 = vcmask 1046528
          %v651 = vsel %vm650, %v649, %v618
          %v652 = vsel %vm638, %v577, %v621
          %v653 = vsel %vm640, %v652, %v624
          %v654 = vsel %vm642, %v653, %v627
          %v655 = vsel %vm644, %v654, %v630
          %v656 = vsel %vm646, %v655, %v633
          %v657 = vsel %vm648, %v656, %v636
          %v659 = vrot.slane %v598, 1
          %v661 = vsel %vm650, %v657, %v659
          %v662 = vld [vmem:[%s3] sm:$0xff]
          %v663 = vld [vmem:[%s3 + $0x8] sm:$0xff]
          %v664 = vld [vmem:[%s3 + $0x10] sm:$0xff]
          %v665 = vadd.f32 %v550, %v662
          %v666 = vadd.f32 %v651, %v663
          %v667 = vadd.f32 %v661, %v664
          %vm668 = vcmask 523264
          %669 = vst.msk [vmem:[#allocation2] sm:$0xff] %vm668, %v665
          %670 = vst.msk [vmem:[#allocation2 + $0x8] sm:$0xff] %vm668, %v666
          %671 = vst.msk [vmem:[#allocation2 + $0x10] sm:$0xff] %vm668, %v667
        $region76: #{clip_caption_forward.3} parent=71 // pred_fallthru
          _
        %v672 = vld [vmem:[#allocation2] sm:$0xff]
        %v673 = vld [vmem:[#allocation2 + $0x8] sm:$0xff]
        %v674 = vld [vmem:[#allocation2 + $0x10] sm:$0xff]
        %v675 = vld [vmem:[%s4] sm:$0xff]
        %v676 = vld [vmem:[%s4 + $0x8] sm:$0xff]
        %v677 = vld [vmem:[%s4 + $0x10] sm:$0xff]
        %v678 = vld [vmem:[%s4 + $0x18] sm:$0xff]
        %v679 = vld [vmem:[%s4 + $0x20] sm:$0xff]
        %v680 = vld [vmem:[%s4 + $0x28] sm:$0xff]
        %v681 = vld [vmem:[%s4 + $0x30] sm:$0xff]
        %v682 = vld [vmem:[%s4 + $0x38] sm:$0xff]
        %v683 = vld [vmem:[%s4 + $0x40] sm:$0xff]
        %v684 = vld [vmem:[%s4 + $0x48] sm:$0xff]
        %v685 = vld [vmem:[%s4 + $0x50] sm:$0xff]
        %v686 = vld [vmem:[%s4 + $0x58] sm:$0xff]
        %v687 = vld [vmem:[%s517] sm:$0xff]
        %v688 = vld [vmem:[%s517 + $0x8] sm:$0xff]
        %v689 = vld [vmem:[%s517 + $0x10] sm:$0xff]
        %v690 = vld [vmem:[%s517 + $0x18] sm:$0xff]
        %v691 = vld [vmem:[%s517 + $0x20] sm:$0xff]
        %v692 = vld [vmem:[%s517 + $0x28] sm:$0xff]
        %v693 = vld [vmem:[%s517 + $0x30] sm:$0xff]
        %v694 = vld [vmem:[%s517 + $0x38] sm:$0xff]
        %v695 = vld [vmem:[%s521] sm:$0x3]
        %v696 = vld [vmem:[%s526] sm:$0xf]
        %v697 = vld [vmem:[%s526 + $0x4] sm:$0xf]
        %v698 = vld [vmem:[%s526 + $0x8] sm:$0xf]
        %v699 = vld [vmem:[%s526 + $0xc] sm:$0xf]
        %v700 = vld [vmem:[%s526 + $0x10] sm:$0xf]
        %v701 = vld [vmem:[%s526 + $0x14] sm:$0xf]
        %v702 = vld [vmem:[%s526 + $0x18] sm:$0xf]
        %v703 = vld [vmem:[%s526 + $0x1c] sm:$0xf]
        %v704 = vld [vmem:[%s530] sm:$0x3f]
        %v705 = vld [vmem:[%s535] sm:$0xff]
        %v706 = vld [vmem:[%s535 + $0x8] sm:$0xff]
        %v707 = vld [vmem:[%s535 + $0x10] sm:$0xff]
        %v708 = vld [vmem:[%s535 + $0x18] sm:$0xff]
        %v709 = vld [vmem:[%s535 + $0x20] sm:$0xff]
        %v710 = vld [vmem:[%s535 + $0x28] sm:$0xff]
        %v711 = vld [vmem:[%s535 + $0x30] sm:$0xff]
        %v712 = vld [vmem:[%s535 + $0x38] sm:$0xff]
        %v713 = vld [vmem:[%s539] sm:$0x3]
        %v714 = vld [vmem:[%s544] sm:$0xf]
        %v715 = vld [vmem:[%s544 + $0x4] sm:$0xf]
        %v716 = vld [vmem:[%s544 + $0x8] sm:$0xf]
        %v717 = vld [vmem:[%s544 + $0xc] sm:$0xf]
        %v718 = vld [vmem:[%s544 + $0x10] sm:$0xf]
        %v719 = vld [vmem:[%s544 + $0x14] sm:$0xf]
        %v720 = vld [vmem:[%s544 + $0x18] sm:$0xf]
        %v721 = vld [vmem:[%s544 + $0x1c] sm:$0xf]
        %v722 = vld [vmem:[%s544 + $0x20] sm:$0xf]
        %v723 = vld [vmem:[%s544 + $0x24] sm:$0xf]
        %v724 = vld [vmem:[%s544 + $0x28] sm:$0xf]
        %v725 = vld [vmem:[%s544 + $0x2c] sm:$0xf]
        %v726 = vld [vmem:[%s544 + $0x30] sm:$0xf]
        %v727 = vld [vmem:[%s544 + $0x34] sm:$0xf]
        %v728 = vld [vmem:[%s544 + $0x38] sm:$0xf]
        %v729 = vld [vmem:[%s544 + $0x3c] sm:$0xf]
        %v730 = vld [vmem:[%s544 + $0x40] sm:$0xf]
        %v731 = vld [vmem:[%s544 + $0x44] sm:$0xf]
        %v732 = vld [vmem:[%s544 + $0x48] sm:$0xf]
        %v733 = vld [vmem:[%s544 + $0x4c] sm:$0xf]
        %v734 = vld [vmem:[%s544 + $0x50] sm:$0xf]
        %v735 = vld [vmem:[%s544 + $0x54] sm:$0xf]
        %v736 = vld [vmem:[%s544 + $0x58] sm:$0xf]
        %v737 = vld [vmem:[%s544 + $0x5c] sm:$0xf]
        %v738 = vld [vmem:[%s544 + $0x60] sm:$0xf]
        %v739 = vld [vmem:[%s544 + $0x64] sm:$0xf]
        %v740 = vld [vmem:[%s544 + $0x68] sm:$0xf]
        %v741 = vld [vmem:[%s544 + $0x6c] sm:$0xf]
        %v742 = vld [vmem:[%s544 + $0x70] sm:$0xf]
        %v743 = vld [vmem:[%s544 + $0x74] sm:$0xf]
        %v744 = vld [vmem:[%s544 + $0x78] sm:$0xf]
        %v745 = vld [vmem:[%s544 + $0x7c] sm:$0xf]
        %vm746 = vcmask 523264
        %v747 = vsel %vm746, %v672, 0.0
        %748 = vadd.xlane.f32.xlu0 %v747
        %v749 = vpop.xlane.xlu0 %748
        %v750 = vsel %vm746, %v673, 0.0
        %751 = vadd.xlane.f32.xlu0 %v750
        %v752 = vpop.xlane.xlu0 %751
        %v753 = vsel %vm746, %v674, 0.0
        %754 = vadd.xlane.f32.xlu0 %v753
        %v755 = vpop.xlane.xlu0 %754
        %v756 = vrcp.pop 64.0
        %v757 = vmul.f32 %v749, %v756
        %v758 = vmul.f32 %v752, %v756
        %v759 = vmul.f32 %v755, %v756
        %v760 = vsub.f32 %v672, %v757
        %v761 = vsub.f32 %v673, %v758
        %v762 = vsub.f32 %v674, %v759
        %v763 = vmul.f32 %v760, %v760
        %v764 = vmul.f32 %v761, %v761
        %v765 = vmul.f32 %v762, %v762
        %v766 = vsel %vm746, %v763, 0.0
        %767 = vadd.xlane.f32.xlu0 %v766
        %v768 = vpop.xlane.xlu0 %767
        %v769 = vsel %vm746, %v764, 0.0
        %770 = vadd.xlane.f32.xlu0 %v769
        %v771 = vpop.xlane.xlu0 %770
        %v772 = vsel %vm746, %v765, 0.0
        %773 = vadd.xlane.f32.xlu0 %v772
        %v774 = vpop.xlane.xlu0 %773
        %v775 = vmul.f32 %v768, %v756
        %v776 = vmul.f32 %v771, %v756
        %v777 = vmul.f32 %v774, %v756
        %v778 = vadd.f32 %v775, 1e-05
        %v779 = vadd.f32 %v776, 1e-05
        %v780 = vadd.f32 %v777, 1e-05
        %v781 = vrsqrt.pop %v778
        %v782 = vrsqrt.pop %v779
        %v783 = vrsqrt.pop %v780
        %v784 = vmul.f32 %v760, %v781
        %v785 = vmul.f32 %v761, %v782
        %v786 = vmul.f32 %v762, %v783
        %v787 = vlaneseq
        %v788 = vshrl.u32 %v787, 7
        %v789 = vsub.s32 0, %v788
        %v790 = vrot.slane %v704, %v789
        %v791 = vmul.f32 %v784, %v790
        %v792 = vmul.f32 %v785, %v790
        %v793 = vmul.f32 %v786, %v790
        %v794 = vlaneseq
        %v795 = vshrl.u32 %v794, 7
        %v796 = vsub.s32 1, %v795
        %v797 = vrot.slane %v704, %v796
        %v798 = vadd.f32 %v791, %v797
        %v799 = vadd.f32 %v792, %v797
        %v800 = vadd.f32 %v793, %v797
        %v801 = vpack.c.bf16 %v799, %v798
        %v802 = vpack.c.bf16 %v800, %v800
        %v804 = vlaneseq
        %v805 = vshrl.u32 %v804, 7
        %v806 = vsub.s32 0, %v805
        %v807 = vrot.slane %v695, %v806
        %v808 = vlaneseq
        %v809 = vshrl.u32 %v808, 7
        %v810 = vsub.s32 1, %v809
        %v811 = vrot.slane %v695, %v810
        %v822 = vunpack.c.l.b16 %v687
        %v823 = vunpack.c.h.b16 %v687
        %v824 = vunpack.c.l.b16 %v688
        %v825 = vunpack.c.h.b16 %v688
        %v826 = vunpack.c.l.b16 %v689
        %v827 = vunpack.c.h.b16 %v689
        %v828 = vunpack.c.l.b16 %v690
        %v829 = vunpack.c.h.b16 %v690
        %v830 = vunpack.c.l.b16 %v691
        %v831 = vunpack.c.h.b16 %v691
        %v832 = vunpack.c.l.b16 %v692
        %v833 = vunpack.c.h.b16 %v692
        %v834 = vunpack.c.l.b16 %v693
        %v835 = vunpack.c.h.b16 %v693
        %v836 = vunpack.c.l.b16 %v694
        %v837 = vunpack.c.h.b16 %v694
        %v838 = vpack.c.b16 %v824, %v822
        %v839 = vpack.c.b16 %v825, %v823
        %v840 = vpack.c.b16 %v828, %v826
        %v841 = vpack.c.b16 %v829, %v827
        %v842 = vpack.c.b16 %v832, %v830
        %v843 = vpack.c.b16 %v833, %v831
        %v844 = vpack.c.b16 %v836, %v834
        %v845 = vpack.c.b16 %v837, %v835
        %v855 = vsel %vm746, %v801, 0
        %v858 = vsel %vm746, %v802, 0
        %860 = vmatprep.subr.bf16.mxu0 %v839
        %861 = vmatpush1.bf16.msra.mxu0 %v838
        %862 = vmatprep.subr.bf16.mxu0 %v841
        %863 = vmatpush1.bf16.msra.mxu0 %v840
        %864 = vmatprep.subr.bf16.mxu0 %v843
        %865 = vmatpush1.bf16.msra.mxu0 %v842
        %866 = vmatprep.subr.bf16.mxu0 %v845
        %867 = vmatpush1.bf16.msra.mxu0 %v844
        %868 = vmatprep.subr.bf16.mxu0 0
        %869 = vmatpush1.bf16.msra.mxu0 0
        %870 = vmatprep.subr.bf16.mxu0 0
        %871 = vmatpush1.bf16.msra.mxu0 0
        %872 = vmatprep.subr.bf16.mxu0 0
        %873 = vmatpush1.bf16.msra.mxu0 0
        %874 = vmatprep.subr.bf16.mxu0 0
        %875 = vmatpush1.bf16.msra.mxu0 0
        %876 = vmatprep.subr.bf16.mxu0 0
        %877 = vmatpush1.bf16.msra.mxu0 0
        %878 = vmatprep.subr.bf16.mxu0 0
        %879 = vmatpush1.bf16.msra.mxu0 0
        %880 = vmatprep.subr.bf16.mxu0 0
        %881 = vmatpush1.bf16.msra.mxu0 0
        %882 = vmatprep.subr.bf16.mxu0 0
        %883 = vmatpush1.bf16.msra.mxu0 0
        %884 = vmatprep.subr.bf16.mxu0 0
        %885 = vmatpush1.bf16.msra.mxu0 0
        %886 = vmatprep.subr.bf16.mxu0 0
        %887 = vmatpush1.bf16.msra.mxu0 0
        %888 = vmatprep.subr.bf16.mxu0 0
        %889 = vmatpush1.bf16.msra.mxu0 0
        %890 = vmatprep.subr.bf16.mxu0 0
        %891 = vmatpush1.bf16.msra.mxu0 0
        %892 = vmatprep.mubr.bf16.mxu0 0
        %893 = vmatmul.mubr.bf16.gmra.mrb[0].mxu0 %v855
        %v894 = vpop.f32.mrb[0].mxu0
        %v895 = vadd.f32 %v807, %v894
        %v896 = vpop.f32.mrb[0].mxu0
        %v897 = vadd.f32 %v811, %v896
        %v898 = vpop.f32.mrb[0].mxu0
        %v899 = vadd.f32 %v807, %v898
        %v900 = vpop.f32.mrb[0].mxu0
        %v901 = vadd.f32 %v811, %v900
        %902 = vmatprep.mubr.bf16.mxu0 0
        %903 = vmatmul.mubr.bf16.gmra.mrb[0].mxu0 %v858
        %v904 = vpop.f32.mrb[0].mxu0
        %v905 = vadd.f32 %v807, %v904
        %v906 = vpop.f32.mrb[0].mxu0
        %v907 = vadd.f32 %v811, %v906
        %v908 = vpop.f32.mrb[0].mxu0
        %v909 = vpop.f32.mrb[0].mxu0
        %910 = vdwg.mxu0
        %v911 = vmul.f32 %v895, 0.25
        %v912 = vmul.f32 %v899, 0.25
        %v913 = vmul.f32 %v905, 0.25
        %v914 = vlaneseq
        %v915 = vand.u32 %v914, 127
        %vm916 = vcmp.ge.s32.totalorder %v915, 0
        %vm917 = vcmp.lt.s32.totalorder %v915, 16
        %vm918 = vmand %vm916, %vm917
        %v919 = vsel %vm918, 1, 0
        %v920 = vcvt.s32.f32 %v919
        %vm921 = vcmp.ge.s32.totalorder %v915, 16
        %vm922 = vcmp.lt.s32.totalorder %v915, 32
        %vm923 = vmand %vm921, %vm922
        %v924 = vsel %vm923, 1, 0
        %v925 = vcvt.s32.f32 %v924
        %vm926 = vcmp.ge.s32.totalorder %v915, 32
        %vm927 = vcmp.lt.s32.totalorder %v915, 48
        %vm928 = vmand %vm926, %vm927
        %v929 = vsel %vm928, 1, 0
        %v930 = vcvt.s32.f32 %v929
        %vm931 = vcmp.ge.s32.totalorder %v915, 48
        %vm932 = vcmp.lt.s32.totalorder %v915, 64
        %vm933 = vmand %vm931, %vm932
        %v934 = vsel %vm933, 1, 0
        %v935 = vcvt.s32.f32 %v934
        %v936 = vmul.f32 %v911, %v920
        %v937 = vmul.f32 %v912, %v920
        %v938 = vmul.f32 %v913, %v920
        %v939 = vmul.f32 %v911, %v925
        %v940 = vmul.f32 %v912, %v925
        %v941 = vmul.f32 %v913, %v925
        %v942 = vmul.f32 %v911, %v930
        %v943 = vmul.f32 %v912, %v930
        %v944 = vmul.f32 %v913, %v930
        %v945 = vmul.f32 %v911, %v935
        %v946 = vmul.f32 %v912, %v935
        %v947 = vmul.f32 %v913, %v935
        %v948 = vpack.c.bf16 %v937, %v936
        %v949 = vpack.c.bf16 %v939, %v938
        %v950 = vpack.c.bf16 %v941, %v940
        %v951 = vpack.c.bf16 %v943, %v942
        %v952 = vpack.c.bf16 %v945, %v944
        %v953 = vpack.c.bf16 %v947, %v946
        %v954 = vpack.c.bf16 %v899, %v895
        %v955 = vpack.c.bf16 %v905, %v905
        %958 = vrot.lane.b32.xlu0 %v954, 64
        %v959 = vpop.permute.xlu0 %958
        %960 = vrot.lane.b32.xlu0 %v955, 64
        %v961 = vpop.permute.xlu0 %960
        %v963 = vsel %vm746, %v948, 0
        %v966 = vsel %vm746, %v949, 0
        %v969 = vsel %vm746, %v950, 0
        %v972 = vsel %vm746, %v951, 0
        %v975 = vsel %vm746, %v952, 0
        %v978 = vsel %vm746, %v953, 0
        %v981 = vsel %vm746, %v959, 0
        %v984 = vsel %vm746, %v961, 0
        %986 = vmatprep.subr.bf16.mxu0 0
        %987 = vmatpush1.bf16.xpose.msra.mxu0 %v981
        %988 = vmatprep.subr.bf16.mxu0 0
        %989 = vmatpush1.bf16.xpose.msra.mxu0 %v984
        %990 = vmatprep.subr.bf16.mxu0 0
        %991 = vmatpush1.bf16.xpose.msra.mxu0 0
        %992 = vmatprep.subr.bf16.mxu0 0
        %993 = vmatpush1.bf16.xpose.msra.mxu0 0
        %994 = vmatprep.subr.bf16.mxu0 0
        %995 = vmatpush1.bf16.xpose.msra.mxu0 0
        %996 = vmatprep.subr.bf16.mxu0 0
        %997 = vmatpush1.bf16.xpose.msra.mxu0 0
        %998 = vmatprep.subr.bf16.mxu0 0
        %999 = vmatpush1.bf16.xpose.msra.mxu0 0
        %1000 = vmatprep.subr.bf16.mxu0 0
        %1001 = vmatpush1.bf16.xpose.msra.mxu0 0
        %1002 = vmatprep.subr.bf16.mxu0 0
        %1003 = vmatpush1.bf16.xpose.msra.mxu0 0
        %1004 = vmatprep.subr.bf16.mxu0 0
        %1005 = vmatpush1.bf16.xpose.msra.mxu0 0
        %1006 = vmatprep.subr.bf16.mxu0 0
        %1007 = vmatpush1.bf16.xpose.msra.mxu0 0
        %1008 = vmatprep.subr.bf16.mxu0 0
        %1009 = vmatpush1.bf16.xpose.msra.mxu0 0
        %1010 = vmatprep.subr.bf16.mxu0 0
        %1011 = vmatpush1.bf16.xpose.msra.mxu0 0
        %1012 = vmatprep.subr.bf16.mxu0 0
        %1013 = vmatpush1.bf16.xpose.msra.mxu0 0
        %1014 = vmatprep.subr.bf16.mxu0 0
        %1015 = vmatpush1.bf16.xpose.msra.mxu0 0
        %1016 = vmatprep.subr.bf16.mxu0 0
        %1017 = vmatpush1.bf16.xpose.msra.mxu0 0
        %1018 = vmatprep.mubr.bf16.mxu0 0
        %1019 = vmatmul.mubr.bf16.gmra.mrb[0].mxu0 %v963
        %v1020 = vpop.f32.mrb[0].mxu0
        %v1021 = vadd.f32 %v675, %v1020
        %v1022 = vpop.f32.mrb[0].mxu0
        %v1023 = vpop.f32.mrb[0].mxu0
        %v1024 = vadd.f32 %v676, %v1023
        %v1025 = vpop.f32.mrb[0].mxu0
        %1026 = vmatprep.mubr.bf16.mxu0 0
        %1027 = vmatmul.mubr.bf16.gmra.mrb[0].mxu0 %v966
        %v1028 = vpop.f32.mrb[0].mxu0
        %v1029 = vadd.f32 %v677, %v1028
        %v1030 = vpop.f32.mrb[0].mxu0
        %v1031 = vpop.f32.mrb[0].mxu0
        %v1032 = vadd.f32 %v678, %v1031
        %v1033 = vpop.f32.mrb[0].mxu0
        %1034 = vmatprep.mubr.bf16.mxu0 0
        %1035 = vmatmul.mubr.bf16.gmra.mrb[0].mxu0 %v969
        %v1036 = vpop.f32.mrb[0].mxu0
        %v1037 = vadd.f32 %v679, %v1036
        %v1038 = vpop.f32.mrb[0].mxu0
        %v1039 = vpop.f32.mrb[0].mxu0
        %v1040 = vadd.f32 %v680, %v1039
        %v1041 = vpop.f32.mrb[0].mxu0
        %1042 = vmatprep.mubr.bf16.mxu0 0
        %1043 = vmatmul.mubr.bf16.gmra.mrb[0].mxu0 %v972
        %v1044 = vpop.f32.mrb[0].mxu0
        %v1045 = vadd.f32 %v681, %v1044
        %v1046 = vpop.f32.mrb[0].mxu0
        %v1047 = vpop.f32.mrb[0].mxu0
        %v1048 = vadd.f32 %v682, %v1047
        %v1049 = vpop.f32.mrb[0].mxu0
        %1050 = vmatprep.mubr.bf16.mxu0 0
        %1051 = vmatmul.mubr.bf16.gmra.mrb[0].mxu0 %v975
        %v1052 = vpop.f32.mrb[0].mxu0
        %v1053 = vadd.f32 %v683, %v1052
        %v1054 = vpop.f32.mrb[0].mxu0
        %v1055 = vpop.f32.mrb[0].mxu0
        %v1056 = vadd.f32 %v684, %v1055
        %v1057 = vpop.f32.mrb[0].mxu0
        %1058 = vmatprep.mubr.bf16.mxu0 0
        %1059 = vmatmul.mubr.bf16.gmra.mrb[0].mxu0 %v978
        %v1060 = vpop.f32.mrb[0].mxu0
        %v1061 = vadd.f32 %v685, %v1060
        %v1062 = vpop.f32.mrb[0].mxu0
        %v1063 = vpop.f32.mrb[0].mxu0
        %v1064 = vadd.f32 %v686, %v1063
        %v1065 = vpop.f32.mrb[0].mxu0
        %1066 = vdwg.mxu0
        %vm1067 = vcmask 195584
        %v1068 = vsel %vm1067, %v1021, -inf
        %1069 = vmax.xlane.f32.xlu0 %v1068
        %v1070 = vpop.xlane.xlu0 %1069
        %v1071 = vsel %vm1067, %v1024, -inf
        %1072 = vmax.xlane.f32.xlu0 %v1071
        %v1073 = vpop.xlane.xlu0 %1072
        %v1074 = vsel %vm1067, %v1029, -inf
        %1075 = vmax.xlane.f32.xlu0 %v1074
        %v1076 = vpop.xlane.xlu0 %1075
        %v1077 = vsel %vm1067, %v1032, -inf
        %1078 = vmax.xlane.f32.xlu0 %v1077
        %v1079 = vpop.xlane.xlu0 %1078
        %v1080 = vsel %vm1067, %v1037, -inf
        %1081 = vmax.xlane.f32.xlu0 %v1080
        %v1082 = vpop.xlane.xlu0 %1081
        %v1083 = vsel %vm1067, %v1040, -inf
        %1084 = vmax.xlane.f32.xlu0 %v1083
        %v1085 = vpop.xlane.xlu0 %1084
        %v1086 = vsel %vm1067, %v1045, -inf
        %1087 = vmax.xlane.f32.xlu0 %v1086
        %v1088 = vpop.xlane.xlu0 %1087
        %v1089 = vsel %vm1067, %v1048, -inf
        %1090 = vmax.xlane.f32.xlu0 %v1089
        %v1091 = vpop.xlane.xlu0 %1090
        %v1092 = vsel %vm1067, %v1053, -inf
        %1093 = vmax.xlane.f32.xlu0 %v1092
        %v1094 = vpop.xlane.xlu0 %1093
        %v1095 = vsel %vm1067, %v1056, -inf
        %1096 = vmax.xlane.f32.xlu0 %v1095
        %v1097 = vpop.xlane.xlu0 %1096
        %v1098 = vsel %vm1067, %v1061, -inf
        %1099 = vmax.xlane.f32.xlu0 %v1098
        %v1100 = vpop.xlane.xlu0 %1099
        %v1101 = vsel %vm1067, %v1064, -inf
        %1102 = vmax.xlane.f32.xlu0 %v1101
        %v1103 = vpop.xlane.xlu0 %1102
        %v1104 = vsub.f32 %v1021, %v1070
        %v1105 = vsub.f32 %v1024, %v1073
        %v1106 = vsub.f32 %v1029, %v1076
        %v1107 = vsub.f32 %v1032, %v1079
        %v1108 = vsub.f32 %v1037, %v1082
        %v1109 = vsub.f32 %v1040, %v1085
        %v1110 = vsub.f32 %v1045, %v1088
        %v1111 = vsub.f32 %v1048, %v1091
        %v1112 = vsub.f32 %v1053, %v1094
        %v1113 = vsub.f32 %v1056, %v1097
        %v1114 = vsub.f32 %v1061, %v1100
        %v1115 = vsub.f32 %v1064, %v1103
        %v1116 = vmul.f32 %v1104, 1.442695
        %v1117 = vpow.pop %v1116
        %v1118 = vmul.f32 %v1105, 1.442695
        %v1119 = vpow.pop %v1118
        %v1120 = vmul.f32 %v1106, 1.442695
        %v1121 = vpow.pop %v1120
        %v1122 = vmul.f32 %v1107, 1.442695
        %v1123 = vpow.pop %v1122
        %v1124 = vmul.f32 %v1108, 1.442695
        %v1125 = vpow.pop %v1124
        %v1126 = vmul.f32 %v1109, 1.442695
        %v1127 = vpow.pop %v1126
        %v1128 = vmul.f32 %v1110, 1.442695
        %v1129 = vpow.pop %v1128
        %v1130 = vmul.f32 %v1111, 1.442695
        %v1131 = vpow.pop %v1130
        %v1132 = vmul.f32 %v1112, 1.442695
        %v1133 = vpow.pop %v1132
        %v1134 = vmul.f32 %v1113, 1.442695
        %v1135 = vpow.pop %v1134
        %v1136 = vmul.f32 %v1114, 1.442695
        %v1137 = vpow.pop %v1136
        %v1138 = vmul.f32 %v1115, 1.442695
        %v1139 = vpow.pop %v1138
        %v1140 = vsel %vm1067, %v1117, 0.0
        %1141 = vadd.xlane.f32.xlu0 %v1140
        %v1142 = vpop.xlane.xlu0 %1141
        %v1143 = vsel %vm1067, %v1119, 0.0
        %1144 = vadd.xlane.f32.xlu0 %v1143
        %v1145 = vpop.xlane.xlu0 %1144
        %v1146 = vsel %vm1067, %v1121, 0.0
        %1147 = vadd.xlane.f32.xlu0 %v1146
        %v1148 = vpop.xlane.xlu0 %1147
        %v1149 = vsel %vm1067, %v1123, 0.0
        %1150 = vadd.xlane.f32.xlu0 %v1149
        %v1151 = vpop.xlane.xlu0 %1150
        %v1152 = vsel %vm1067, %v1125, 0.0
        %1153 = vadd.xlane.f32.xlu0 %v1152
        %v1154 = vpop.xlane.xlu0 %1153
        %v1155 = vsel %vm1067, %v1127, 0.0
        %1156 = vadd.xlane.f32.xlu0 %v1155
        %v1157 = vpop.xlane.xlu0 %1156
        %v1158 = vsel %vm1067, %v1129, 0.0
        %1159 = vadd.xlane.f32.xlu0 %v1158
        %v1160 = vpop.xlane.xlu0 %1159
        %v1161 = vsel %vm1067, %v1131, 0.0
        %1162 = vadd.xlane.f32.xlu0 %v1161
        %v1163 = vpop.xlane.xlu0 %1162
        %v1164 = vsel %vm1067, %v1133, 0.0
        %1165 = vadd.xlane.f32.xlu0 %v1164
        %v1166 = vpop.xlane.xlu0 %1165
        %v1167 = vsel %vm1067, %v1135, 0.0
        %1168 = vadd.xlane.f32.xlu0 %v1167
        %v1169 = vpop.xlane.xlu0 %1168
        %v1170 = vsel %vm1067, %v1137, 0.0
        %1171 = vadd.xlane.f32.xlu0 %v1170
        %v1172 = vpop.xlane.xlu0 %1171
        %v1173 = vsel %vm1067, %v1139, 0.0
        %1174 = vadd.xlane.f32.xlu0 %v1173
        %v1175 = vpop.xlane.xlu0 %1174
        %v1176 = vrcp.pop %v1142
        %v1177 = vrcp.pop %v1145
        %v1178 = vrcp.pop %v1148
        %v1179 = vrcp.pop %v1151
        %v1180 = vrcp.pop %v1154
        %v1181 = vrcp.pop %v1157
        %v1182 = vrcp.pop %v1160
        %v1183 = vrcp.pop %v1163
        %v1184 = vrcp.pop %v1166
        %v1185 = vrcp.pop %v1169
        %v1186 = vrcp.pop %v1172
        %v1187 = vrcp.pop %v1175
        %v1188 = vmul.f32 %v1117, %v1176
        %v1189 = vmul.f32 %v1119, %v1177
        %v1190 = vmul.f32 %v1121, %v1178
        %v1191 = vmul.f32 %v1123, %v1179
        %v1192 = vmul.f32 %v1125, %v1180
        %v1193 = vmul.f32 %v1127, %v1181
        %v1194 = vmul.f32 %v1129, %v1182
        %v1195 = vmul.f32 %v1131, %v1183
        %v1196 = vmul.f32 %v1133, %v1184
        %v1197 = vmul.f32 %v1135, %v1185
        %v1198 = vmul.f32 %v1137, %v1186
        %v1199 = vmul.f32 %v1139, %v1187
        %v1200 = vpack.c.bf16 %v1189, %v1188
        %v1201 = vpack.c.bf16 %v1191, %v1190
        %v1202 = vpack.c.bf16 %v1193, %v1192
        %v1203 = vpack.c.bf16 %v1195, %v1194
        %v1204 = vpack.c.bf16 %v1197, %v1196
        %v1205 = vpack.c.bf16 %v1199, %v1198
        %v1206 = vpack.c.bf16 %v901, %v897
        %v1207 = vpack.c.bf16 %v907, %v907
        %v1209 = vsel %vm1067, %v1200, 0
        %v1212 = vsel %vm1067, %v1201, 0
        %v1215 = vsel %vm1067, %v1202, 0
        %v1218 = vsel %vm1067, %v1203, 0
        %v1221 = vsel %vm1067, %v1204, 0
        %v1224 = vsel %vm1067, %v1205, 0
        %vm1226 = vcmask 1043456
        %v1228 = vsel %vm1226, %v1207, 0
        %1230 = vmatprep.subr.bf16.mxu0 0
        %1231 = vmatpush1.bf16.msra.mxu0 %v1206
        %1232 = vmatprep.subr.bf16.mxu0 0
        %1233 = vmatpush1.bf16.msra.mxu0 %v1228
        %1234 = vmatprep.subr.bf16.mxu0 0
        %1235 = vmatpush1.bf16.msra.mxu0 0
        %1236 = vmatprep.subr.bf16.mxu0 0
        %1237 = vmatpush1.bf16.msra.mxu0 0
        %1238 = vmatprep.subr.bf16.mxu0 0
        %1239 = vmatpush1.bf16.msra.mxu0 0
        %1240 = vmatprep.subr.bf16.mxu0 0
        %1241 = vmatpush1.bf16.msra.mxu0 0
        %1242 = vmatprep.subr.bf16.mxu0 0
        %1243 = vmatpush1.bf16.msra.mxu0 0
        %1244 = vmatprep.subr.bf16.mxu0 0
        %1245 = vmatpush1.bf16.msra.mxu0 0
        %1246 = vmatprep.subr.bf16.mxu0 0
        %1247 = vmatpush1.bf16.msra.mxu0 0
        %1248 = vmatprep.subr.bf16.mxu0 0
        %1249 = vmatpush1.bf16.msra.mxu0 0
        %1250 = vmatprep.subr.bf16.mxu0 0
        %1251 = vmatpush1.bf16.msra.mxu0 0
        %1252 = vmatprep.subr.bf16.mxu0 0
        %1253 = vmatpush1.bf16.msra.mxu0 0
        %1254 = vmatprep.subr.bf16.mxu0 0
        %1255 = vmatpush1.bf16.msra.mxu0 0
        %1256 = vmatprep.subr.bf16.mxu0 0
        %1257 = vmatpush1.bf16.msra.mxu0 0
        %1258 = vmatprep.subr.bf16.mxu0 0
        %1259 = vmatpush1.bf16.msra.mxu0 0
        %1260 = vmatprep.subr.bf16.mxu0 0
        %1261 = vmatpush1.bf16.msra.mxu0 0
        %1262 = vmatprep.mubr.bf16.mxu0 0
        %1263 = vmatmul.mubr.bf16.gmra.mrb[0].mxu0 %v1209
        %v1264 = vpop.f32.mrb[0].mxu0
        %v1265 = vadd.f32 0.0, %v1264
        %v1266 = vpop.f32.mrb[0].mxu0
        %v1267 = vpop.f32.mrb[0].mxu0
        %v1268 = vadd.f32 0.0, %v1267
        %v1269 = vpop.f32.mrb[0].mxu0
        %1270 = vmatprep.mubr.bf16.mxu0 0
        %1271 = vmatmul.mubr.bf16.gmra.mrb[0].mxu0 %v1212
        %v1272 = vpop.f32.mrb[0].mxu0
        %v1273 = vadd.f32 0.0, %v1272
        %v1274 = vpop.f32.mrb[0].mxu0
        %v1275 = vpop.f32.mrb[0].mxu0
        %v1276 = vadd.f32 0.0, %v1275
        %v1277 = vpop.f32.mrb[0].mxu0
        %1278 = vmatprep.mubr.bf16.mxu0 0
        %1279 = vmatmul.mubr.bf16.gmra.mrb[0].mxu0 %v1215
        %v1280 = vpop.f32.mrb[0].mxu0
        %v1281 = vadd.f32 0.0, %v1280
        %v1282 = vpop.f32.mrb[0].mxu0
        %v1283 = vpop.f32.mrb[0].mxu0
        %v1284 = vadd.f32 0.0, %v1283
        %v1285 = vpop.f32.mrb[0].mxu0
        %1286 = vmatprep.mubr.bf16.mxu0 0
        %1287 = vmatmul.mubr.bf16.gmra.mrb[0].mxu0 %v1218
        %v1288 = vpop.f32.mrb[0].mxu0
        %v1289 = vadd.f32 0.0, %v1288
        %v1290 = vpop.f32.mrb[0].mxu0
        %v1291 = vpop.f32.mrb[0].mxu0
        %v1292 = vadd.f32 0.0, %v1291
        %v1293 = vpop.f32.mrb[0].mxu0
        %1294 = vmatprep.mubr.bf16.mxu0 0
        %1295 = vmatmul.mubr.bf16.gmra.mrb[0].mxu0 %v1221
        %v1296 = vpop.f32.mrb[0].mxu0
        %v1297 = vadd.f32 0.0, %v1296
        %v1298 = vpop.f32.mrb[0].mxu0
        %v1299 = vpop.f32.mrb[0].mxu0
        %v1300 = vadd.f32 0.0, %v1299
        %v1301 = vpop.f32.mrb[0].mxu0
        %1302 = vmatprep.mubr.bf16.mxu0 0
        %1303 = vmatmul.mubr.bf16.gmra.mrb[0].mxu0 %v1224
        %v1304 = vpop.f32.mrb[0].mxu0
        %v1305 = vadd.f32 0.0, %v1304
        %v1306 = vpop.f32.mrb[0].mxu0
        %v1307 = vpop.f32.mrb[0].mxu0
        %v1308 = vadd.f32 0.0, %v1307
        %v1309 = vpop.f32.mrb[0].mxu0
        %1310 = vdwg.mxu0
        %v1311 = vmul.f32 %v1265, %v920
        %v1312 = vmul.f32 %v1268, %v920
        %v1313 = vmul.f32 %v1273, %v920
        %v1314 = vmul.f32 %v1276, %v925
        %v1315 = vmul.f32 %v1281, %v925
        %v1316 = vmul.f32 %v1284, %v925
        %v1317 = vadd.f32 %v1311, %v1314
        %v1318 = vadd.f32 %v1312, %v1315
        %v1319 = vadd.f32 %v1313, %v1316
        %v1320 = vmul.f32 %v1289, %v930
        %v1321 = vmul.f32 %v1292, %v930
        %v1322 = vmul.f32 %v1297, %v930
        %v1323 = vadd.f32 %v1317, %v1320
        %v1324 = vadd.f32 %v1318, %v1321
        %v1325 = vadd.f32 %v1319, %v1322
        %v1326 = vmul.f32 %v1300, %v935
        %v1327 = vmul.f32 %v1305, %v935
        %v1328 = vmul.f32 %v1308, %v935
        %v1329 = vadd.f32 %v1323, %v1326
        %v1330 = vadd.f32 %v1324, %v1327
        %v1331 = vadd.f32 %v1325, %v1328
        %v1332 = vpack.c.bf16 %v1330, %v1329
        %v1333 = vpack.c.bf16 %v1331, %v1331
        %v1342 = vunpack.c.l.b16 %v696
        %v1343 = vunpack.c.l.b16 %v697
        %v1344 = vunpack.c.l.b16 %v698
        %v1345 = vunpack.c.l.b16 %v699
        %v1346 = vunpack.c.l.b16 %v700
        %v1347 = vunpack.c.l.b16 %v701
        %v1348 = vunpack.c.l.b16 %v702
        %v1349 = vunpack.c.l.b16 %v703
        %v1350 = vpack.c.b16 %v1343, %v1342
        %v1351 = vpack.c.b16 %v1345, %v1344
        %v1352 = vpack.c.b16 %v1347, %v1346
        %v1353 = vpack.c.b16 %v1349, %v1348
        %v1359 = vsel %vm746, %v1332, 0
        %v1362 = vsel %vm746, %v1333, 0
        %1364 = vmatprep.subr.bf16.mxu0 0
        %1365 = vmatpush1.bf16.msra.mxu0 %v1350
        %1366 = vmatprep.subr.bf16.mxu0 0
        %1367 = vmatpush1.bf16.msra.mxu0 %v1351
        %1368 = vmatprep.subr.bf16.mxu0 0
        %1369 = vmatpush1.bf16.msra.mxu0 %v1352
        %1370 = vmatprep.subr.bf16.mxu0 0
        %1371 = vmatpush1.bf16.msra.mxu0 %v1353
        %1372 = vmatprep.subr.bf16.mxu0 0
        %1373 = vmatpush1.bf16.msra.mxu0 0
        %1374 = vmatprep.subr.bf16.mxu0 0
        %1375 = vmatpush1.bf16.msra.mxu0 0
        %1376 = vmatprep.subr.bf16.mxu0 0
        %1377 = vmatpush1.bf16.msra.mxu0 0
        %1378 = vmatprep.subr.bf16.mxu0 0
        %1379 = vmatpush1.bf16.msra.mxu0 0
        %1380 = vmatprep.subr.bf16.mxu0 0
        %1381 = vmatpush1.bf16.msra.mxu0 0
        %1382 = vmatprep.subr.bf16.mxu0 0
        %1383 = vmatpush1.bf16.msra.mxu0 0
        %1384 = vmatprep.subr.bf16.mxu0 0
        %1385 = vmatpush1.bf16.msra.mxu0 0
        %1386 = vmatprep.subr.bf16.mxu0 0
        %1387 = vmatpush1.bf16.msra.mxu0 0
        %1388 = vmatprep.subr.bf16.mxu0 0
        %1389 = vmatpush1.bf16.msra.mxu0 0
        %1390 = vmatprep.subr.bf16.mxu0 0
        %1391 = vmatpush1.bf16.msra.mxu0 0
        %1392 = vmatprep.subr.bf16.mxu0 0
        %1393 = vmatpush1.bf16.msra.mxu0 0
        %1394 = vmatprep.subr.bf16.mxu0 0
        %1395 = vmatpush1.bf16.msra.mxu0 0
        %1396 = vmatprep.mubr.bf16.mxu0 0
        %1397 = vmatmul.mubr.bf16.gmra.mrb[0].mxu0 %v1359
        %v1398 = vpop.f32.mrb[0].mxu0
        %v1399 = vadd.f32 0.0, %v1398
        %v1400 = vpop.f32.mrb[0].mxu0
        %v1401 = vpop.f32.mrb[0].mxu0
        %v1402 = vadd.f32 0.0, %v1401
        %v1403 = vpop.f32.mrb[0].mxu0
        %1404 = vmatprep.mubr.bf16.mxu0 0
        %1405 = vmatmul.mubr.bf16.gmra.mrb[0].mxu0 %v1362
        %v1406 = vpop.f32.mrb[0].mxu0
        %v1407 = vadd.f32 0.0, %v1406
        %v1408 = vpop.f32.mrb[0].mxu0
        %v1409 = vpop.f32.mrb[0].mxu0
        %v1410 = vpop.f32.mrb[0].mxu0
        %1411 = vdwg.mxu0
        %v1412 = vadd.f32 %v672, %v1399
        %v1413 = vadd.f32 %v673, %v1402
        %v1414 = vadd.f32 %v674, %v1407
        %v1415 = vlaneseq
        %v1416 = vshrl.u32 %v1415, 7
        %v1417 = vsub.s32 4, %v1416
        %v1418 = vrot.slane %v704, %v1417
        %v1419 = vadd.f32 %v1412, %v1418
        %v1420 = vadd.f32 %v1413, %v1418
        %v1421 = vadd.f32 %v1414, %v1418
        %v1422 = vsel %vm746, %v1419, 0.0
        %1423 = vadd.xlane.f32.xlu0 %v1422
        %v1424 = vpop.xlane.xlu0 %1423
        %v1425 = vsel %vm746, %v1420, 0.0
        %1426 = vadd.xlane.f32.xlu0 %v1425
        %v1427 = vpop.xlane.xlu0 %1426
        %v1428 = vsel %vm746, %v1421, 0.0
        %1429 = vadd.xlane.f32.xlu0 %v1428
        %v1430 = vpop.xlane.xlu0 %1429
        %v1431 = vmul.f32 %v1424, %v756
        %v1432 = vmul.f32 %v1427, %v756
        %v1433 = vmul.f32 %v1430, %v756
        %v1434 = vsub.f32 %v1419, %v1431
        %v1435 = vsub.f32 %v1420, %v1432
        %v1436 = vsub.f32 %v1421, %v1433
        %v1437 = vmul.f32 %v1434, %v1434
        %v1438 = vmul.f32 %v1435, %v1435
        %v1439 = vmul.f32 %v1436, %v1436
        %v1440 = vsel %vm746, %v1437, 0.0
        %1441 = vadd.xlane.f32.xlu0 %v1440
        %v1442 = vpop.xlane.xlu0 %1441
        %v1443 = vsel %vm746, %v1438, 0.0
        %1444 = vadd.xlane.f32.xlu0 %v1443
        %v1445 = vpop.xlane.xlu0 %1444
        %v1446 = vsel %vm746, %v1439, 0.0
        %1447 = vadd.xlane.f32.xlu0 %v1446
        %v1448 = vpop.xlane.xlu0 %1447
        %v1449 = vmul.f32 %v1442, %v756
        %v1450 = vmul.f32 %v1445, %v756
        %v1451 = vmul.f32 %v1448, %v756
        %v1452 = vadd.f32 %v1449, 1e-05
        %v1453 = vadd.f32 %v1450, 1e-05
        %v1454 = vadd.f32 %v1451, 1e-05
        %v1455 = vrsqrt.pop %v1452
        %v1456 = vrsqrt.pop %v1453
        %v1457 = vrsqrt.pop %v1454
        %v1458 = vmul.f32 %v1434, %v1455
        %v1459 = vmul.f32 %v1435, %v1456
        %v1460 = vmul.f32 %v1436, %v1457
        %v1461 = vlaneseq
        %v1462 = vshrl.u32 %v1461, 7
        %v1463 = vsub.s32 2, %v1462
        %v1464 = vrot.slane %v704, %v1463
        %v1465 = vmul.f32 %v1458, %v1464
        %v1466 = vmul.f32 %v1459, %v1464
        %v1467 = vmul.f32 %v1460, %v1464
        %v1468 = vlaneseq
        %v1469 = vshrl.u32 %v1468, 7
        %v1470 = vsub.s32 3, %v1469
        %v1471 = vrot.slane %v704, %v1470
        %v1472 = vadd.f32 %v1465, %v1471
        %v1473 = vadd.f32 %v1466, %v1471
        %v1474 = vadd.f32 %v1467, %v1471
        %v1475 = vpack.c.bf16 %v1473, %v1472
        %v1476 = vpack.c.bf16 %v1474, %v1474
        %v1478 = vlaneseq
        %v1479 = vshrl.u32 %v1478, 7
        %v1480 = vsub.s32 0, %v1479
        %v1481 = vrot.slane %v713, %v1480
        %v1482 = vlaneseq
        %v1483 = vshrl.u32 %v1482, 7
        %v1484 = vsub.s32 1, %v1483
        %v1485 = vrot.slane %v713, %v1484
        %v1496 = vunpack.c.l.b16 %v705
        %v1497 = vunpack.c.h.b16 %v705
        %v1498 = vunpack.c.l.b16 %v706
        %v1499 = vunpack.c.h.b16 %v706
        %v1500 = vunpack.c.l.b16 %v707
        %v1501 = vunpack.c.h.b16 %v707
        %v1502 = vunpack.c.l.b16 %v708
        %v1503 = vunpack.c.h.b16 %v708
        %v1504 = vunpack.c.l.b16 %v709
        %v1505 = vunpack.c.h.b16 %v709
        %v1506 = vunpack.c.l.b16 %v710
        %v1507 = vunpack.c.h.b16 %v710
        %v1508 = vunpack.c.l.b16 %v711
        %v1509 = vunpack.c.h.b16 %v711
        %v1510 = vunpack.c.l.b16 %v712
        %v1511 = vunpack.c.h.b16 %v712
        %v1512 = vpack.c.b16 %v1498, %v1496
        %v1513 = vpack.c.b16 %v1499, %v1497
        %v1514 = vpack.c.b16 %v1502, %v1500
        %v1515 = vpack.c.b16 %v1503, %v1501
        %v1516 = vpack.c.b16 %v1506, %v1504
        %v1517 = vpack.c.b16 %v1507, %v1505
        %v1518 = vpack.c.b16 %v1510, %v1508
        %v1519 = vpack.c.b16 %v1511, %v1509
        %v1529 = vsel %vm746, %v1475, 0
        %v1532 = vsel %vm746, %v1476, 0
        %1534 = vmatprep.subr.bf16.mxu0 %v1513
        %1535 = vmatpush1.bf16.msra.mxu0 %v1512
        %1536 = vmatprep.subr.bf16.mxu0 %v1515
        %1537 = vmatpush1.bf16.msra.mxu0 %v1514
        %1538 = vmatprep.subr.bf16.mxu0 %v1517
        %1539 = vmatpush1.bf16.msra.mxu0 %v1516
        %1540 = vmatprep.subr.bf16.mxu0 %v1519
        %1541 = vmatpush1.bf16.msra.mxu0 %v1518
        %1542 = vmatprep.subr.bf16.mxu0 0
        %1543 = vmatpush1.bf16.msra.mxu0 0
        %1544 = vmatprep.subr.bf16.mxu0 0
        %1545 = vmatpush1.bf16.msra.mxu0 0
        %1546 = vmatprep.subr.bf16.mxu0 0
        %1547 = vmatpush1.bf16.msra.mxu0 0
        %1548 = vmatprep.subr.bf16.mxu0 0
        %1549 = vmatpush1.bf16.msra.mxu0 0
        %1550 = vmatprep.subr.bf16.mxu0 0
        %1551 = vmatpush1.bf16.msra.mxu0 0
        %1552 = vmatprep.subr.bf16.mxu0 0
        %1553 = vmatpush1.bf16.msra.mxu0 0
        %1554 = vmatprep.subr.bf16.mxu0 0
        %1555 = vmatpush1.bf16.msra.mxu0 0
        %1556 = vmatprep.subr.bf16.mxu0 0
        %1557 = vmatpush1.bf16.msra.mxu0 0
        %1558 = vmatprep.subr.bf16.mxu0 0
        %1559 = vmatpush1.bf16.msra.mxu0 0
        %1560 = vmatprep.subr.bf16.mxu0 0
        %1561 = vmatpush1.bf16.msra.mxu0 0
        %1562 = vmatprep.subr.bf16.mxu0 0
        %1563 = vmatpush1.bf16.msra.mxu0 0
        %1564 = vmatprep.subr.bf16.mxu0 0
        %1565 = vmatpush1.bf16.msra.mxu0 0
        %1566 = vmatprep.mubr.bf16.mxu0 0
        %1567 = vmatmul.mubr.bf16.gmra.mrb[0].mxu0 %v1529
        %v1568 = vpop.f32.mrb[0].mxu0
        %v1569 = vadd.f32 %v1481, %v1568
        %v1570 = vpop.f32.mrb[0].mxu0
        %v1571 = vadd.f32 %v1485, %v1570
        %v1572 = vpop.f32.mrb[0].mxu0
        %v1573 = vadd.f32 %v1481, %v1572
        %v1574 = vpop.f32.mrb[0].mxu0
        %v1575 = vadd.f32 %v1485, %v1574
        %1576 = vmatprep.mubr.bf16.mxu0 0
        %1577 = vmatmul.mubr.bf16.gmra.mrb[0].mxu0 %v1532
        %v1578 = vpop.f32.mrb[0].mxu0
        %v1579 = vadd.f32 %v1481, %v1578
        %v1580 = vpop.f32.mrb[0].mxu0
        %v1581 = vadd.f32 %v1485, %v1580
        %v1582 = vpop.f32.mrb[0].mxu0
        %v1583 = vpop.f32.mrb[0].mxu0
        %1584 = vdwg.mxu0
        %v1585 = vmul.f32 %v1569, %v1569
        %v1586 = vmul.f32 %v1571, %v1571
        %v1587 = vmul.f32 %v1573, %v1573
        %v1588 = vmul.f32 %v1575, %v1575
        %v1589 = vmul.f32 %v1579, %v1579
        %v1590 = vmul.f32 %v1581, %v1581
        %v1591 = vmul.f32 %v1569, %v1585
        %v1592 = vmul.f32 %v1571, %v1586
        %v1593 = vmul.f32 %v1573, %v1587
        %v1594 = vmul.f32 %v1575, %v1588
        %v1595 = vmul.f32 %v1579, %v1589
        %v1596 = vmul.f32 %v1581, %v1590
        %v1597 = vmul.f32 %v1591, 0.044715
        %v1598 = vmul.f32 %v1592, 0.044715
        %v1599 = vmul.f32 %v1593, 0.044715
        %v1600 = vmul.f32 %v1594, 0.044715
        %v1601 = vmul.f32 %v1595, 0.044715
        %v1602 = vmul.f32 %v1596, 0.044715
        %v1603 = vadd.f32 %v1569, %v1597
        %v1604 = vadd.f32 %v1571, %v1598
        %v1605 = vadd.f32 %v1573, %v1599
        %v1606 = vadd.f32 %v1575, %v1600
        %v1607 = vadd.f32 %v1579, %v1601
        %v1608 = vadd.f32 %v1581, %v1602
        %v1609 = vmul.f32 %v1603, 0.7978846
        %v1610 = vmul.f32 %v1604, 0.7978846
        %v1611 = vmul.f32 %v1605, 0.7978846
        %v1612 = vmul.f32 %v1606, 0.7978846
        %v1613 = vmul.f32 %v1607, 0.7978846
        %v1614 = vmul.f32 %v1608, 0.7978846
        %v1615 = vtanh.pop %v1609
        %v1616 = vtanh.pop %v1610
        %v1617 = vtanh.pop %v1611
        %v1618 = vtanh.pop %v1612
        %v1619 = vtanh.pop %v1613
        %v1620 = vtanh.pop %v1614
        %v1621 = vadd.f32 %v1615, 1.0
        %v1622 = vadd.f32 %v1616, 1.0
        %v1623 = vadd.f32 %v1617, 1.0
        %v1624 = vadd.f32 %v1618, 1.0
        %v1625 = vadd.f32 %v1619, 1.0
        %v1626 = vadd.f32 %v1620, 1.0
        %v1627 = vmul.f32 %v1621, 0.5
        %v1628 = vmul.f32 %v1622, 0.5
        %v1629 = vmul.f32 %v1623, 0.5
        %v1630 = vmul.f32 %v1624, 0.5
        %v1631 = vmul.f32 %v1625, 0.5
        %v1632 = vmul.f32 %v1626, 0.5
        %v1633 = vmul.f32 %v1569, %v1627
        %v1634 = vmul.f32 %v1571, %v1628
        %v1635 = vmul.f32 %v1573, %v1629
        %v1636 = vmul.f32 %v1575, %v1630
        %v1637 = vmul.f32 %v1579, %v1631
        %v1638 = vmul.f32 %v1581, %v1632
        %v1639 = vpack.c.bf16 %v1635, %v1633
        %v1640 = vpack.c.bf16 %v1636, %v1634
        %v1641 = vpack.c.bf16 %v1637, %v1637
        %v1642 = vpack.c.bf16 %v1638, %v1638
        %v1675 = vunpack.c.l.b16 %v714
        %v1676 = vunpack.c.l.b16 %v715
        %v1677 = vunpack.c.l.b16 %v716
        %v1678 = vunpack.c.l.b16 %v717
        %v1679 = vunpack.c.l.b16 %v718
        %v1680 = vunpack.c.l.b16 %v719
        %v1681 = vunpack.c.l.b16 %v720
        %v1682 = vunpack.c.l.b16 %v721
        %v1683 = vunpack.c.l.b16 %v722
        %v1684 = vunpack.c.l.b16 %v723
        %v1685 = vunpack.c.l.b16 %v724
        %v1686 = vunpack.c.l.b16 %v725
        %v1687 = vunpack.c.l.b16 %v726
        %v1688 = vunpack.c.l.b16 %v727
        %v1689 = vunpack.c.l.b16 %v728
        %v1690 = vunpack.c.l.b16 %v729
        %v1691 = vunpack.c.l.b16 %v730
        %v1692 = vunpack.c.l.b16 %v731
        %v1693 = vunpack.c.l.b16 %v732
        %v1694 = vunpack.c.l.b16 %v733
        %v1695 = vunpack.c.l.b16 %v734
        %v1696 = vunpack.c.l.b16 %v735
        %v1697 = vunpack.c.l.b16 %v736
        %v1698 = vunpack.c.l.b16 %v737
        %v1699 = vunpack.c.l.b16 %v738
        %v1700 = vunpack.c.l.b16 %v739
        %v1701 = vunpack.c.l.b16 %v740
        %v1702 = vunpack.c.l.b16 %v741
        %v1703 = vunpack.c.l.b16 %v742
        %v1704 = vunpack.c.l.b16 %v743
        %v1705 = vunpack.c.l.b16 %v744
        %v1706 = vunpack.c.l.b16 %v745
        %v1707 = vpack.c.b16 %v1676, %v1675
        %v1708 = vpack.c.b16 %v1678, %v1677
        %v1709 = vpack.c.b16 %v1680, %v1679
        %v1710 = vpack.c.b16 %v1682, %v1681
        %v1711 = vpack.c.b16 %v1684, %v1683
        %v1712 = vpack.c.b16 %v1686, %v1685
        %v1713 = vpack.c.b16 %v1688, %v1687
        %v1714 = vpack.c.b16 %v1690, %v1689
        %v1715 = vpack.c.b16 %v1692, %v1691
        %v1716 = vpack.c.b16 %v1694, %v1693
        %v1717 = vpack.c.b16 %v1696, %v1695
        %v1718 = vpack.c.b16 %v1698, %v1697
        %v1719 = vpack.c.b16 %v1700, %v1699
        %v1720 = vpack.c.b16 %v1702, %v1701
        %v1721 = vpack.c.b16 %v1704, %v1703
        %v1722 = vpack.c.b16 %v1706, %v1705
        %1739 = vmatprep.subr.bf16.mxu0 0
        %1740 = vmatpush1.bf16.msra.mxu0 %v1707
        %1741 = vmatprep.subr.bf16.mxu0 0
        %1742 = vmatpush1.bf16.msra.mxu0 %v1708
        %1743 = vmatprep.subr.bf16.mxu0 0
        %1744 = vmatpush1.bf16.msra.mxu0 %v1709
        %1745 = vmatprep.subr.bf16.mxu0 0
        %1746 = vmatpush1.bf16.msra.mxu0 %v1710
        %1747 = vmatprep.subr.bf16.mxu0 0
        %1748 = vmatpush1.bf16.msra.mxu0 %v1711
        %1749 = vmatprep.subr.bf16.mxu0 0
        %1750 = vmatpush1.bf16.msra.mxu0 %v1712
        %1751 = vmatprep.subr.bf16.mxu0 0
        %1752 = vmatpush1.bf16.msra.mxu0 %v1713
        %1753 = vmatprep.subr.bf16.mxu0 0
        %1754 = vmatpush1.bf16.msra.mxu0 %v1714
        %1755 = vmatprep.subr.bf16.mxu0 0
        %1756 = vmatpush1.bf16.msra.mxu0 %v1715
        %1757 = vmatprep.subr.bf16.mxu0 0
        %1758 = vmatpush1.bf16.msra.mxu0 %v1716
        %1759 = vmatprep.subr.bf16.mxu0 0
        %1760 = vmatpush1.bf16.msra.mxu0 %v1717
        %1761 = vmatprep.subr.bf16.mxu0 0
        %1762 = vmatpush1.bf16.msra.mxu0 %v1718
        %1763 = vmatprep.subr.bf16.mxu0 0
        %1764 = vmatpush1.bf16.msra.mxu0 %v1719
        %1765 = vmatprep.subr.bf16.mxu0 0
        %1766 = vmatpush1.bf16.msra.mxu0 %v1720
        %1767 = vmatprep.subr.bf16.mxu0 0
        %1768 = vmatpush1.bf16.msra.mxu0 %v1721
        %1769 = vmatprep.subr.bf16.mxu0 0
        %1770 = vmatpush1.bf16.msra.mxu0 %v1722
        %1771 = vmatprep.mubr.bf16.mxu0 %v1640
        %1772 = vmatmul.mubr.bf16.gmra.mrb[0].mxu0 %v1639
        %v1773 = vpop.f32.mrb[0].mxu0
        %v1774 = vadd.f32 0.0, %v1773
        %v1775 = vpop.f32.mrb[0].mxu0
        %v1776 = vpop.f32.mrb[0].mxu0
        %v1777 = vadd.f32 0.0, %v1776
        %v1778 = vpop.f32.mrb[0].mxu0
        %1779 = vmatprep.mubr.bf16.mxu0 %v1642
        %1780 = vmatmul.mubr.bf16.gmra.mrb[0].mxu0 %v1641
        %v1781 = vpop.f32.mrb[0].mxu0
        %v1782 = vadd.f32 0.0, %v1781
        %v1783 = vpop.f32.mrb[0].mxu0
        %v1784 = vpop.f32.mrb[0].mxu0
        %v1785 = vpop.f32.mrb[0].mxu0
        %1786 = vdwg.mxu0
        %v1787 = vadd.f32 %v1419, %v1774
        %v1788 = vadd.f32 %v1420, %v1777
        %v1789 = vadd.f32 %v1421, %v1782
        %v1790 = vlaneseq
        %v1791 = vshrl.u32 %v1790, 7
        %v1792 = vsub.s32 5, %v1791
        %v1793 = vrot.slane %v704, %v1792
        %v1794 = vadd.f32 %v1787, %v1793
        %v1795 = vadd.f32 %v1788, %v1793
        %v1796 = vadd.f32 %v1789, %v1793
        %1797 = vst.msk [vmem:[#allocation2] sm:$0xff] %vm746, %v1794
        %1798 = vst.msk [vmem:[#allocation2 + $0x8] sm:$0xff] %vm746, %v1795
        %1799 = vst.msk [vmem:[#allocation2 + $0x10] sm:$0xff] %vm746, %v1796
        %p1800 = scmp.eq.s32.totalorder %s32, 1
        // Predicated region
        $region77: #{clip_caption_forward.3} parent=71 // pred_check
          %p1801 = pneg %p1800
        $region78: #{clip_caption_forward.3} parent=71 // pred_check_branch
          %1803 = sbr.rel (%p1801) target = $region80
        $region79: #{clip_caption_forward.3} parent=71 // pred_region
          %v1804 = vld [vmem:[%s12] sm:$0x3]
          %v1805 = vsel %vm746, %v1794, 0.0
          %1806 = vadd.xlane.f32.xlu0 %v1805
          %v1807 = vpop.xlane.xlu0 %1806
          %v1808 = vsel %vm746, %v1795, 0.0
          %1809 = vadd.xlane.f32.xlu0 %v1808
          %v1810 = vpop.xlane.xlu0 %1809
          %v1811 = vsel %vm746, %v1796, 0.0
          %1812 = vadd.xlane.f32.xlu0 %v1811
          %v1813 = vpop.xlane.xlu0 %1812
          %v1814 = vmul.f32 %v1807, %v756
          %v1815 = vmul.f32 %v1810, %v756
          %v1816 = vmul.f32 %v1813, %v756
          %v1817 = vsub.f32 %v1794, %v1814
          %v1818 = vsub.f32 %v1795, %v1815
          %v1819 = vsub.f32 %v1796, %v1816
          %v1820 = vmul.f32 %v1817, %v1817
          %v1821 = vmul.f32 %v1818, %v1818
          %v1822 = vmul.f32 %v1819, %v1819
          %v1823 = vsel %vm746, %v1820, 0.0
          %1824 = vadd.xlane.f32.xlu0 %v1823
          %v1825 = vpop.xlane.xlu0 %1824
          %v1826 = vsel %vm746, %v1821, 0.0
          %1827 = vadd.xlane.f32.xlu0 %v1826
          %v1828 = vpop.xlane.xlu0 %1827
          %v1829 = vsel %vm746, %v1822, 0.0
          %1830 = vadd.xlane.f32.xlu0 %v1829
          %v1831 = vpop.xlane.xlu0 %1830
          %v1832 = vmul.f32 %v1825, %v756
          %v1833 = vmul.f32 %v1828, %v756
          %v1834 = vmul.f32 %v1831, %v756
          %v1835 = vadd.f32 %v1832, 1e-05
          %v1836 = vadd.f32 %v1833, 1e-05
          %v1837 = vadd.f32 %v1834, 1e-05
          %v1838 = vrsqrt.pop %v1835
          %v1839 = vrsqrt.pop %v1836
          %v1840 = vrsqrt.pop %v1837
          %v1841 = vmul.f32 %v1817, %v1838
          %v1842 = vmul.f32 %v1818, %v1839
          %v1843 = vmul.f32 %v1819, %v1840
          %v1844 = vlaneseq
          %v1845 = vshrl.u32 %v1844, 7
          %v1846 = vsub.s32 0, %v1845
          %v1847 = vrot.slane %v1804, %v1846
          %v1848 = vmul.f32 %v1841, %v1847
          %v1849 = vmul.f32 %v1842, %v1847
          %v1850 = vmul.f32 %v1843, %v1847
          %v1851 = vlaneseq
          %v1852 = vshrl.u32 %v1851, 7
          %v1853 = vsub.s32 1, %v1852
          %v1854 = vrot.slane %v1804, %v1853
          %v1855 = vadd.f32 %v1848, %v1854
          %v1856 = vadd.f32 %v1849, %v1854
          %v1857 = vadd.f32 %v1850, %v1854
          %v1858 = vpack.c.bf16 %v1856, %v1855
          %v1859 = vpack.c.bf16 %v1857, %v1857
          %v1860 = vld [vmem:[%s13] sm:$0xf]
          %v1861 = vld [vmem:[%s13 + $0x4] sm:$0xf]
          %v1862 = vld [vmem:[%s13 + $0x8] sm:$0xf]
          %v1863 = vld [vmem:[%s13 + $0xc] sm:$0xf]
          %v1864 = vld [vmem:[%s13 + $0x10] sm:$0xf]
          %v1865 = vld [vmem:[%s13 + $0x14] sm:$0xf]
          %v1866 = vld [vmem:[%s13 + $0x18] sm:$0xf]
          %v1867 = vld [vmem:[%s13 + $0x1c] sm:$0xf]
          %v1876 = vunpack.c.l.b16 %v1860
          %v1877 = vunpack.c.l.b16 %v1861
          %v1878 = vunpack.c.l.b16 %v1862
          %v1879 = vunpack.c.l.b16 %v1863
          %v1880 = vunpack.c.l.b16 %v1864
          %v1881 = vunpack.c.l.b16 %v1865
          %v1882 = vunpack.c.l.b16 %v1866
          %v1883 = vunpack.c.l.b16 %v1867
          %v1884 = vpack.c.b16 %v1877, %v1876
          %v1885 = vpack.c.b16 %v1879, %v1878
          %v1886 = vpack.c.b16 %v1881, %v1880
          %v1887 = vpack.c.b16 %v1883, %v1882
          %v1893 = vsel %vm746, %v1858, 0
          %v1896 = vsel %vm746, %v1859, 0
          %1898 = vmatprep.subr.bf16.mxu0 0
          %1899 = vmatpush1.bf16.msra.mxu0 %v1884
          %1900 = vmatprep.subr.bf16.mxu0 0
          %1901 = vmatpush1.bf16.msra.mxu0 %v1885
          %1902 = vmatprep.subr.bf16.mxu0 0
          %1903 = vmatpush1.bf16.msra.mxu0 %v1886
          %1904 = vmatprep.subr.bf16.mxu0 0
          %1905 = vmatpush1.bf16.msra.mxu0 %v1887
          %1906 = vmatprep.subr.bf16.mxu0 0
          %1907 = vmatpush1.bf16.msra.mxu0 0
          %1908 = vmatprep.subr.bf16.mxu0 0
          %1909 = vmatpush1.bf16.msra.mxu0 0
          %1910 = vmatprep.subr.bf16.mxu0 0
          %1911 = vmatpush1.bf16.msra.mxu0 0
          %1912 = vmatprep.subr.bf16.mxu0 0
          %1913 = vmatpush1.bf16.msra.mxu0 0
          %1914 = vmatprep.subr.bf16.mxu0 0
          %1915 = vmatpush1.bf16.msra.mxu0 0
          %1916 = vmatprep.subr.bf16.mxu0 0
          %1917 = vmatpush1.bf16.msra.mxu0 0
          %1918 = vmatprep.subr.bf16.mxu0 0
          %1919 = vmatpush1.bf16.msra.mxu0 0
          %1920 = vmatprep.subr.bf16.mxu0 0
          %1921 = vmatpush1.bf16.msra.mxu0 0
          %1922 = vmatprep.subr.bf16.mxu0 0
          %1923 = vmatpush1.bf16.msra.mxu0 0
          %1924 = vmatprep.subr.bf16.mxu0 0
          %1925 = vmatpush1.bf16.msra.mxu0 0
          %1926 = vmatprep.subr.bf16.mxu0 0
          %1927 = vmatpush1.bf16.msra.mxu0 0
          %1928 = vmatprep.subr.bf16.mxu0 0
          %1929 = vmatpush1.bf16.msra.mxu0 0
          %1930 = vmatprep.mubr.bf16.mxu0 0
          %1931 = vmatmul.mubr.bf16.gmra.mrb[0].mxu0 %v1893
          %v1932 = vpop.f32.mrb[0].mxu0
          %v1933 = vadd.f32 0.0, %v1932
          %v1934 = vpop.f32.mrb[0].mxu0
          %v1935 = vpop.f32.mrb[0].mxu0
          %v1936 = vadd.f32 0.0, %v1935
          %v1937 = vpop.f32.mrb[0].mxu0
          %1938 = vmatprep.mubr.bf16.mxu0 0
          %1939 = vmatmul.mubr.bf16.gmra.mrb[0].mxu0 %v1896
          %v1940 = vpop.f32.mrb[0].mxu0
          %v1941 = vadd.f32 0.0, %v1940
          %v1942 = vpop.f32.mrb[0].mxu0
          %v1943 = vpop.f32.mrb[0].mxu0
          %v1944 = vpop.f32.mrb[0].mxu0
          %1945 = vdwg.mxu0
          %1946 = vst [vmem:[#allocation5] sm:$0xff] %v1933
          %1947 = vst [vmem:[#allocation5 + $0x8] sm:$0xff] %v1936
          %1948 = vst [vmem:[#allocation5 + $0x10] sm:$0xff] %v1941
        $region80: #{clip_caption_forward.3} parent=71 // pred_fallthru
          _
        // Predicated region
        $region81: #{clip_caption_forward.3} parent=71 // pred_check
          %p1949 = pneg %p353
        $region82: #{clip_caption_forward.3} parent=71 // pred_check_branch
          %1951 = sbr.rel (%p1949) target = $region84
        $region83: #{clip_caption_forward.3} parent=71 // pred_region
          %s1953 = ssub.s32 384, 384
          %1954 = vsyncadd [#allocation6], %s1953
          %s1955 = sshll.u32 [#allocation5], 4
          %s1956 = int_to_ptr.vmem [resolvable:$true] %s1955
          %1961 = dma.vmem_to_hbm [thread:$0]  %s1956, 384, %s14, [#allocation6], 128, 128, 8
        $region84: #{clip_caption_forward.3} parent=71 // pred_fallthru
          _
        // Predicated region
        $region85: #{clip_caption_forward.3} parent=71 // pred_check
          %p1962 = pneg %p353
        $region86: #{clip_caption_forward.3} parent=71 // pred_check_branch
          %1964 = sbr.rel (%p1962) target = $region88
        $region87: #{clip_caption_forward.3} parent=71 // pred_region
          %1965 = dma.done [#allocation6], 384
        $region88: #{clip_caption_forward.3} parent=71 // pred_fallthru
          _
      $region72: #{clip_caption_forward.3} parent=5 // pred_fallthru
        _
      %p1966 = scmp.le.s32.totalorder 2, %s27
      // Predicated region
      $region89: #{clip_caption_forward.3} parent=5 // pred_check
        %p1967 = pneg %p1966
      $region90: #{clip_caption_forward.3} parent=5 // pred_check_branch
        %1969 = sbr.rel (%p1967) target = $region92
      $region91: #{clip_caption_forward.3} parent=5 // pred_region
        %s1970 = ssub.s32 %s27, 2
      $region92: #{clip_caption_forward.3} parent=5 // pred_fallthru
        _
    $region6: #{clip_caption_forward.3} parent=1 // loop_footer
      %s31 = sadd.s32 1, %s27
    $region7: #{clip_caption_forward.3} parent=1 // loop_footer_branch
      %26 = sbr.rel target = $region3
    $region8: #{clip_caption_forward.3} parent=1 // loop_exit
      _
    %1971 = vsyncpa [#allocation6], 1
    %s1972 = scalar_lea.sflag [#allocation6], 1
    %1973 = vsyncpa %s1972, 1

</llo_original>
